<compile_context>
chip_gen: v7x
topology: tpu7x:2x2x1
jax: 0.10.0
libtpu: 0.0.40
codegen_flags: <defaults>
</compile_context>

<pallas_src>
import numpy as np
import jax
import jax.numpy as jnp
from jax.experimental import pallas as pl
from jax.experimental.pallas import tpu as pltpu

_PI = float(np.pi)
_PIO2 = float(np.pi / 2.0)
_LANE = 128
_TB = 128          # batch rows per operand per grid step (matmul M = 2*_TB)


def _copysign(mag, sgn):
    """IEEE copysign via bit ops (fewer selects)."""
    m = pltpu.bitcast(mag, jnp.int32) & jnp.int32(0x7FFFFFFF)
    s = pltpu.bitcast(sgn, jnp.int32) & jnp.int32(-2147483648)
    return pltpu.bitcast(m | s, jnp.float32)


def _atan2(y, x):
    """torch.angle == atan2(imag, real).

    Single EUP reciprocal via min/max argument reduction, one A&S 4.4.49
    polynomial on [0, 1] (|err| <~ 1e-5 rad), quadrant fix-up with selects and
    bit-level copysign.  atan2(0, 0) -> 0 (matches jnp.angle for padded bins).
    """
    ax = jnp.abs(x)
    ay = jnp.abs(y)
    mx = jnp.maximum(ax, ay)
    mn = jnp.minimum(ax, ay)
    safe = jnp.where(mx == 0.0, jnp.float32(1.0), mx)
    r = mn * pl.reciprocal(safe, approx=True)          # r in [0, 1]
    z = r * r
    a = ((((0.0208351 * z - 0.0851330) * z + 0.1801410) * z
          - 0.3302995) * z + 0.9998660) * r
    a = jnp.where(ay > ax, _PIO2 - a, a)               # swap octant
    a = jnp.where(x < 0.0, _PI - a, a)                 # left half-plane
    return _copysign(a, y)                             # sign of imag


def _build_dft_matrix(H, W, f_half):
    """Fused real 2D-rDFT matrix K of shape (H*W, 2*f_half).

    Columns [0, H*Wf) hold cos(theta), columns [f_half, f_half+H*Wf) hold
    -sin(theta); remaining columns are exact zeros so both halves start on a
    128-lane boundary and padded bins contribute exactly 0.
    """
    Wf = W // 2 + 1
    h = np.arange(H).reshape(H, 1, 1, 1).astype(np.float64)
    w = np.arange(W).reshape(1, W, 1, 1).astype(np.float64)
    kh = np.arange(H).reshape(1, 1, H, 1).astype(np.float64)
    kw = np.arange(Wf).reshape(1, 1, 1, Wf).astype(np.float64)
    theta = 2.0 * np.pi * (h * kh / float(H) + w * kw / float(W))
    k_re = np.cos(theta).reshape(H * W, H * Wf)
    k_im = (-np.sin(theta)).reshape(H * W, H * Wf)
    K = np.zeros((H * W, 2 * f_half), dtype=np.float64)
    K[:, :H * Wf] = k_re
    K[:, f_half:f_half + H * Wf] = k_im
    return K


def spatial_frequency_loss_l1(outputs, targets, fft_weight=0.01):
    """Forward pass of SpatialFrequencyLoss_L1 (scalar float32 loss)."""
    N, C, H, W = outputs.shape
    B = N * C
    Wf = W // 2 + 1
    HW = H * W
    HWf = H * Wf
    f_half = ((HWf + _LANE - 1) // _LANE) * _LANE      # 128-aligned imag offset
    TB = _TB

    o2 = outputs.reshape(B, HW).astype(jnp.float32)
    t2 = targets.reshape(B, HW).astype(jnp.float32)

    # Pad the batch with zero rows to a multiple of 2*TB (numerically free:
    # |0-0|=0, amp=0, atan2(0,0)=0 for both operands).
    B_pad = max(2 * TB, -(-B // (2 * TB)) * (2 * TB))
    if B_pad != B:
        o2 = jnp.pad(o2, ((0, B_pad - B), (0, 0)))
        t2 = jnp.pad(t2, ((0, B_pad - B), (0, 0)))
    NB = B_pad // TB                                   # even, >= 2

    # Stack outputs/targets along M per TB-block: block k = [o_k ; t_k].
    x = jnp.concatenate(
        [o2.reshape(NB, TB, HW), t2.reshape(NB, TB, HW)], axis=1
    ).reshape(NB * 2 * TB, HW)

    # bf16 twiddles (MXU-native on v6e/v7x, 3-6x fewer passes than f32 dots).
    K = jnp.asarray(_build_dft_matrix(H, W, f_half), jnp.bfloat16)

    G_par = 2                                          # always 2-wide parallel axis
    G_inner = NB // G_par
    n_fr_chunks = f_half // _LANE

    def kernel(x_ref, k_ref, out_ref, acc_sp, acc_fr):
        i = pl.program_id(1)

        @pl.when(i == 0)
        def _init():
            acc_sp[...] = jnp.zeros_like(acc_sp)
            acc_fr[...] = jnp.zeros_like(acc_fr)

        xb = x_ref[...]                 # (2*TB, HW) f32: rows[:TB]=out, [TB:]=tgt

        # Spatial L1 term kept in f32 (module semantics); reduce in-register to
        # an (8, HW) vreg-shaped partial -> single scratch RMW per step.
        d_sp = jnp.abs(xb[:TB] - xb[TB:])
        acc_sp[...] += d_sp.reshape(TB // 8, 8, HW).sum(axis=0)

        # Fused 2D rDFT: ONE bf16 matmul covering outputs AND targets.
        f = jnp.dot(xb.astype(jnp.bfloat16), k_ref[...],
                    preferred_element_type=jnp.float32)   # (2*TB, 2*f_half) f32

        # Frequency-domain stage in 128-lane chunks (bounds live temporaries).
        for c in range(n_fr_chunks):
            lo = c * _LANE
            re = f[:, lo:lo + _LANE]
            im = f[:, f_half + lo:f_half + lo + _LANE]
            amp = jnp.sqrt(re * re + im * im)
            ph = _atan2(im, re)
            d = jnp.abs(amp[:TB] - amp[TB:]) + jnp.abs(ph[:TB] - ph[TB:])
            acc_fr[...] += d.reshape(TB // 8, 8, _LANE).sum(axis=0)

        @pl.when(i == G_inner - 1)
        def _finalize():
            s_sp = jnp.sum(acc_sp[...])
            s_fr = jnp.sum(acc_fr[...])
            row = jnp.ones((1, _LANE), jnp.float32)
            blk = jnp.concatenate(
                [row * s_sp, row * s_fr, jnp.zeros((6, _LANE), jnp.float32)],
                axis=0)
            out_ref[...] = blk.reshape(1, 8, _LANE)

    partials = pl.pallas_call(
        kernel,
        out_shape=jax.ShapeDtypeStruct((G_par, 8, _LANE), jnp.float32),
        grid_spec=pltpu.PrefetchScalarGridSpec(
            num_scalar_prefetch=0,
            grid=(G_par, G_inner),
            in_specs=[
                pl.BlockSpec((2 * TB, HW), lambda p, i: (p * G_inner + i, 0)),
                # K is grid-constant (single block, constant index_map).
                pl.BlockSpec((HW, 2 * f_half), lambda p, i: (0, 0)),
            ],
            out_specs=pl.BlockSpec((1, 8, _LANE), lambda p, i: (p, 0, 0)),
            scratch_shapes=[
                pltpu.VMEM((8, HW), jnp.float32),      # spatial L1 partial (8 KB)
                pltpu.VMEM((8, _LANE), jnp.float32),   # amp+phase partial (4 KB)
            ],
        ),
        compiler_params=pltpu.CompilerParams(
            dimension_semantics=("parallel", "arbitrary"),
            # VMEM budget @16x16, TB=128: x block 256KB x 2 buffers + bf16 K
            # 256KB x 2 buffers + 512KB dot result + ~12KB scratch ~= 1.8 MB.
            # Explicit override because v5e's scoped default is only 16 MiB
            # (v6e/v7x default 32 MiB); re-check if TB or H,W grow.
            vmem_limit_bytes=32 * 1024 * 1024,
        ),
    )(x, K)

    # Tiny final reduction over the per-slice partials + scaling (wrapper side).
    sums = jnp.sum(partials[:, :2, 0], axis=0)         # [S_l1, S_amp+S_phase]
    inv_spatial = 1.0 / float(B * H * W)                # nn.L1Loss(reduction='mean')
    inv_freq = 1.0 / float(B * H * Wf)
    return sums[0] * inv_spatial + float(fft_weight) * sums[1] * inv_freq


def _reference_loss(outputs, targets, fft_weight):
    o = outputs.astype(jnp.float32)
    t = targets.astype(jnp.float32)
    of = jnp.fft.rfft2(o, norm="backward")
    tf = jnp.fft.rfft2(t, norm="backward")
    l1 = jnp.mean(jnp.abs(o - t))
    amp = jnp.mean(jnp.abs(jnp.abs(of) - jnp.abs(tf)))
    pha = jnp.mean(jnp.abs(jnp.angle(of) - jnp.angle(tf)))
    return l1 + fft_weight * (amp + pha)


if __name__ == "__main__":
    key = jax.random.PRNGKey(0)
    k1, k2 = jax.random.split(key)
    N, C, H, W = 2, 4, 16, 16
    outputs = jax.random.normal(k1, (N, C, H, W), dtype=jnp.float32)
    targets = jax.random.normal(k2, (N, C, H, W), dtype=jnp.float32)

    loss = spatial_frequency_loss_l1(outputs, targets, fft_weight=0.01)
    loss = jax.block_until_ready(loss)
    assert loss.shape == () and bool(jnp.isfinite(loss))

    # Loose sanity check vs a pure-JAX reference (bf16 DFT operands plus
    # hardware-approximated reciprocal/atan2, so tolerance is generous; the
    # approximated terms carry the 0.01 fft_weight).
    ref = float(jax.block_until_ready(_reference_loss(outputs, targets, 0.01)))
    assert abs(float(loss) - ref) <= 2e-2 * abs(ref) + 2e-2, (float(loss), ref)

    print("KERNEL_OK")
</pallas_src>

<mosaic_0001>
module attributes {stable_mosaic.version = 11 : i64} {
  func.func @kernel(%arg0: i32, %arg1: i32, %arg2: memref<256x256xf32, #tpu.memory_space<vmem>>, %arg3: memref<256x512xbf16, #tpu.memory_space<vmem>>, %arg4: memref<1x8x128xf32, #tpu.memory_space<vmem>>, %arg5: memref<8x256xf32, #tpu.memory_space<vmem>>, %arg6: memref<8x128xf32, #tpu.memory_space<vmem>>) attributes {dimension_semantics = [#tpu.dimension_semantics<parallel>, #tpu.dimension_semantics<arbitrary>], iteration_bounds = array<i64: 2, 1>, scalar_prefetch = 0 : i64, scratch_operands = 2 : i64, tpu.core_type = #tpu.core_type<tc>, window_params = [{transform_indices = @transform_0, window_bounds = array<i64: 256, 256>}, {pipeline_mode = #tpu.pipeline_mode<synchronous>, transform_indices = @transform_1, window_bounds = array<i64: 256, 512>}, {transform_indices = @transform_2, window_bounds = array<i64: 1, 8, 128>}]} {
    %c0_i32 = arith.constant 0 : i32
    %0 = arith.cmpi eq, %arg1, %c0_i32 : i32
    %1 = arith.extui %0 : i1 to i32
    %c0_i32_0 = arith.constant 0 : i32
    %2 = arith.cmpi ne, %1, %c0_i32_0 : i32
    scf.if %2 {
      %cst_43 = arith.constant 0.000000e+00 : f32
      %143 = vector.broadcast %cst_43 : f32 to vector<8x256xf32>
      %c0_44 = arith.constant 0 : index
      %c0_45 = arith.constant 0 : index
      %144 = vector.load %arg5[%c0_44, %c0_45] : memref<8x256xf32, #tpu.memory_space<vmem>>, vector<8x256xf32>
      tpu.vector_store %arg5[%c0_44, %c0_45], %143 {strides = array<i32>} : memref<8x256xf32, #tpu.memory_space<vmem>>, vector<8x256xf32>,
      %cst_46 = arith.constant 0.000000e+00 : f32
      %145 = vector.broadcast %cst_46 : f32 to vector<8x128xf32>
      %c0_47 = arith.constant 0 : index
      %c0_48 = arith.constant 0 : index
      %146 = vector.load %arg6[%c0_47, %c0_48] : memref<8x128xf32, #tpu.memory_space<vmem>>, vector<8x128xf32>
      tpu.vector_store %arg6[%c0_47, %c0_48], %145 {strides = array<i32>} : memref<8x128xf32, #tpu.memory_space<vmem>>, vector<8x128xf32>,
    } else {
    }
    %c0 = arith.constant 0 : index
    %c0_1 = arith.constant 0 : index
    %3 = vector.load %arg2[%c0, %c0_1] : memref<256x256xf32, #tpu.memory_space<vmem>>, vector<256x256xf32>
    %4 = vector.extract_strided_slice %3 {offsets = [0, 0], sizes = [128, 256], strides = [1, 1]} : vector<256x256xf32> to vector<128x256xf32>
    %5 = vector.extract_strided_slice %3 {offsets = [128, 0], sizes = [128, 256], strides = [1, 1]} : vector<256x256xf32> to vector<128x256xf32>
    %6 = arith.subf %4, %5 : vector<128x256xf32>
    %7 = math.absf %6 : vector<128x256xf32>
    %c0_2 = arith.constant 0 : index
    %c0_3 = arith.constant 0 : index
    %8 = vector.load %arg5[%c0_2, %c0_3] : memref<8x256xf32, #tpu.memory_space<vmem>>, vector<8x256xf32>
    %9 = vector.shape_cast %7 : vector<128x256xf32> to vector<16x8x256xf32>
    %cst = arith.constant dense<0.000000e+00> : vector<8x256xf32>
    %10 = vector.multi_reduction <add>, %9, %cst [0] : vector<16x8x256xf32> to vector<8x256xf32>
    %11 = arith.addf %8, %10 : vector<8x256xf32>
    %c0_4 = arith.constant 0 : index
    %c0_5 = arith.constant 0 : index
    %12 = vector.load %arg5[%c0_4, %c0_5] : memref<8x256xf32, #tpu.memory_space<vmem>>, vector<8x256xf32>
    tpu.vector_store %arg5[%c0_4, %c0_5], %11 {strides = array<i32>} : memref<8x256xf32, #tpu.memory_space<vmem>>, vector<8x256xf32>,
    %13 = arith.truncf %3 : vector<256x256xf32> to vector<256x256xbf16>
    %c0_6 = arith.constant 0 : index
    %c0_7 = arith.constant 0 : index
    %14 = vector.load %arg3[%c0_6, %c0_7] : memref<256x512xbf16, #tpu.memory_space<vmem>>, vector<256x512xbf16>
    %cst_8 = arith.constant dense<0.000000e+00> : vector<256x512xf32>
    %15 = tpu.matmul %13, %14, %cst_8 {dimension_numbers = #tpu.dot_dimension_numbers<[1], [0], [0], [1], [0, 0, 1, 1], [], []>} : vector<256x256xbf16>, vector<256x512xbf16>, vector<256x512xf32> -> vector<256x512xf32>
    %16 = vector.extract_strided_slice %15 {offsets = [0, 0], sizes = [256, 128], strides = [1, 1]} : vector<256x512xf32> to vector<256x128xf32>
    %17 = vector.extract_strided_slice %15 {offsets = [0, 256], sizes = [256, 128], strides = [1, 1]} : vector<256x512xf32> to vector<256x128xf32>
    %18 = arith.mulf %16, %16 : vector<256x128xf32>
    %19 = arith.mulf %17, %17 : vector<256x128xf32>
    %20 = arith.addf %18, %19 : vector<256x128xf32>
    %21 = math.sqrt %20 : vector<256x128xf32>
    %22 = math.absf %16 : vector<256x128xf32>
    %23 = math.absf %17 : vector<256x128xf32>
    %24 = arith.maximumf %22, %23 : vector<256x128xf32>
    %25 = arith.minimumf %22, %23 : vector<256x128xf32>
    %cst_9 = arith.constant 0.000000e+00 : f32
    %26 = vector.broadcast %cst_9 : f32 to vector<256x128xf32>
    %27 = arith.cmpf oeq, %24, %26 : vector<256x128xf32>
    %cst_10 = arith.constant 1.000000e+00 : f32
    %28 = vector.broadcast %cst_10 : f32 to vector<256x128xf32>
    %29 = arith.select %27, %28, %24 : vector<256x128xi1>, vector<256x128xf32>
    %30 = tpu.reciprocal %29 {approx = true} : vector<256x128xf32> -> vector<256x128xf32>
    %31 = arith.mulf %25, %30 : vector<256x128xf32>
    %32 = arith.mulf %31, %31 : vector<256x128xf32>
    %cst_11 = arith.constant 2.083510e-02 : f32
    %33 = vector.broadcast %cst_11 : f32 to vector<256x128xf32>
    %34 = arith.mulf %33, %32 : vector<256x128xf32>
    %cst_12 = arith.constant 8.513300e-02 : f32
    %35 = vector.broadcast %cst_12 : f32 to vector<256x128xf32>
    %36 = arith.subf %34, %35 : vector<256x128xf32>
    %37 = arith.mulf %36, %32 : vector<256x128xf32>
    %cst_13 = arith.constant 1.801410e-01 : f32
    %38 = vector.broadcast %cst_13 : f32 to vector<256x128xf32>
    %39 = arith.addf %37, %38 : vector<256x128xf32>
    %40 = arith.mulf %39, %32 : vector<256x128xf32>
    %cst_14 = arith.constant 0.330299497 : f32
    %41 = vector.broadcast %cst_14 : f32 to vector<256x128xf32>
    %42 = arith.subf %40, %41 : vector<256x128xf32>
    %43 = arith.mulf %42, %32 : vector<256x128xf32>
    %cst_15 = arith.constant 9.998660e-01 : f32
    %44 = vector.broadcast %cst_15 : f32 to vector<256x128xf32>
    %45 = arith.addf %43, %44 : vector<256x128xf32>
    %46 = arith.mulf %45, %31 : vector<256x128xf32>
    %47 = arith.cmpf ogt, %23, %22 : vector<256x128xf32>
    %cst_16 = arith.constant 1.57079637 : f32
    %48 = vector.broadcast %cst_16 : f32 to vector<256x128xf32>
    %49 = arith.subf %48, %46 : vector<256x128xf32>
    %50 = arith.select %47, %49, %46 : vector<256x128xi1>, vector<256x128xf32>
    %cst_17 = arith.constant 0.000000e+00 : f32
    %51 = vector.broadcast %cst_17 : f32 to vector<256x128xf32>
    %52 = arith.cmpf olt, %16, %51 : vector<256x128xf32>
    %cst_18 = arith.constant 3.14159274 : f32
    %53 = vector.broadcast %cst_18 : f32 to vector<256x128xf32>
    %54 = arith.subf %53, %50 : vector<256x128xf32>
    %55 = arith.select %52, %54, %50 : vector<256x128xi1>, vector<256x128xf32>
    %56 = tpu.bitcast %55 : vector<256x128xf32> -> vector<256x128xi32>
    %c2147483647_i32 = arith.constant 2147483647 : i32
    %57 = vector.broadcast %c2147483647_i32 : i32 to vector<256x128xi32>
    %58 = arith.andi %56, %57 : vector<256x128xi32>
    %59 = tpu.bitcast %17 : vector<256x128xf32> -> vector<256x128xi32>
    %c-2147483648_i32 = arith.constant -2147483648 : i32
    %60 = vector.broadcast %c-2147483648_i32 : i32 to vector<256x128xi32>
    %61 = arith.andi %59, %60 : vector<256x128xi32>
    %62 = arith.ori %58, %61 : vector<256x128xi32>
    %63 = tpu.bitcast %62 : vector<256x128xi32> -> vector<256x128xf32>
    %64 = vector.extract_strided_slice %21 {offsets = [0, 0], sizes = [128, 128], strides = [1, 1]} : vector<256x128xf32> to vector<128x128xf32>
    %65 = vector.extract_strided_slice %21 {offsets = [128, 0], sizes = [128, 128], strides = [1, 1]} : vector<256x128xf32> to vector<128x128xf32>
    %66 = arith.subf %64, %65 : vector<128x128xf32>
    %67 = math.absf %66 : vector<128x128xf32>
    %68 = vector.extract_strided_slice %63 {offsets = [0, 0], sizes = [128, 128], strides = [1, 1]} : vector<256x128xf32> to vector<128x128xf32>
    %69 = vector.extract_strided_slice %63 {offsets = [128, 0], sizes = [128, 128], strides = [1, 1]} : vector<256x128xf32> to vector<128x128xf32>
    %70 = arith.subf %68, %69 : vector<128x128xf32>
    %71 = math.absf %70 : vector<128x128xf32>
    %72 = arith.addf %67, %71 : vector<128x128xf32>
    %c0_19 = arith.constant 0 : index
    %c0_20 = arith.constant 0 : index
    %73 = vector.load %arg6[%c0_19, %c0_20] : memref<8x128xf32, #tpu.memory_space<vmem>>, vector<8x128xf32>
    %74 = vector.shape_cast %72 : vector<128x128xf32> to vector<16x8x128xf32>
    %cst_21 = arith.constant dense<0.000000e+00> : vector<8x128xf32>
    %75 = vector.multi_reduction <add>, %74, %cst_21 [0] : vector<16x8x128xf32> to vector<8x128xf32>
    %76 = arith.addf %73, %75 : vector<8x128xf32>
    %c0_22 = arith.constant 0 : index
    %c0_23 = arith.constant 0 : index
    %77 = vector.load %arg6[%c0_22, %c0_23] : memref<8x128xf32, #tpu.memory_space<vmem>>, vector<8x128xf32>
    tpu.vector_store %arg6[%c0_22, %c0_23], %76 {strides = array<i32>} : memref<8x128xf32, #tpu.memory_space<vmem>>, vector<8x128xf32>,
    %78 = vector.extract_strided_slice %15 {offsets = [0, 128], sizes = [256, 128], strides = [1, 1]} : vector<256x512xf32> to vector<256x128xf32>
    %79 = vector.extract_strided_slice %15 {offsets = [0, 384], sizes = [256, 128], strides = [1, 1]} : vector<256x512xf32> to vector<256x128xf32>
    %80 = arith.mulf %78, %78 : vector<256x128xf32>
    %81 = arith.mulf %79, %79 : vector<256x128xf32>
    %82 = arith.addf %80, %81 : vector<256x128xf32>
    %83 = math.sqrt %82 : vector<256x128xf32>
    %84 = math.absf %78 : vector<256x128xf32>
    %85 = math.absf %79 : vector<256x128xf32>
    %86 = arith.maximumf %84, %85 : vector<256x128xf32>
    %87 = arith.minimumf %84, %85 : vector<256x128xf32>
    %cst_24 = arith.constant 0.000000e+00 : f32
    %88 = vector.broadcast %cst_24 : f32 to vector<256x128xf32>
    %89 = arith.cmpf oeq, %86, %88 : vector<256x128xf32>
    %cst_25 = arith.constant 1.000000e+00 : f32
    %90 = vector.broadcast %cst_25 : f32 to vector<256x128xf32>
    %91 = arith.select %89, %90, %86 : vector<256x128xi1>, vector<256x128xf32>
    %92 = tpu.reciprocal %91 {approx = true} : vector<256x128xf32> -> vector<256x128xf32>
    %93 = arith.mulf %87, %92 : vector<256x128xf32>
    %94 = arith.mulf %93, %93 : vector<256x128xf32>
    %cst_26 = arith.constant 2.083510e-02 : f32
    %95 = vector.broadcast %cst_26 : f32 to vector<256x128xf32>
    %96 = arith.mulf %95, %94 : vector<256x128xf32>
    %cst_27 = arith.constant 8.513300e-02 : f32
    %97 = vector.broadcast %cst_27 : f32 to vector<256x128xf32>
    %98 = arith.subf %96, %97 : vector<256x128xf32>
    %99 = arith.mulf %98, %94 : vector<256x128xf32>
    %cst_28 = arith.constant 1.801410e-01 : f32
    %100 = vector.broadcast %cst_28 : f32 to vector<256x128xf32>
    %101 = arith.addf %99, %100 : vector<256x128xf32>
    %102 = arith.mulf %101, %94 : vector<256x128xf32>
    %cst_29 = arith.constant 0.330299497 : f32
    %103 = vector.broadcast %cst_29 : f32 to vector<256x128xf32>
    %104 = arith.subf %102, %103 : vector<256x128xf32>
    %105 = arith.mulf %104, %94 : vector<256x128xf32>
    %cst_30 = arith.constant 9.998660e-01 : f32
    %106 = vector.broadcast %cst_30 : f32 to vector<256x128xf32>
    %107 = arith.addf %105, %106 : vector<256x128xf32>
    %108 = arith.mulf %107, %93 : vector<256x128xf32>
    %109 = arith.cmpf ogt, %85, %84 : vector<256x128xf32>
    %cst_31 = arith.constant 1.57079637 : f32
    %110 = vector.broadcast %cst_31 : f32 to vector<256x128xf32>
    %111 = arith.subf %110, %108 : vector<256x128xf32>
    %112 = arith.select %109, %111, %108 : vector<256x128xi1>, vector<256x128xf32>
    %cst_32 = arith.constant 0.000000e+00 : f32
    %113 = vector.broadcast %cst_32 : f32 to vector<256x128xf32>
    %114 = arith.cmpf olt, %78, %113 : vector<256x128xf32>
    %cst_33 = arith.constant 3.14159274 : f32
    %115 = vector.broadcast %cst_33 : f32 to vector<256x128xf32>
    %116 = arith.subf %115, %112 : vector<256x128xf32>
    %117 = arith.select %114, %116, %112 : vector<256x128xi1>, vector<256x128xf32>
    %118 = tpu.bitcast %117 : vector<256x128xf32> -> vector<256x128xi32>
    %c2147483647_i32_34 = arith.constant 2147483647 : i32
    %119 = vector.broadcast %c2147483647_i32_34 : i32 to vector<256x128xi32>
    %120 = arith.andi %118, %119 : vector<256x128xi32>
    %121 = tpu.bitcast %79 : vector<256x128xf32> -> vector<256x128xi32>
    %c-2147483648_i32_35 = arith.constant -2147483648 : i32
    %122 = vector.broadcast %c-2147483648_i32_35 : i32 to vector<256x128xi32>
    %123 = arith.andi %121, %122 : vector<256x128xi32>
    %124 = arith.ori %120, %123 : vector<256x128xi32>
    %125 = tpu.bitcast %124 : vector<256x128xi32> -> vector<256x128xf32>
    %126 = vector.extract_strided_slice %83 {offsets = [0, 0], sizes = [128, 128], strides = [1, 1]} : vector<256x128xf32> to vector<128x128xf32>
    %127 = vector.extract_strided_slice %83 {offsets = [128, 0], sizes = [128, 128], strides = [1, 1]} : vector<256x128xf32> to vector<128x128xf32>
    %128 = arith.subf %126, %127 : vector<128x128xf32>
    %129 = math.absf %128 : vector<128x128xf32>
    %130 = vector.extract_strided_slice %125 {offsets = [0, 0], sizes = [128, 128], strides = [1, 1]} : vector<256x128xf32> to vector<128x128xf32>
    %131 = vector.extract_strided_slice %125 {offsets = [128, 0], sizes = [128, 128], strides = [1, 1]} : vector<256x128xf32> to vector<128x128xf32>
    %132 = arith.subf %130, %131 : vector<128x128xf32>
    %133 = math.absf %132 : vector<128x128xf32>
    %134 = arith.addf %129, %133 : vector<128x128xf32>
    %c0_36 = arith.constant 0 : index
    %c0_37 = arith.constant 0 : index
    %135 = vector.load %arg6[%c0_36, %c0_37] : memref<8x128xf32, #tpu.memory_space<vmem>>, vector<8x128xf32>
    %136 = vector.shape_cast %134 : vector<128x128xf32> to vector<16x8x128xf32>
    %cst_38 = arith.constant dense<0.000000e+00> : vector<8x128xf32>
    %137 = vector.multi_reduction <add>, %136, %cst_38 [0] : vector<16x8x128xf32> to vector<8x128xf32>
    %138 = arith.addf %135, %137 : vector<8x128xf32>
    %c0_39 = arith.constant 0 : index
    %c0_40 = arith.constant 0 : index
    %139 = vector.load %arg6[%c0_39, %c0_40] : memref<8x128xf32, #tpu.memory_space<vmem>>, vector<8x128xf32>
    tpu.vector_store %arg6[%c0_39, %c0_40], %138 {strides = array<i32>} : memref<8x128xf32, #tpu.memory_space<vmem>>, vector<8x128xf32>,
    %c0_i32_41 = arith.constant 0 : i32
    %140 = arith.cmpi eq, %arg1, %c0_i32_41 : i32
    %141 = arith.extui %140 : i1 to i32
    %c0_i32_42 = arith.constant 0 : i32
    %142 = arith.cmpi ne, %141, %c0_i32_42 : i32
    scf.if %142 {
      %c0_43 = arith.constant 0 : index
      %c0_44 = arith.constant 0 : index
      %143 = vector.load %arg5[%c0_43, %c0_44] : memref<8x256xf32, #tpu.memory_space<vmem>>, vector<8x256xf32>
      %144 = vector.shape_cast %143 : vector<8x256xf32> to vector<1x8x256xf32>
      %cst_45 = arith.constant dense<0.000000e+00> : vector<1xf32>
      %145 = vector.multi_reduction <add>, %144, %cst_45 [1, 2] : vector<1x8x256xf32> to vector<1xf32>
      %146 = vector.shape_cast %145 : vector<1xf32> to vector<1x1x1xf32>
      %147 = vector.extract %146[0, 0, 0] : f32 from vector<1x1x1xf32>
      %c0_46 = arith.constant 0 : index
      %c0_47 = arith.constant 0 : index
      %148 = vector.load %arg6[%c0_46, %c0_47] : memref<8x128xf32, #tpu.memory_space<vmem>>, vector<8x128xf32>
      %149 = vector.shape_cast %148 : vector<8x128xf32> to vector<1x8x128xf32>
      %cst_48 = arith.constant dense<0.000000e+00> : vector<1xf32>
      %150 = vector.multi_reduction <add>, %149, %cst_48 [1, 2] : vector<1x8x128xf32> to vector<1xf32>
      %151 = vector.shape_cast %150 : vector<1xf32> to vector<1x1x1xf32>
      %152 = vector.extract %151[0, 0, 0] : f32 from vector<1x1x1xf32>
      %cst_49 = arith.constant 1.000000e+00 : f32
      %153 = vector.broadcast %cst_49 : f32 to vector<1x128xf32>
      %154 = vector.broadcast %147 : f32 to vector<1x128xf32>
      %155 = arith.mulf %153, %154 : vector<1x128xf32>
      %156 = vector.broadcast %152 : f32 to vector<1x128xf32>
      %157 = arith.mulf %153, %156 : vector<1x128xf32>
      %cst_50 = arith.constant 0.000000e+00 : f32
      %158 = vector.broadcast %cst_50 : f32 to vector<6x128xf32>
      %159 = tpu.concatenate %155, %157, %158 in 0 : vector<1x128xf32>, vector<1x128xf32>, vector<6x128xf32> -> vector<8x128xf32>
      %160 = vector.shape_cast %159 : vector<8x128xf32> to vector<1x8x128xf32>
      %c0_51 = arith.constant 0 : index
      %c0_52 = arith.constant 0 : index
      %c0_53 = arith.constant 0 : index
      %161 = vector.load %arg4[%c0_51, %c0_52, %c0_53] : memref<1x8x128xf32, #tpu.memory_space<vmem>>, vector<1x8x128xf32>
      tpu.vector_store %arg4[%c0_51, %c0_52, %c0_53], %160 {strides = array<i32>} : memref<1x8x128xf32, #tpu.memory_space<vmem>>, vector<1x8x128xf32>,
    } else {
    }
    return
  }
  func.func @transform_0(%arg0: i32, %arg1: i32) -> (i32, i32) {
    %c1_i32 = arith.constant 1 : i32
    %0 = arith.muli %arg0, %c1_i32 : i32
    %1 = arith.addi %0, %arg1 : i32
    %c0_i32 = arith.constant 0 : i32
    %c0_i32_0 = arith.constant 0 : i32
    return %1, %c0_i32 : i32, i32
  }
  func.func @transform_1(%arg0: i32, %arg1: i32) -> (i32, i32) {
    %c0_i32 = arith.constant 0 : i32
    %c0_i32_0 = arith.constant 0 : i32
    %c0_i32_1 = arith.constant 0 : i32
    return %c0_i32, %c0_i32_0 : i32, i32
  }
  func.func @transform_2(%arg0: i32, %arg1: i32) -> (i32, i32, i32) {
    %c0_i32 = arith.constant 0 : i32
    %c0_i32_0 = arith.constant 0 : i32
    %c0_i32_1 = arith.constant 0 : i32
    return %arg0, %c0_i32, %c0_i32_0 : i32, i32, i32
  }
}

</mosaic_0001>

<llo_original>
// kernel: tpu_custom_call.1
$region0: #{tpu_custom_call.1}
  #allocation0 [shape = 'u32[]', space=smem, size = 0x4, offset = 0x4, fixed_abs, tag = 'smem constant byte address 0x4 - core index']
  #allocation1 [shape = 'u32[144,128]{1,0:T(1,128)}', space=vmem, size = 0x12000, scoped, tag = 'internal scratch']
  #allocation2 [shape = 'f32[8,256]{1,0:T(8,128)}', space=vmem, size = 0x2000, scoped, tag = 'scratch operand']
  #allocation3 [shape = 'f32[8,128]{1,0:T(8,128)}', space=vmem, size = 0x1000, scoped, tag = 'scratch operand']
  %s0 = inlined_call_operand.hbm [shape: f32[512,256], index: 0, kind: input, shape index: {}]
  %s1 = inlined_call_operand.hbm [shape: bf16[256,512], index: 1, kind: input, shape index: {}]
  %s2 = inlined_call_operand.hbm [shape: f32[2,8,128], index: 2, kind: output, shape index: {}]
  %s3 = sld [smem:[#allocation0]]
  $region57: #{tpu_custom_call.1} parent=0
    _
  %s5 = ssub.s32 1, %s3
  %s6 = scalar_select 0, %s5, %s3
  $region1: #{tpu_custom_call.1} parent=0
    #allocation4 [shape = 'u8[524288]{0}', space=vmem, size = 0x80000, scoped, tag = 'input window, operand 0']
    #allocation5 [shape = 's32[2]{0}', space=sflag, size = 0x8, scoped, tag = 'scoped memory for tpu_custom_call.1']
    #allocation6 [shape = 's32[2]{0}', space=sflag, size = 0x8, scoped, tag = 'scoped memory for tpu_custom_call.1']
    #allocation7 [shape = 'u8[262144]{0}', space=vmem, size = 0x40000, scoped, tag = 'input window, operand 1, single buffered']
    #allocation8 [shape = 's32[1]{0}', space=sflag, size = 0x4, scoped, tag = 'scoped memory for tpu_custom_call.1']
    #allocation9 [shape = 'u8[8192]{0}', space=vmem, size = 0x2000, scoped, tag = 'output window, operand 0']
    %7 = vsyncpa [#allocation5], 0
    %s8 = scalar_lea.sflag [#allocation5], 1
    %9 = vsyncpa %s8, 0
    %10 = vsyncpa [#allocation8], 0
    %11 = vsyncpa [#allocation6], 0
    %s12 = scalar_lea.sflag [#allocation6], 1
    %13 = vsyncpa %s12, 0
    loop: start=0, step=1, limit=4
    $region2: #{tpu_custom_call.1} parent=1 // loop_pre_header
      _
    $region3: #{tpu_custom_call.1} parent=1 // loop_header
      %s15 = sphi 0, %s19
      %p16 = scmp.ge.s32.totalorder %s15, 4
      %s22 = sphi 0, %s34
      %s23 = sphi 0, %s30
      %s24 = sphi 0, %s22
      %s25 = sphi 0, %s23
      %s26 = sphi 0, %s24
      %s27 = sphi 0, %s25
      %s39 = sphi 0, %s41
      %s42 = sphi 0, %s39
      %s43 = sphi 0, %s42
      %s59 = sphi 0, %s43
      %s63 = sphi 0, %s63
      %s65 = sphi 0, %s63
      %s66 = sphi 0, %s65
      %s80 = sphi 0, %s66
      %s86 = sphi 0, %s88
      %s89 = sphi 0, %s86
      %s90 = sphi 0, %s89
      %s106 = sphi 0, %s90
    $region4: #{tpu_custom_call.1} parent=1 // loop_header_branch
      %18 = sbr.rel (%p16) target = $region8
    $region5: #{tpu_custom_call.1} parent=1 // loop_body
      %s20 = ssub.s32 %s15, 1
      %s21 = ssub.s32 %s15, 2
      %s28 = sadd.s32 1, %s23
      %p29 = scmp.ge.s32.totalorder %s28, 1
      %s30 = scalar_select %p29, 0, %s28
      %s31 = sadd.s32 1, %s22
      %s32 = scalar_select %p29, %s31, %s22
      %p33 = scmp.ge.s32.totalorder %s32, 2
      %s34 = scalar_select %p33, 0, %s32
      %s35 = sadd.s32 %s22, %s23
      %s36 = sadd.s32 %s34, %s30
      %s37 = ssub.s32 %s35, %s36
      %p38 = scmp.eq.s32.totalorder %s37, 0
      %s40 = sadd.s32 %s39, 1
      %s41 = scalar_select %p38, %s39, %s40
      %p44 = pneg %p38
      %p45 = scmp.eq.s32.totalorder %s15, 1
      %p46 = por %p44, %p45
      %p47 = scmp.ne.s32.totalorder %s39, %s42
      %p48 = scmp.eq.s32.totalorder %s15, 0
      %p49 = por %p47, %p48
      %p50 = scmp.ne.s32.totalorder %s39, %s42
      %p51 = scmp.eq.s32.totalorder %s20, 1
      %p52 = por %p50, %p51
      %p53 = scmp.ne.s32.totalorder %s42, %s43
      %p54 = scmp.eq.s32.totalorder %s20, 0
      %p55 = por %p53, %p54
      %p56 = scmp.ne.s32.totalorder %s42, %s43
      %p57 = scmp.eq.s32.totalorder %s21, 1
      %p58 = por %p56, %p57
      %p60 = scmp.ne.s32.totalorder %s43, %s59
      %p61 = scmp.eq.s32.totalorder %s21, 0
      %p62 = por %p60, %p61
      %s64 = sadd.s32 %s63, 1
      %p67 = scmp.eq.s32.totalorder %s15, 1
      %p68 = scmp.ne.s32.totalorder %s63, %s65
      %p69 = scmp.eq.s32.totalorder %s15, 0
      %p70 = por %p68, %p69
      %p71 = scmp.ne.s32.totalorder %s63, %s65
      %p72 = scmp.eq.s32.totalorder %s20, 1
      %p73 = por %p71, %p72
      %p74 = scmp.ne.s32.totalorder %s65, %s66
      %p75 = scmp.eq.s32.totalorder %s20, 0
      %p76 = por %p74, %p75
      %p77 = scmp.ne.s32.totalorder %s65, %s66
      %p78 = scmp.eq.s32.totalorder %s21, 1
      %p79 = por %p77, %p78
      %p81 = scmp.ne.s32.totalorder %s66, %s80
      %p82 = scmp.eq.s32.totalorder %s21, 0
      %p83 = por %p81, %p82
      %s84 = ssub.s32 %s22, %s34
      %p85 = scmp.eq.s32.totalorder %s84, 0
      %s87 = sadd.s32 %s86, 1
      %s88 = scalar_select %p85, %s86, %s87
      %p91 = pneg %p85
      %p92 = scmp.eq.s32.totalorder %s15, 1
      %p93 = por %p91, %p92
      %p94 = scmp.ne.s32.totalorder %s86, %s89
      %p95 = scmp.eq.s32.totalorder %s15, 0
      %p96 = por %p94, %p95
      %p97 = scmp.ne.s32.totalorder %s86, %s89
      %p98 = scmp.eq.s32.totalorder %s20, 1
      %p99 = por %p97, %p98
      %p100 = scmp.ne.s32.totalorder %s89, %s90
      %p101 = scmp.eq.s32.totalorder %s20, 0
      %p102 = por %p100, %p101
      %p103 = scmp.ne.s32.totalorder %s89, %s90
      %p104 = scmp.eq.s32.totalorder %s21, 1
      %p105 = por %p103, %p104
      %p107 = scmp.ne.s32.totalorder %s90, %s106
      %p108 = scmp.eq.s32.totalorder %s21, 0
      %p109 = por %p107, %p108
      %p110 = scmp.le.s32.totalorder 1, %s15
      %p111 = scmp.lt.s32.totalorder %s15, 3
      %p112 = pnand %p110, %p111
      %p113 = pneg %p112
      // Predicated region
      $region9: #{tpu_custom_call.1} parent=5 // pred_check
        _
      $region10: #{tpu_custom_call.1} parent=5 // pred_check_branch
        %115 = sbr.rel (%p112) target = $region12
      $region11: #{tpu_custom_call.1} parent=5 // pred_region
        %s116 = ssub.s32 %s15, 1
        // Predicated region
        $region13: #{tpu_custom_call.1} parent=11 // pred_check
          %p117 = pneg %p76
        $region14: #{tpu_custom_call.1} parent=11 // pred_check_branch
          %119 = sbr.rel (%p117) target = $region16
        $region15: #{tpu_custom_call.1} parent=11 // pred_region
          %s121 = ssub.s32 8192, 8192
          %122 = vsyncadd [#allocation8], %s121
          %s123 = sshll.u32 [#allocation7], 4
          %s124 = int_to_ptr.vmem [resolvable:$true] %s123
          %129 = dma.hbm_to_vmem [thread:$0]  %s1, 8192, %s124, [#allocation8], 256, 256, 16
        $region16: #{tpu_custom_call.1} parent=11 // pred_fallthru
          _
      $region12: #{tpu_custom_call.1} parent=5 // pred_fallthru
        _
      %p130 = scmp.lt.s32.totalorder %s15, 2
      // Predicated region
      $region17: #{tpu_custom_call.1} parent=5 // pred_check
        %p131 = pneg %p130
      $region18: #{tpu_custom_call.1} parent=5 // pred_check_branch
        %133 = sbr.rel (%p131) target = $region20
      $region19: #{tpu_custom_call.1} parent=5 // pred_region
        // Predicated region
        $region21: #{tpu_custom_call.1} parent=19 // pred_check
          %p134 = pneg %p49
        $region22: #{tpu_custom_call.1} parent=19 // pred_check_branch
          %136 = sbr.rel (%p134) target = $region24
        $region23: #{tpu_custom_call.1} parent=19 // pred_region
          %s137 = sand.u32 %s39, 1
          %s138 = scalar_lea.sflag [#allocation5], %s137
          %s139 = sand.u32 %s39, 1
          %s140 = smul.addr %s139, 512
          %s141 = scalar_lea.vmem [#allocation4], %s140
          %s142 = sadd.s32 %s22, %s23
          %s143 = smul.u32 32, %s142
          %s145 = ssub.s32 8192, 8192
          %146 = vsyncadd %s138, %s145
          %s147 = smul.addr %s143, 2
          %s148 = smul.addr %s147, 128
          %s149 = scalar_lea.hbm %s0, %s148
          %s150 = sshll.u32 %s141, 4
          %s151 = int_to_ptr.vmem [resolvable:$true] %s150
          %156 = dma.hbm_to_vmem [thread:$0]  %s149, 8192, %s151, %s138, 256, 256, 16
        $region24: #{tpu_custom_call.1} parent=19 // pred_fallthru
          _
      $region20: #{tpu_custom_call.1} parent=5 // pred_fallthru
        _
      %p157 = scmp.le.s32.totalorder 1, %s15
      %p158 = scmp.lt.s32.totalorder %s15, 3
      %p159 = pnand %p157, %p158
      %p160 = pneg %p159
      // Predicated region
      $region25: #{tpu_custom_call.1} parent=5 // pred_check
        _
      $region26: #{tpu_custom_call.1} parent=5 // pred_check_branch
        %162 = sbr.rel (%p159) target = $region28
      $region27: #{tpu_custom_call.1} parent=5 // pred_region
        %s163 = ssub.s32 %s15, 1
        %s164 = sand.u32 %s42, 1
        %s165 = scalar_lea.sflag [#allocation5], %s164
        %s166 = sand.u32 %s42, 1
        %s167 = smul.addr %s166, 512
        %s168 = scalar_lea.vmem [#allocation4], %s167
        // Predicated region
        $region29: #{tpu_custom_call.1} parent=27 // pred_check
          %p169 = pneg %p55
        $region30: #{tpu_custom_call.1} parent=27 // pred_check_branch
          %171 = sbr.rel (%p169) target = $region32
        $region31: #{tpu_custom_call.1} parent=27 // pred_region
          %172 = dma.done %s165, 8192
        $region32: #{tpu_custom_call.1} parent=27 // pred_fallthru
          _
        // Predicated region
        $region33: #{tpu_custom_call.1} parent=27 // pred_check
          %p173 = pneg %p76
        $region34: #{tpu_custom_call.1} parent=27 // pred_check_branch
          %175 = sbr.rel (%p173) target = $region36
        $region35: #{tpu_custom_call.1} parent=27 // pred_region
          %176 = dma.done [#allocation8], 8192
        $region36: #{tpu_custom_call.1} parent=27 // pred_fallthru
          _
        %s177 = sand.u32 %s42, 1
        %s178 = scalar_lea.sflag [#allocation5], %s177
        %s179 = sand.u32 %s42, 1
        %s180 = smul.addr %s179, 512
        %s181 = scalar_lea.vmem [#allocation4], %s180
        %p182 = pneg %p55
        %p183 = pneg %p52
        %p184 = pneg %p76
        %p185 = pneg %p73
        %p186 = pneg %p102
        %p187 = pneg %p99
        %s188 = sand.u32 %s89, 1
        %s189 = scalar_lea.sflag [#allocation6], %s188
        %s190 = sand.u32 %s89, 1
        %s191 = smul.addr %s190, 8
        %s192 = scalar_lea.vmem [#allocation9], %s191
        %s193 = sadd.s32 %s24, %s25
        %s194 = smul.u32 32, %s193
        %p195 = scmp.eq.s32.totalorder %s25, 0
        // Predicated region
        $region37: #{tpu_custom_call.1} parent=27 // pred_check
          %p196 = pneg %p195
        $region38: #{tpu_custom_call.1} parent=27 // pred_check_branch
          %198 = sbr.rel (%p196) target = $region40
        $region39: #{tpu_custom_call.1} parent=27 // pred_region
          %199 = vst [vmem:[#allocation2] sm:$0xff] 0.0
          %200 = vst [vmem:[#allocation2 + $0x8] sm:$0xff] 0.0
          %201 = vst [vmem:[#allocation3] sm:$0xff] 0.0
        $region40: #{tpu_custom_call.1} parent=27 // pred_fallthru
          _
        %v202 = vld [vmem:[%s168] sm:$0xff]
        %v203 = vld [vmem:[%s168 + $0x8] sm:$0xff]
        %v204 = vld [vmem:[%s168 + $0x10] sm:$0xff]
        %v205 = vld [vmem:[%s168 + $0x18] sm:$0xff]
        %v206 = vld [vmem:[%s168 + $0x20] sm:$0xff]
        %v207 = vld [vmem:[%s168 + $0x28] sm:$0xff]
        %v208 = vld [vmem:[%s168 + $0x30] sm:$0xff]
        %v209 = vld [vmem:[%s168 + $0x38] sm:$0xff]
        %v210 = vld [vmem:[%s168 + $0x40] sm:$0xff]
        %v211 = vld [vmem:[%s168 + $0x48] sm:$0xff]
        %v212 = vld [vmem:[%s168 + $0x50] sm:$0xff]
        %v213 = vld [vmem:[%s168 + $0x58] sm:$0xff]
        %v214 = vld [vmem:[%s168 + $0x60] sm:$0xff]
        %v215 = vld [vmem:[%s168 + $0x68] sm:$0xff]
        %v216 = vld [vmem:[%s168 + $0x70] sm:$0xff]
        %v217 = vld [vmem:[%s168 + $0x78] sm:$0xff]
        %v218 = vld [vmem:[%s168 + $0x80] sm:$0xff]
        %v219 = vld [vmem:[%s168 + $0x88] sm:$0xff]
        %v220 = vld [vmem:[%s168 + $0x90] sm:$0xff]
        %v221 = vld [vmem:[%s168 + $0x98] sm:$0xff]
        %v222 = vld [vmem:[%s168 + $0xa0] sm:$0xff]
        %v223 = vld [vmem:[%s168 + $0xa8] sm:$0xff]
        %v224 = vld [vmem:[%s168 + $0xb0] sm:$0xff]
        %v225 = vld [vmem:[%s168 + $0xb8] sm:$0xff]
        %v226 = vld [vmem:[%s168 + $0xc0] sm:$0xff]
        %v227 = vld [vmem:[%s168 + $0xc8] sm:$0xff]
        %v228 = vld [vmem:[%s168 + $0xd0] sm:$0xff]
        %v229 = vld [vmem:[%s168 + $0xd8] sm:$0xff]
        %v230 = vld [vmem:[%s168 + $0xe0] sm:$0xff]
        %v231 = vld [vmem:[%s168 + $0xe8] sm:$0xff]
        %v232 = vld [vmem:[%s168 + $0xf0] sm:$0xff]
        %v233 = vld [vmem:[%s168 + $0xf8] sm:$0xff]
        %v234 = vld [vmem:[%s168 + $0x100] sm:$0xff]
        %v235 = vld [vmem:[%s168 + $0x108] sm:$0xff]
        %v236 = vld [vmem:[%s168 + $0x110] sm:$0xff]
        %v237 = vld [vmem:[%s168 + $0x118] sm:$0xff]
        %v238 = vld [vmem:[%s168 + $0x120] sm:$0xff]
        %v239 = vld [vmem:[%s168 + $0x128] sm:$0xff]
        %v240 = vld [vmem:[%s168 + $0x130] sm:$0xff]
        %v241 = vld [vmem:[%s168 + $0x138] sm:$0xff]
        %v242 = vld [vmem:[%s168 + $0x140] sm:$0xff]
        %v243 = vld [vmem:[%s168 + $0x148] sm:$0xff]
        %v244 = vld [vmem:[%s168 + $0x150] sm:$0xff]
        %v245 = vld [vmem:[%s168 + $0x158] sm:$0xff]
        %v246 = vld [vmem:[%s168 + $0x160] sm:$0xff]
        %v247 = vld [vmem:[%s168 + $0x168] sm:$0xff]
        %v248 = vld [vmem:[%s168 + $0x170] sm:$0xff]
        %v249 = vld [vmem:[%s168 + $0x178] sm:$0xff]
        %v250 = vld [vmem:[%s168 + $0x180] sm:$0xff]
        %v251 = vld [vmem:[%s168 + $0x188] sm:$0xff]
        %v252 = vld [vmem:[%s168 + $0x190] sm:$0xff]
        %v253 = vld [vmem:[%s168 + $0x198] sm:$0xff]
        %v254 = vld [vmem:[%s168 + $0x1a0] sm:$0xff]
        %v255 = vld [vmem:[%s168 + $0x1a8] sm:$0xff]
        %v256 = vld [vmem:[%s168 + $0x1b0] sm:$0xff]
        %v257 = vld [vmem:[%s168 + $0x1b8] sm:$0xff]
        %v258 = vld [vmem:[%s168 + $0x1c0] sm:$0xff]
        %v259 = vld [vmem:[%s168 + $0x1c8] sm:$0xff]
        %v260 = vld [vmem:[%s168 + $0x1d0] sm:$0xff]
        %v261 = vld [vmem:[%s168 + $0x1d8] sm:$0xff]
        %v262 = vld [vmem:[%s168 + $0x1e0] sm:$0xff]
        %v263 = vld [vmem:[%s168 + $0x1e8] sm:$0xff]
        %v264 = vld [vmem:[%s168 + $0x1f0] sm:$0xff]
        %v265 = vld [vmem:[%s168 + $0x1f8] sm:$0xff]
        %v266 = vsub.f32 %v202, %v234
        %v267 = vsub.f32 %v203, %v235
        %v268 = vsub.f32 %v204, %v236
        %v269 = vsub.f32 %v205, %v237
        %v270 = vsub.f32 %v206, %v238
        %v271 = vsub.f32 %v207, %v239
        %v272 = vsub.f32 %v208, %v240
        %v273 = vsub.f32 %v209, %v241
        %v274 = vsub.f32 %v210, %v242
        %v275 = vsub.f32 %v211, %v243
        %v276 = vsub.f32 %v212, %v244
        %v277 = vsub.f32 %v213, %v245
        %v278 = vsub.f32 %v214, %v246
        %v279 = vsub.f32 %v215, %v247
        %v280 = vsub.f32 %v216, %v248
        %v281 = vsub.f32 %v217, %v249
        %v282 = vsub.f32 %v218, %v250
        %v283 = vsub.f32 %v219, %v251
        %v284 = vsub.f32 %v220, %v252
        %v285 = vsub.f32 %v221, %v253
        %v286 = vsub.f32 %v222, %v254
        %v287 = vsub.f32 %v223, %v255
        %v288 = vsub.f32 %v224, %v256
        %v289 = vsub.f32 %v225, %v257
        %v290 = vsub.f32 %v226, %v258
        %v291 = vsub.f32 %v227, %v259
        %v292 = vsub.f32 %v228, %v260
        %v293 = vsub.f32 %v229, %v261
        %v294 = vsub.f32 %v230, %v262
        %v295 = vsub.f32 %v231, %v263
        %v296 = vsub.f32 %v232, %v264
        %v297 = vsub.f32 %v233, %v265
        %v298 = vand.u32 2147483647, %v266
        %v299 = vand.u32 2147483647, %v267
        %v300 = vand.u32 2147483647, %v268
        %v301 = vand.u32 2147483647, %v269
        %v302 = vand.u32 2147483647, %v270
        %v303 = vand.u32 2147483647, %v271
        %v304 = vand.u32 2147483647, %v272
        %v305 = vand.u32 2147483647, %v273
        %v306 = vand.u32 2147483647, %v274
        %v307 = vand.u32 2147483647, %v275
        %v308 = vand.u32 2147483647, %v276
        %v309 = vand.u32 2147483647, %v277
        %v310 = vand.u32 2147483647, %v278
        %v311 = vand.u32 2147483647, %v279
        %v312 = vand.u32 2147483647, %v280
        %v313 = vand.u32 2147483647, %v281
        %v314 = vand.u32 2147483647, %v282
        %v315 = vand.u32 2147483647, %v283
        %v316 = vand.u32 2147483647, %v284
        %v317 = vand.u32 2147483647, %v285
        %v318 = vand.u32 2147483647, %v286
        %v319 = vand.u32 2147483647, %v287
        %v320 = vand.u32 2147483647, %v288
        %v321 = vand.u32 2147483647, %v289
        %v322 = vand.u32 2147483647, %v290
        %v323 = vand.u32 2147483647, %v291
        %v324 = vand.u32 2147483647, %v292
        %v325 = vand.u32 2147483647, %v293
        %v326 = vand.u32 2147483647, %v294
        %v327 = vand.u32 2147483647, %v295
        %v328 = vand.u32 2147483647, %v296
        %v329 = vand.u32 2147483647, %v297
        %v330 = vld [vmem:[#allocation2] sm:$0xff]
        %v331 = vld [vmem:[#allocation2 + $0x8] sm:$0xff]
        %v332 = vadd.f32 %v298, %v300
        %v333 = vadd.f32 %v332, %v302
        %v334 = vadd.f32 %v333, %v304
        %v335 = vadd.f32 %v334, %v306
        %v336 = vadd.f32 %v335, %v308
        %v337 = vadd.f32 %v336, %v310
        %v338 = vadd.f32 %v337, %v312
        %v339 = vadd.f32 %v338, %v314
        %v340 = vadd.f32 %v339, %v316
        %v341 = vadd.f32 %v340, %v318
        %v342 = vadd.f32 %v341, %v320
        %v343 = vadd.f32 %v342, %v322
        %v344 = vadd.f32 %v343, %v324
        %v345 = vadd.f32 %v344, %v326
        %v346 = vadd.f32 %v345, %v328
        %v347 = vadd.f32 %v299, %v301
        %v348 = vadd.f32 %v347, %v303
        %v349 = vadd.f32 %v348, %v305
        %v350 = vadd.f32 %v349, %v307
        %v351 = vadd.f32 %v350, %v309
        %v352 = vadd.f32 %v351, %v311
        %v353 = vadd.f32 %v352, %v313
        %v354 = vadd.f32 %v353, %v315
        %v355 = vadd.f32 %v354, %v317
        %v356 = vadd.f32 %v355, %v319
        %v357 = vadd.f32 %v356, %v321
        %v358 = vadd.f32 %v357, %v323
        %v359 = vadd.f32 %v358, %v325
        %v360 = vadd.f32 %v359, %v327
        %v361 = vadd.f32 %v360, %v329
        %v362 = vadd.f32 %v330, %v346
        %v363 = vadd.f32 %v331, %v361
        %364 = vst [vmem:[#allocation2] sm:$0xff] %v362
        %365 = vst [vmem:[#allocation2 + $0x8] sm:$0xff] %v363
        %v366 = vpack.c.bf16 %v204, %v202
        %v367 = vpack.c.bf16 %v205, %v203
        %v368 = vpack.c.bf16 %v208, %v206
        %v369 = vpack.c.bf16 %v209, %v207
        %v370 = vpack.c.bf16 %v212, %v210
        %v371 = vpack.c.bf16 %v213, %v211
        %v372 = vpack.c.bf16 %v216, %v214
        %v373 = vpack.c.bf16 %v217, %v215
        %v374 = vpack.c.bf16 %v220, %v218
        %v375 = vpack.c.bf16 %v221, %v219
        %v376 = vpack.c.bf16 %v224, %v222
        %v377 = vpack.c.bf16 %v225, %v223
        %v378 = vpack.c.bf16 %v228, %v226
        %v379 = vpack.c.bf16 %v229, %v227
        %v380 = vpack.c.bf16 %v232, %v230
        %v381 = vpack.c.bf16 %v233, %v231
        %v382 = vpack.c.bf16 %v236, %v234
        %v383 = vpack.c.bf16 %v237, %v235
        %v384 = vpack.c.bf16 %v240, %v238
        %v385 = vpack.c.bf16 %v241, %v239
        %v386 = vpack.c.bf16 %v244, %v242
        %v387 = vpack.c.bf16 %v245, %v243
        %v388 = vpack.c.bf16 %v248, %v246
        %v389 = vpack.c.bf16 %v249, %v247
        %v390 = vpack.c.bf16 %v252, %v250
        %v391 = vpack.c.bf16 %v253, %v251
        %v392 = vpack.c.bf16 %v256, %v254
        %v393 = vpack.c.bf16 %v257, %v255
        %v394 = vpack.c.bf16 %v260, %v258
        %v395 = vpack.c.bf16 %v261, %v259
        %v396 = vpack.c.bf16 %v264, %v262
        %v397 = vpack.c.bf16 %v265, %v263
        %v398 = vld [vmem:[#allocation7] sm:$0xff]
        %v399 = vld [vmem:[#allocation7 + $0x8] sm:$0xff]
        %v400 = vld [vmem:[#allocation7 + $0x10] sm:$0xff]
        %v401 = vld [vmem:[#allocation7 + $0x18] sm:$0xff]
        %v402 = vld [vmem:[#allocation7 + $0x20] sm:$0xff]
        %v403 = vld [vmem:[#allocation7 + $0x28] sm:$0xff]
        %v404 = vld [vmem:[#allocation7 + $0x30] sm:$0xff]
        %v405 = vld [vmem:[#allocation7 + $0x38] sm:$0xff]
        %v406 = vld [vmem:[#allocation7 + $0x40] sm:$0xff]
        %v407 = vld [vmem:[#allocation7 + $0x48] sm:$0xff]
        %v408 = vld [vmem:[#allocation7 + $0x50] sm:$0xff]
        %v409 = vld [vmem:[#allocation7 + $0x58] sm:$0xff]
        %v410 = vld [vmem:[#allocation7 + $0x60] sm:$0xff]
        %v411 = vld [vmem:[#allocation7 + $0x68] sm:$0xff]
        %v412 = vld [vmem:[#allocation7 + $0x70] sm:$0xff]
        %v413 = vld [vmem:[#allocation7 + $0x78] sm:$0xff]
        %v414 = vld [vmem:[#allocation7 + $0x80] sm:$0xff]
        %v415 = vld [vmem:[#allocation7 + $0x88] sm:$0xff]
        %v416 = vld [vmem:[#allocation7 + $0x90] sm:$0xff]
        %v417 = vld [vmem:[#allocation7 + $0x98] sm:$0xff]
        %v418 = vld [vmem:[#allocation7 + $0xa0] sm:$0xff]
        %v419 = vld [vmem:[#allocation7 + $0xa8] sm:$0xff]
        %v420 = vld [vmem:[#allocation7 + $0xb0] sm:$0xff]
        %v421 = vld [vmem:[#allocation7 + $0xb8] sm:$0xff]
        %v422 = vld [vmem:[#allocation7 + $0xc0] sm:$0xff]
        %v423 = vld [vmem:[#allocation7 + $0xc8] sm:$0xff]
        %v424 = vld [vmem:[#allocation7 + $0xd0] sm:$0xff]
        %v425 = vld [vmem:[#allocation7 + $0xd8] sm:$0xff]
        %v426 = vld [vmem:[#allocation7 + $0xe0] sm:$0xff]
        %v427 = vld [vmem:[#allocation7 + $0xe8] sm:$0xff]
        %v428 = vld [vmem:[#allocation7 + $0xf0] sm:$0xff]
        %v429 = vld [vmem:[#allocation7 + $0xf8] sm:$0xff]
        %v430 = vld [vmem:[#allocation7 + $0x100] sm:$0xff]
        %v431 = vld [vmem:[#allocation7 + $0x108] sm:$0xff]
        %v432 = vld [vmem:[#allocation7 + $0x110] sm:$0xff]
        %v433 = vld [vmem:[#allocation7 + $0x118] sm:$0xff]
        %v434 = vld [vmem:[#allocation7 + $0x120] sm:$0xff]
        %v435 = vld [vmem:[#allocation7 + $0x128] sm:$0xff]
        %v436 = vld [vmem:[#allocation7 + $0x130] sm:$0xff]
        %v437 = vld [vmem:[#allocation7 + $0x138] sm:$0xff]
        %v438 = vld [vmem:[#allocation7 + $0x140] sm:$0xff]
        %v439 = vld [vmem:[#allocation7 + $0x148] sm:$0xff]
        %v440 = vld [vmem:[#allocation7 + $0x150] sm:$0xff]
        %v441 = vld [vmem:[#allocation7 + $0x158] sm:$0xff]
        %v442 = vld [vmem:[#allocation7 + $0x160] sm:$0xff]
        %v443 = vld [vmem:[#allocation7 + $0x168] sm:$0xff]
        %v444 = vld [vmem:[#allocation7 + $0x170] sm:$0xff]
        %v445 = vld [vmem:[#allocation7 + $0x178] sm:$0xff]
        %v446 = vld [vmem:[#allocation7 + $0x180] sm:$0xff]
        %v447 = vld [vmem:[#allocation7 + $0x188] sm:$0xff]
        %v448 = vld [vmem:[#allocation7 + $0x190] sm:$0xff]
        %v449 = vld [vmem:[#allocation7 + $0x198] sm:$0xff]
        %v450 = vld [vmem:[#allocation7 + $0x1a0] sm:$0xff]
        %v451 = vld [vmem:[#allocation7 + $0x1a8] sm:$0xff]
        %v452 = vld [vmem:[#allocation7 + $0x1b0] sm:$0xff]
        %v453 = vld [vmem:[#allocation7 + $0x1b8] sm:$0xff]
        %v454 = vld [vmem:[#allocation7 + $0x1c0] sm:$0xff]
        %v455 = vld [vmem:[#allocation7 + $0x1c8] sm:$0xff]
        %v456 = vld [vmem:[#allocation7 + $0x1d0] sm:$0xff]
        %v457 = vld [vmem:[#allocation7 + $0x1d8] sm:$0xff]
        %v458 = vld [vmem:[#allocation7 + $0x1e0] sm:$0xff]
        %v459 = vld [vmem:[#allocation7 + $0x1e8] sm:$0xff]
        %v460 = vld [vmem:[#allocation7 + $0x1f0] sm:$0xff]
        %v461 = vld [vmem:[#allocation7 + $0x1f8] sm:$0xff]
        %v526 = vunpack.c.l.b16 %v398
        %v527 = vunpack.c.h.b16 %v398
        %v528 = vunpack.c.l.b16 %v399
        %v529 = vunpack.c.h.b16 %v399
        %v530 = vunpack.c.l.b16 %v400
        %v531 = vunpack.c.h.b16 %v400
        %v532 = vunpack.c.l.b16 %v401
        %v533 = vunpack.c.h.b16 %v401
        %v534 = vunpack.c.l.b16 %v402
        %v535 = vunpack.c.h.b16 %v402
        %v536 = vunpack.c.l.b16 %v403
        %v537 = vunpack.c.h.b16 %v403
        %v538 = vunpack.c.l.b16 %v404
        %v539 = vunpack.c.h.b16 %v404
        %v540 = vunpack.c.l.b16 %v405
        %v541 = vunpack.c.h.b16 %v405
        %v542 = vunpack.c.l.b16 %v406
        %v543 = vunpack.c.h.b16 %v406
        %v544 = vunpack.c.l.b16 %v407
        %v545 = vunpack.c.h.b16 %v407
        %v546 = vunpack.c.l.b16 %v408
        %v547 = vunpack.c.h.b16 %v408
        %v548 = vunpack.c.l.b16 %v409
        %v549 = vunpack.c.h.b16 %v409
        %v550 = vunpack.c.l.b16 %v410
        %v551 = vunpack.c.h.b16 %v410
        %v552 = vunpack.c.l.b16 %v411
        %v553 = vunpack.c.h.b16 %v411
        %v554 = vunpack.c.l.b16 %v412
        %v555 = vunpack.c.h.b16 %v412
        %v556 = vunpack.c.l.b16 %v413
        %v557 = vunpack.c.h.b16 %v413
        %v558 = vunpack.c.l.b16 %v414
        %v559 = vunpack.c.h.b16 %v414
        %v560 = vunpack.c.l.b16 %v415
        %v561 = vunpack.c.h.b16 %v415
        %v562 = vunpack.c.l.b16 %v416
        %v563 = vunpack.c.h.b16 %v416
        %v564 = vunpack.c.l.b16 %v417
        %v565 = vunpack.c.h.b16 %v417
        %v566 = vunpack.c.l.b16 %v418
        %v567 = vunpack.c.h.b16 %v418
        %v568 = vunpack.c.l.b16 %v419
        %v569 = vunpack.c.h.b16 %v419
        %v570 = vunpack.c.l.b16 %v420
        %v571 = vunpack.c.h.b16 %v420
        %v572 = vunpack.c.l.b16 %v421
        %v573 = vunpack.c.h.b16 %v421
        %v574 = vunpack.c.l.b16 %v422
        %v575 = vunpack.c.h.b16 %v422
        %v576 = vunpack.c.l.b16 %v423
        %v577 = vunpack.c.h.b16 %v423
        %v578 = vunpack.c.l.b16 %v424
        %v579 = vunpack.c.h.b16 %v424
        %v580 = vunpack.c.l.b16 %v425
        %v581 = vunpack.c.h.b16 %v425
        %v582 = vunpack.c.l.b16 %v426
        %v583 = vunpack.c.h.b16 %v426
        %v584 = vunpack.c.l.b16 %v427
        %v585 = vunpack.c.h.b16 %v427
        %v586 = vunpack.c.l.b16 %v428
        %v587 = vunpack.c.h.b16 %v428
        %v588 = vunpack.c.l.b16 %v429
        %v589 = vunpack.c.h.b16 %v429
        %v590 = vunpack.c.l.b16 %v430
        %v591 = vunpack.c.h.b16 %v430
        %v592 = vunpack.c.l.b16 %v431
        %v593 = vunpack.c.h.b16 %v431
        %v594 = vunpack.c.l.b16 %v432
        %v595 = vunpack.c.h.b16 %v432
        %v596 = vunpack.c.l.b16 %v433
        %v597 = vunpack.c.h.b16 %v433
        %v598 = vunpack.c.l.b16 %v434
        %v599 = vunpack.c.h.b16 %v434
        %v600 = vunpack.c.l.b16 %v435
        %v601 = vunpack.c.h.b16 %v435
        %v602 = vunpack.c.l.b16 %v436
        %v603 = vunpack.c.h.b16 %v436
        %v604 = vunpack.c.l.b16 %v437
        %v605 = vunpack.c.h.b16 %v437
        %v606 = vunpack.c.l.b16 %v438
        %v607 = vunpack.c.h.b16 %v438
        %v608 = vunpack.c.l.b16 %v439
        %v609 = vunpack.c.h.b16 %v439
        %v610 = vunpack.c.l.b16 %v440
        %v611 = vunpack.c.h.b16 %v440
        %v612 = vunpack.c.l.b16 %v441
        %v613 = vunpack.c.h.b16 %v441
        %v614 = vunpack.c.l.b16 %v442
        %v615 = vunpack.c.h.b16 %v442
        %v616 = vunpack.c.l.b16 %v443
        %v617 = vunpack.c.h.b16 %v443
        %v618 = vunpack.c.l.b16 %v444
        %v619 = vunpack.c.h.b16 %v444
        %v620 = vunpack.c.l.b16 %v445
        %v621 = vunpack.c.h.b16 %v445
        %v622 = vunpack.c.l.b16 %v446
        %v623 = vunpack.c.h.b16 %v446
        %v624 = vunpack.c.l.b16 %v447
        %v625 = vunpack.c.h.b16 %v447
        %v626 = vunpack.c.l.b16 %v448
        %v627 = vunpack.c.h.b16 %v448
        %v628 = vunpack.c.l.b16 %v449
        %v629 = vunpack.c.h.b16 %v449
        %v630 = vunpack.c.l.b16 %v450
        %v631 = vunpack.c.h.b16 %v450
        %v632 = vunpack.c.l.b16 %v451
        %v633 = vunpack.c.h.b16 %v451
        %v634 = vunpack.c.l.b16 %v452
        %v635 = vunpack.c.h.b16 %v452
        %v636 = vunpack.c.l.b16 %v453
        %v637 = vunpack.c.h.b16 %v453
        %v638 = vunpack.c.l.b16 %v454
        %v639 = vunpack.c.h.b16 %v454
        %v640 = vunpack.c.l.b16 %v455
        %v641 = vunpack.c.h.b16 %v455
        %v642 = vunpack.c.l.b16 %v456
        %v643 = vunpack.c.h.b16 %v456
        %v644 = vunpack.c.l.b16 %v457
        %v645 = vunpack.c.h.b16 %v457
        %v646 = vunpack.c.l.b16 %v458
        %v647 = vunpack.c.h.b16 %v458
        %v648 = vunpack.c.l.b16 %v459
        %v649 = vunpack.c.h.b16 %v459
        %v650 = vunpack.c.l.b16 %v460
        %v651 = vunpack.c.h.b16 %v460
        %v652 = vunpack.c.l.b16 %v461
        %v653 = vunpack.c.h.b16 %v461
        %v654 = vpack.c.b16 %v530, %v526
        %v655 = vpack.c.b16 %v531, %v527
        %v656 = vpack.c.b16 %v532, %v528
        %v657 = vpack.c.b16 %v533, %v529
        %v658 = vpack.c.b16 %v538, %v534
        %v659 = vpack.c.b16 %v539, %v535
        %v660 = vpack.c.b16 %v540, %v536
        %v661 = vpack.c.b16 %v541, %v537
        %v662 = vpack.c.b16 %v546, %v542
        %v663 = vpack.c.b16 %v547, %v543
        %v664 = vpack.c.b16 %v548, %v544
        %v665 = vpack.c.b16 %v549, %v545
        %v666 = vpack.c.b16 %v554, %v550
        %v667 = vpack.c.b16 %v555, %v551
        %v668 = vpack.c.b16 %v556, %v552
        %v669 = vpack.c.b16 %v557, %v553
        %v670 = vpack.c.b16 %v562, %v558
        %v671 = vpack.c.b16 %v563, %v559
        %v672 = vpack.c.b16 %v564, %v560
        %v673 = vpack.c.b16 %v565, %v561
        %v674 = vpack.c.b16 %v570, %v566
        %v675 = vpack.c.b16 %v571, %v567
        %v676 = vpack.c.b16 %v572, %v568
        %v677 = vpack.c.b16 %v573, %v569
        %v678 = vpack.c.b16 %v578, %v574
        %v679 = vpack.c.b16 %v579, %v575
        %v680 = vpack.c.b16 %v580, %v576
        %v681 = vpack.c.b16 %v581, %v577
        %v682 = vpack.c.b16 %v586, %v582
        %v683 = vpack.c.b16 %v587, %v583
        %v684 = vpack.c.b16 %v588, %v584
        %v685 = vpack.c.b16 %v589, %v585
        %v686 = vpack.c.b16 %v594, %v590
        %v687 = vpack.c.b16 %v595, %v591
        %v688 = vpack.c.b16 %v596, %v592
        %v689 = vpack.c.b16 %v597, %v593
        %v690 = vpack.c.b16 %v602, %v598
        %v691 = vpack.c.b16 %v603, %v599
        %v692 = vpack.c.b16 %v604, %v600
        %v693 = vpack.c.b16 %v605, %v601
        %v694 = vpack.c.b16 %v610, %v606
        %v695 = vpack.c.b16 %v611, %v607
        %v696 = vpack.c.b16 %v612, %v608
        %v697 = vpack.c.b16 %v613, %v609
        %v698 = vpack.c.b16 %v618, %v614
        %v699 = vpack.c.b16 %v619, %v615
        %v700 = vpack.c.b16 %v620, %v616
        %v701 = vpack.c.b16 %v621, %v617
        %v702 = vpack.c.b16 %v626, %v622
        %v703 = vpack.c.b16 %v627, %v623
        %v704 = vpack.c.b16 %v628, %v624
        %v705 = vpack.c.b16 %v629, %v625
        %v706 = vpack.c.b16 %v634, %v630
        %v707 = vpack.c.b16 %v635, %v631
        %v708 = vpack.c.b16 %v636, %v632
        %v709 = vpack.c.b16 %v637, %v633
        %v710 = vpack.c.b16 %v642, %v638
        %v711 = vpack.c.b16 %v643, %v639
        %v712 = vpack.c.b16 %v644, %v640
        %v713 = vpack.c.b16 %v645, %v641
        %v714 = vpack.c.b16 %v650, %v646
        %v715 = vpack.c.b16 %v651, %v647
        %v716 = vpack.c.b16 %v652, %v648
        %v717 = vpack.c.b16 %v653, %v649
        %782 = vmatprep.subr.bf16.mxu0 %v655
        %783 = vmatpush1.bf16.msra.mxu0 %v654
        %784 = vmatprep.subr.bf16.mxu0 %v659
        %785 = vmatpush1.bf16.msra.mxu0 %v658
        %786 = vmatprep.subr.bf16.mxu0 %v663
        %787 = vmatpush1.bf16.msra.mxu0 %v662
        %788 = vmatprep.subr.bf16.mxu0 %v667
        %789 = vmatpush1.bf16.msra.mxu0 %v666
        %790 = vmatprep.subr.bf16.mxu0 %v671
        %791 = vmatpush1.bf16.msra.mxu0 %v670
        %792 = vmatprep.subr.bf16.mxu0 %v675
        %793 = vmatpush1.bf16.msra.mxu0 %v674
        %794 = vmatprep.subr.bf16.mxu0 %v679
        %795 = vmatpush1.bf16.msra.mxu0 %v678
        %796 = vmatprep.subr.bf16.mxu0 %v683
        %797 = vmatpush1.bf16.msra.mxu0 %v682
        %798 = vmatprep.subr.bf16.mxu0 %v687
        %799 = vmatpush1.bf16.msra.mxu0 %v686
        %800 = vmatprep.subr.bf16.mxu0 %v691
        %801 = vmatpush1.bf16.msra.mxu0 %v690
        %802 = vmatprep.subr.bf16.mxu0 %v695
        %803 = vmatpush1.bf16.msra.mxu0 %v694
        %804 = vmatprep.subr.bf16.mxu0 %v699
        %805 = vmatpush1.bf16.msra.mxu0 %v698
        %806 = vmatprep.subr.bf16.mxu0 %v703
        %807 = vmatpush1.bf16.msra.mxu0 %v702
        %808 = vmatprep.subr.bf16.mxu0 %v707
        %809 = vmatpush1.bf16.msra.mxu0 %v706
        %810 = vmatprep.subr.bf16.mxu0 %v711
        %811 = vmatpush1.bf16.msra.mxu0 %v710
        %812 = vmatprep.subr.bf16.mxu0 %v715
        %813 = vmatpush1.bf16.msra.mxu0 %v714
        %814 = vmatprep.mubr.bf16.mxu0 %v367
        %815 = vmatmul.mubr.bf16.gmra.mrb[0].mxu0 %v366
        %v816 = vpop.f32.mrb[0].mxu0
        %v817 = vadd.f32 0.0, %v816
        %v818 = vpop.f32.mrb[0].mxu0
        %v819 = vadd.f32 0.0, %v818
        %v820 = vpop.f32.mrb[0].mxu0
        %v821 = vadd.f32 0.0, %v820
        %v822 = vpop.f32.mrb[0].mxu0
        %v823 = vadd.f32 0.0, %v822
        %824 = vmatprep.mubr.bf16.mxu0 %v369
        %825 = vmatmul.mubr.bf16.gmra.mrb[0].mxu0 %v368
        %v826 = vpop.f32.mrb[0].mxu0
        %v827 = vadd.f32 0.0, %v826
        %v828 = vpop.f32.mrb[0].mxu0
        %v829 = vadd.f32 0.0, %v828
        %v830 = vpop.f32.mrb[0].mxu0
        %v831 = vadd.f32 0.0, %v830
        %v832 = vpop.f32.mrb[0].mxu0
        %v833 = vadd.f32 0.0, %v832
        %834 = vmatprep.mubr.bf16.mxu0 %v371
        %835 = vmatmul.mubr.bf16.gmra.mrb[0].mxu0 %v370
        %v836 = vpop.f32.mrb[0].mxu0
        %v837 = vadd.f32 0.0, %v836
        %v838 = vpop.f32.mrb[0].mxu0
        %v839 = vadd.f32 0.0, %v838
        %v840 = vpop.f32.mrb[0].mxu0
        %v841 = vadd.f32 0.0, %v840
        %v842 = vpop.f32.mrb[0].mxu0
        %v843 = vadd.f32 0.0, %v842
        %844 = vmatprep.mubr.bf16.mxu0 %v373
        %845 = vmatmul.mubr.bf16.gmra.mrb[0].mxu0 %v372
        %v846 = vpop.f32.mrb[0].mxu0
        %v847 = vadd.f32 0.0, %v846
        %v848 = vpop.f32.mrb[0].mxu0
        %v849 = vadd.f32 0.0, %v848
        %v850 = vpop.f32.mrb[0].mxu0
        %v851 = vadd.f32 0.0, %v850
        %v852 = vpop.f32.mrb[0].mxu0
        %v853 = vadd.f32 0.0, %v852
        %854 = vmatprep.mubr.bf16.mxu0 %v375
        %855 = vmatmul.mubr.bf16.gmra.mrb[0].mxu0 %v374
        %v856 = vpop.f32.mrb[0].mxu0
        %v857 = vadd.f32 0.0, %v856
        %v858 = vpop.f32.mrb[0].mxu0
        %v859 = vadd.f32 0.0, %v858
        %v860 = vpop.f32.mrb[0].mxu0
        %v861 = vadd.f32 0.0, %v860
        %v862 = vpop.f32.mrb[0].mxu0
        %v863 = vadd.f32 0.0, %v862
        %864 = vmatprep.mubr.bf16.mxu0 %v377
        %865 = vmatmul.mubr.bf16.gmra.mrb[0].mxu0 %v376
        %v866 = vpop.f32.mrb[0].mxu0
        %v867 = vadd.f32 0.0, %v866
        %v868 = vpop.f32.mrb[0].mxu0
        %v869 = vadd.f32 0.0, %v868
        %v870 = vpop.f32.mrb[0].mxu0
        %v871 = vadd.f32 0.0, %v870
        %v872 = vpop.f32.mrb[0].mxu0
        %v873 = vadd.f32 0.0, %v872
        %874 = vmatprep.mubr.bf16.mxu0 %v379
        %875 = vmatmul.mubr.bf16.gmra.mrb[0].mxu0 %v378
        %v876 = vpop.f32.mrb[0].mxu0
        %v877 = vadd.f32 0.0, %v876
        %v878 = vpop.f32.mrb[0].mxu0
        %v879 = vadd.f32 0.0, %v878
        %v880 = vpop.f32.mrb[0].mxu0
        %v881 = vadd.f32 0.0, %v880
        %v882 = vpop.f32.mrb[0].mxu0
        %v883 = vadd.f32 0.0, %v882
        %884 = vmatprep.mubr.bf16.mxu0 %v381
        %885 = vmatmul.mubr.bf16.gmra.mrb[0].mxu0 %v380
        %v886 = vpop.f32.mrb[0].mxu0
        %v887 = vadd.f32 0.0, %v886
        %v888 = vpop.f32.mrb[0].mxu0
        %v889 = vadd.f32 0.0, %v888
        %v890 = vpop.f32.mrb[0].mxu0
        %v891 = vadd.f32 0.0, %v890
        %v892 = vpop.f32.mrb[0].mxu0
        %v893 = vadd.f32 0.0, %v892
        %894 = vmatprep.mubr.bf16.mxu0 %v383
        %895 = vmatmul.mubr.bf16.gmra.mrb[0].mxu0 %v382
        %v896 = vpop.f32.mrb[0].mxu0
        %v897 = vadd.f32 0.0, %v896
        %v898 = vpop.f32.mrb[0].mxu0
        %v899 = vadd.f32 0.0, %v898
        %v900 = vpop.f32.mrb[0].mxu0
        %v901 = vadd.f32 0.0, %v900
        %v902 = vpop.f32.mrb[0].mxu0
        %v903 = vadd.f32 0.0, %v902
        %904 = vmatprep.mubr.bf16.mxu0 %v385
        %905 = vmatmul.mubr.bf16.gmra.mrb[0].mxu0 %v384
        %v906 = vpop.f32.mrb[0].mxu0
        %v907 = vadd.f32 0.0, %v906
        %v908 = vpop.f32.mrb[0].mxu0
        %v909 = vadd.f32 0.0, %v908
        %v910 = vpop.f32.mrb[0].mxu0
        %v911 = vadd.f32 0.0, %v910
        %v912 = vpop.f32.mrb[0].mxu0
        %v913 = vadd.f32 0.0, %v912
        %914 = vmatprep.mubr.bf16.mxu0 %v387
        %915 = vmatmul.mubr.bf16.gmra.mrb[0].mxu0 %v386
        %v916 = vpop.f32.mrb[0].mxu0
        %v917 = vadd.f32 0.0, %v916
        %v918 = vpop.f32.mrb[0].mxu0
        %v919 = vadd.f32 0.0, %v918
        %v920 = vpop.f32.mrb[0].mxu0
        %v921 = vadd.f32 0.0, %v920
        %v922 = vpop.f32.mrb[0].mxu0
        %v923 = vadd.f32 0.0, %v922
        %924 = vmatprep.mubr.bf16.mxu0 %v389
        %925 = vmatmul.mubr.bf16.gmra.mrb[0].mxu0 %v388
        %v926 = vpop.f32.mrb[0].mxu0
        %v927 = vadd.f32 0.0, %v926
        %v928 = vpop.f32.mrb[0].mxu0
        %v929 = vadd.f32 0.0, %v928
        %v930 = vpop.f32.mrb[0].mxu0
        %v931 = vadd.f32 0.0, %v930
        %v932 = vpop.f32.mrb[0].mxu0
        %v933 = vadd.f32 0.0, %v932
        %934 = vmatprep.mubr.bf16.mxu0 %v391
        %935 = vmatmul.mubr.bf16.gmra.mrb[0].mxu0 %v390
        %v936 = vpop.f32.mrb[0].mxu0
        %v937 = vadd.f32 0.0, %v936
        %v938 = vpop.f32.mrb[0].mxu0
        %v939 = vadd.f32 0.0, %v938
        %v940 = vpop.f32.mrb[0].mxu0
        %v941 = vadd.f32 0.0, %v940
        %v942 = vpop.f32.mrb[0].mxu0
        %v943 = vadd.f32 0.0, %v942
        %944 = vmatprep.mubr.bf16.mxu0 %v393
        %945 = vmatmul.mubr.bf16.gmra.mrb[0].mxu0 %v392
        %v946 = vpop.f32.mrb[0].mxu0
        %v947 = vadd.f32 0.0, %v946
        %v948 = vpop.f32.mrb[0].mxu0
        %v949 = vadd.f32 0.0, %v948
        %v950 = vpop.f32.mrb[0].mxu0
        %v951 = vadd.f32 0.0, %v950
        %v952 = vpop.f32.mrb[0].mxu0
        %v953 = vadd.f32 0.0, %v952
        %954 = vmatprep.mubr.bf16.mxu0 %v395
        %955 = vmatmul.mubr.bf16.gmra.mrb[0].mxu0 %v394
        %v956 = vpop.f32.mrb[0].mxu0
        %v957 = vadd.f32 0.0, %v956
        %v958 = vpop.f32.mrb[0].mxu0
        %v959 = vadd.f32 0.0, %v958
        %v960 = vpop.f32.mrb[0].mxu0
        %v961 = vadd.f32 0.0, %v960
        %v962 = vpop.f32.mrb[0].mxu0
        %v963 = vadd.f32 0.0, %v962
        %964 = vmatprep.mubr.bf16.mxu0 %v397
        %965 = vmatmul.mubr.bf16.gmra.mrb[0].mxu0 %v396
        %v966 = vpop.f32.mrb[0].mxu0
        %v967 = vadd.f32 0.0, %v966
        %v968 = vpop.f32.mrb[0].mxu0
        %v969 = vadd.f32 0.0, %v968
        %v970 = vpop.f32.mrb[0].mxu0
        %v971 = vadd.f32 0.0, %v970
        %v972 = vpop.f32.mrb[0].mxu0
        %v973 = vadd.f32 0.0, %v972
        %974 = vdwg.mxu0
        %975 = vmatprep.subr.bf16.mxu0 %v657
        %976 = vmatpush1.bf16.msra.mxu0 %v656
        %977 = vmatprep.subr.bf16.mxu0 %v661
        %978 = vmatpush1.bf16.msra.mxu0 %v660
        %979 = vmatprep.subr.bf16.mxu0 %v665
        %980 = vmatpush1.bf16.msra.mxu0 %v664
        %981 = vmatprep.subr.bf16.mxu0 %v669
        %982 = vmatpush1.bf16.msra.mxu0 %v668
        %983 = vmatprep.subr.bf16.mxu0 %v673
        %984 = vmatpush1.bf16.msra.mxu0 %v672
        %985 = vmatprep.subr.bf16.mxu0 %v677
        %986 = vmatpush1.bf16.msra.mxu0 %v676
        %987 = vmatprep.subr.bf16.mxu0 %v681
        %988 = vmatpush1.bf16.msra.mxu0 %v680
        %989 = vmatprep.subr.bf16.mxu0 %v685
        %990 = vmatpush1.bf16.msra.mxu0 %v684
        %991 = vmatprep.subr.bf16.mxu0 %v689
        %992 = vmatpush1.bf16.msra.mxu0 %v688
        %993 = vmatprep.subr.bf16.mxu0 %v693
        %994 = vmatpush1.bf16.msra.mxu0 %v692
        %995 = vmatprep.subr.bf16.mxu0 %v697
        %996 = vmatpush1.bf16.msra.mxu0 %v696
        %997 = vmatprep.subr.bf16.mxu0 %v701
        %998 = vmatpush1.bf16.msra.mxu0 %v700
        %999 = vmatprep.subr.bf16.mxu0 %v705
        %1000 = vmatpush1.bf16.msra.mxu0 %v704
        %1001 = vmatprep.subr.bf16.mxu0 %v709
        %1002 = vmatpush1.bf16.msra.mxu0 %v708
        %1003 = vmatprep.subr.bf16.mxu0 %v713
        %1004 = vmatpush1.bf16.msra.mxu0 %v712
        %1005 = vmatprep.subr.bf16.mxu0 %v717
        %1006 = vmatpush1.bf16.msra.mxu0 %v716
        %1007 = vmatprep.mubr.bf16.mxu0 %v367
        %1008 = vmatmul.mubr.bf16.gmra.mrb[0].mxu0 %v366
        %v1009 = vpop.f32.mrb[0].mxu0
        %v1010 = vadd.f32 0.0, %v1009
        %v1011 = vpop.f32.mrb[0].mxu0
        %v1012 = vadd.f32 0.0, %v1011
        %v1013 = vpop.f32.mrb[0].mxu0
        %v1014 = vadd.f32 0.0, %v1013
        %v1015 = vpop.f32.mrb[0].mxu0
        %v1016 = vadd.f32 0.0, %v1015
        %1017 = vmatprep.mubr.bf16.mxu0 %v369
        %1018 = vmatmul.mubr.bf16.gmra.mrb[0].mxu0 %v368
        %v1019 = vpop.f32.mrb[0].mxu0
        %v1020 = vadd.f32 0.0, %v1019
        %v1021 = vpop.f32.mrb[0].mxu0
        %v1022 = vadd.f32 0.0, %v1021
        %v1023 = vpop.f32.mrb[0].mxu0
        %v1024 = vadd.f32 0.0, %v1023
        %v1025 = vpop.f32.mrb[0].mxu0
        %v1026 = vadd.f32 0.0, %v1025
        %1027 = vmatprep.mubr.bf16.mxu0 %v371
        %1028 = vmatmul.mubr.bf16.gmra.mrb[0].mxu0 %v370
        %v1029 = vpop.f32.mrb[0].mxu0
        %v1030 = vadd.f32 0.0, %v1029
        %v1031 = vpop.f32.mrb[0].mxu0
        %v1032 = vadd.f32 0.0, %v1031
        %v1033 = vpop.f32.mrb[0].mxu0
        %v1034 = vadd.f32 0.0, %v1033
        %v1035 = vpop.f32.mrb[0].mxu0
        %v1036 = vadd.f32 0.0, %v1035
        %1037 = vmatprep.mubr.bf16.mxu0 %v373
        %1038 = vmatmul.mubr.bf16.gmra.mrb[0].mxu0 %v372
        %v1039 = vpop.f32.mrb[0].mxu0
        %v1040 = vadd.f32 0.0, %v1039
        %v1041 = vpop.f32.mrb[0].mxu0
        %v1042 = vadd.f32 0.0, %v1041
        %v1043 = vpop.f32.mrb[0].mxu0
        %v1044 = vadd.f32 0.0, %v1043
        %v1045 = vpop.f32.mrb[0].mxu0
        %v1046 = vadd.f32 0.0, %v1045
        %1047 = vmatprep.mubr.bf16.mxu0 %v375
        %1048 = vmatmul.mubr.bf16.gmra.mrb[0].mxu0 %v374
        %v1049 = vpop.f32.mrb[0].mxu0
        %v1050 = vadd.f32 0.0, %v1049
        %v1051 = vpop.f32.mrb[0].mxu0
        %v1052 = vadd.f32 0.0, %v1051
        %v1053 = vpop.f32.mrb[0].mxu0
        %v1054 = vadd.f32 0.0, %v1053
        %v1055 = vpop.f32.mrb[0].mxu0
        %v1056 = vadd.f32 0.0, %v1055
        %1057 = vmatprep.mubr.bf16.mxu0 %v377
        %1058 = vmatmul.mubr.bf16.gmra.mrb[0].mxu0 %v376
        %v1059 = vpop.f32.mrb[0].mxu0
        %v1060 = vadd.f32 0.0, %v1059
        %v1061 = vpop.f32.mrb[0].mxu0
        %v1062 = vadd.f32 0.0, %v1061
        %v1063 = vpop.f32.mrb[0].mxu0
        %v1064 = vadd.f32 0.0, %v1063
        %v1065 = vpop.f32.mrb[0].mxu0
        %v1066 = vadd.f32 0.0, %v1065
        %1067 = vmatprep.mubr.bf16.mxu0 %v379
        %1068 = vmatmul.mubr.bf16.gmra.mrb[0].mxu0 %v378
        %v1069 = vpop.f32.mrb[0].mxu0
        %v1070 = vadd.f32 0.0, %v1069
        %v1071 = vpop.f32.mrb[0].mxu0
        %v1072 = vadd.f32 0.0, %v1071
        %v1073 = vpop.f32.mrb[0].mxu0
        %v1074 = vadd.f32 0.0, %v1073
        %v1075 = vpop.f32.mrb[0].mxu0
        %v1076 = vadd.f32 0.0, %v1075
        %1077 = vmatprep.mubr.bf16.mxu0 %v381
        %1078 = vmatmul.mubr.bf16.gmra.mrb[0].mxu0 %v380
        %v1079 = vpop.f32.mrb[0].mxu0
        %v1080 = vadd.f32 0.0, %v1079
        %v1081 = vpop.f32.mrb[0].mxu0
        %v1082 = vadd.f32 0.0, %v1081
        %v1083 = vpop.f32.mrb[0].mxu0
        %v1084 = vadd.f32 0.0, %v1083
        %v1085 = vpop.f32.mrb[0].mxu0
        %v1086 = vadd.f32 0.0, %v1085
        %1087 = vmatprep.mubr.bf16.mxu0 %v383
        %1088 = vmatmul.mubr.bf16.gmra.mrb[0].mxu0 %v382
        %v1089 = vpop.f32.mrb[0].mxu0
        %v1090 = vadd.f32 0.0, %v1089
        %v1091 = vpop.f32.mrb[0].mxu0
        %v1092 = vadd.f32 0.0, %v1091
        %v1093 = vpop.f32.mrb[0].mxu0
        %v1094 = vadd.f32 0.0, %v1093
        %v1095 = vpop.f32.mrb[0].mxu0
        %v1096 = vadd.f32 0.0, %v1095
        %1097 = vmatprep.mubr.bf16.mxu0 %v385
        %1098 = vmatmul.mubr.bf16.gmra.mrb[0].mxu0 %v384
        %v1099 = vpop.f32.mrb[0].mxu0
        %v1100 = vadd.f32 0.0, %v1099
        %v1101 = vpop.f32.mrb[0].mxu0
        %v1102 = vadd.f32 0.0, %v1101
        %v1103 = vpop.f32.mrb[0].mxu0
        %v1104 = vadd.f32 0.0, %v1103
        %v1105 = vpop.f32.mrb[0].mxu0
        %v1106 = vadd.f32 0.0, %v1105
        %1107 = vmatprep.mubr.bf16.mxu0 %v387
        %1108 = vmatmul.mubr.bf16.gmra.mrb[0].mxu0 %v386
        %v1109 = vpop.f32.mrb[0].mxu0
        %v1110 = vadd.f32 0.0, %v1109
        %v1111 = vpop.f32.mrb[0].mxu0
        %v1112 = vadd.f32 0.0, %v1111
        %v1113 = vpop.f32.mrb[0].mxu0
        %v1114 = vadd.f32 0.0, %v1113
        %v1115 = vpop.f32.mrb[0].mxu0
        %v1116 = vadd.f32 0.0, %v1115
        %1117 = vmatprep.mubr.bf16.mxu0 %v389
        %1118 = vmatmul.mubr.bf16.gmra.mrb[0].mxu0 %v388
        %v1119 = vpop.f32.mrb[0].mxu0
        %v1120 = vadd.f32 0.0, %v1119
        %v1121 = vpop.f32.mrb[0].mxu0
        %v1122 = vadd.f32 0.0, %v1121
        %v1123 = vpop.f32.mrb[0].mxu0
        %v1124 = vadd.f32 0.0, %v1123
        %v1125 = vpop.f32.mrb[0].mxu0
        %v1126 = vadd.f32 0.0, %v1125
        %1127 = vmatprep.mubr.bf16.mxu0 %v391
        %1128 = vmatmul.mubr.bf16.gmra.mrb[0].mxu0 %v390
        %v1129 = vpop.f32.mrb[0].mxu0
        %v1130 = vadd.f32 0.0, %v1129
        %v1131 = vpop.f32.mrb[0].mxu0
        %v1132 = vadd.f32 0.0, %v1131
        %v1133 = vpop.f32.mrb[0].mxu0
        %v1134 = vadd.f32 0.0, %v1133
        %v1135 = vpop.f32.mrb[0].mxu0
        %v1136 = vadd.f32 0.0, %v1135
        %1137 = vmatprep.mubr.bf16.mxu0 %v393
        %1138 = vmatmul.mubr.bf16.gmra.mrb[0].mxu0 %v392
        %v1139 = vpop.f32.mrb[0].mxu0
        %v1140 = vadd.f32 0.0, %v1139
        %v1141 = vpop.f32.mrb[0].mxu0
        %v1142 = vadd.f32 0.0, %v1141
        %v1143 = vpop.f32.mrb[0].mxu0
        %v1144 = vadd.f32 0.0, %v1143
        %v1145 = vpop.f32.mrb[0].mxu0
        %v1146 = vadd.f32 0.0, %v1145
        %1147 = vmatprep.mubr.bf16.mxu0 %v395
        %1148 = vmatmul.mubr.bf16.gmra.mrb[0].mxu0 %v394
        %v1149 = vpop.f32.mrb[0].mxu0
        %v1150 = vadd.f32 0.0, %v1149
        %v1151 = vpop.f32.mrb[0].mxu0
        %v1152 = vadd.f32 0.0, %v1151
        %v1153 = vpop.f32.mrb[0].mxu0
        %v1154 = vadd.f32 0.0, %v1153
        %v1155 = vpop.f32.mrb[0].mxu0
        %v1156 = vadd.f32 0.0, %v1155
        %1157 = vmatprep.mubr.bf16.mxu0 %v397
        %1158 = vmatmul.mubr.bf16.gmra.mrb[0].mxu0 %v396
        %v1159 = vpop.f32.mrb[0].mxu0
        %v1160 = vadd.f32 0.0, %v1159
        %v1161 = vpop.f32.mrb[0].mxu0
        %v1162 = vadd.f32 0.0, %v1161
        %v1163 = vpop.f32.mrb[0].mxu0
        %v1164 = vadd.f32 0.0, %v1163
        %v1165 = vpop.f32.mrb[0].mxu0
        %v1166 = vadd.f32 0.0, %v1165
        %1167 = vdwg.mxu0
        %v1168 = vmul.f32 %v817, %v817
        %v1169 = vmul.f32 %v821, %v821
        %v1170 = vmul.f32 %v827, %v827
        %v1171 = vmul.f32 %v831, %v831
        %v1172 = vmul.f32 %v837, %v837
        %v1173 = vmul.f32 %v841, %v841
        %v1174 = vmul.f32 %v847, %v847
        %v1175 = vmul.f32 %v851, %v851
        %v1176 = vmul.f32 %v857, %v857
        %v1177 = vmul.f32 %v861, %v861
        %v1178 = vmul.f32 %v867, %v867
        %v1179 = vmul.f32 %v871, %v871
        %v1180 = vmul.f32 %v877, %v877
        %v1181 = vmul.f32 %v881, %v881
        %v1182 = vmul.f32 %v887, %v887
        %v1183 = vmul.f32 %v891, %v891
        %v1184 = vmul.f32 %v897, %v897
        %v1185 = vmul.f32 %v901, %v901
        %v1186 = vmul.f32 %v907, %v907
        %v1187 = vmul.f32 %v911, %v911
        %v1188 = vmul.f32 %v917, %v917
        %v1189 = vmul.f32 %v921, %v921
        %v1190 = vmul.f32 %v927, %v927
        %v1191 = vmul.f32 %v931, %v931
        %v1192 = vmul.f32 %v937, %v937
        %v1193 = vmul.f32 %v941, %v941
        %v1194 = vmul.f32 %v947, %v947
        %v1195 = vmul.f32 %v951, %v951
        %v1196 = vmul.f32 %v957, %v957
        %v1197 = vmul.f32 %v961, %v961
        %v1198 = vmul.f32 %v967, %v967
        %v1199 = vmul.f32 %v971, %v971
        %v1200 = vmul.f32 %v1010, %v1010
        %v1201 = vmul.f32 %v1014, %v1014
        %v1202 = vmul.f32 %v1020, %v1020
        %v1203 = vmul.f32 %v1024, %v1024
        %v1204 = vmul.f32 %v1030, %v1030
        %v1205 = vmul.f32 %v1034, %v1034
        %v1206 = vmul.f32 %v1040, %v1040
        %v1207 = vmul.f32 %v1044, %v1044
        %v1208 = vmul.f32 %v1050, %v1050
        %v1209 = vmul.f32 %v1054, %v1054
        %v1210 = vmul.f32 %v1060, %v1060
        %v1211 = vmul.f32 %v1064, %v1064
        %v1212 = vmul.f32 %v1070, %v1070
        %v1213 = vmul.f32 %v1074, %v1074
        %v1214 = vmul.f32 %v1080, %v1080
        %v1215 = vmul.f32 %v1084, %v1084
        %v1216 = vmul.f32 %v1090, %v1090
        %v1217 = vmul.f32 %v1094, %v1094
        %v1218 = vmul.f32 %v1100, %v1100
        %v1219 = vmul.f32 %v1104, %v1104
        %v1220 = vmul.f32 %v1110, %v1110
        %v1221 = vmul.f32 %v1114, %v1114
        %v1222 = vmul.f32 %v1120, %v1120
        %v1223 = vmul.f32 %v1124, %v1124
        %v1224 = vmul.f32 %v1130, %v1130
        %v1225 = vmul.f32 %v1134, %v1134
        %v1226 = vmul.f32 %v1140, %v1140
        %v1227 = vmul.f32 %v1144, %v1144
        %v1228 = vmul.f32 %v1150, %v1150
        %v1229 = vmul.f32 %v1154, %v1154
        %v1230 = vmul.f32 %v1160, %v1160
        %v1231 = vmul.f32 %v1164, %v1164
        %v1232 = vadd.f32 %v1168, %v1200
        %v1233 = vadd.f32 %v1169, %v1201
        %v1234 = vadd.f32 %v1170, %v1202
        %v1235 = vadd.f32 %v1171, %v1203
        %v1236 = vadd.f32 %v1172, %v1204
        %v1237 = vadd.f32 %v1173, %v1205
        %v1238 = vadd.f32 %v1174, %v1206
        %v1239 = vadd.f32 %v1175, %v1207
        %v1240 = vadd.f32 %v1176, %v1208
        %v1241 = vadd.f32 %v1177, %v1209
        %v1242 = vadd.f32 %v1178, %v1210
        %v1243 = vadd.f32 %v1179, %v1211
        %v1244 = vadd.f32 %v1180, %v1212
        %v1245 = vadd.f32 %v1181, %v1213
        %v1246 = vadd.f32 %v1182, %v1214
        %v1247 = vadd.f32 %v1183, %v1215
        %v1248 = vadd.f32 %v1184, %v1216
        %v1249 = vadd.f32 %v1185, %v1217
        %v1250 = vadd.f32 %v1186, %v1218
        %v1251 = vadd.f32 %v1187, %v1219
        %v1252 = vadd.f32 %v1188, %v1220
        %v1253 = vadd.f32 %v1189, %v1221
        %v1254 = vadd.f32 %v1190, %v1222
        %v1255 = vadd.f32 %v1191, %v1223
        %v1256 = vadd.f32 %v1192, %v1224
        %v1257 = vadd.f32 %v1193, %v1225
        %v1258 = vadd.f32 %v1194, %v1226
        %v1259 = vadd.f32 %v1195, %v1227
        %v1260 = vadd.f32 %v1196, %v1228
        %v1261 = vadd.f32 %v1197, %v1229
        %v1262 = vadd.f32 %v1198, %v1230
        %v1263 = vadd.f32 %v1199, %v1231
        %v1264 = vrsqrt.pop %v1232
        %v1265 = vmul.f32 %v1232, %v1264
        %vm1266 = vcmp.eq.f32.partialorder %v1232, inf
        %v1267 = vsel %vm1266, %v1232, %v1265
        %vm1268 = vcmp.eq.f32.partialorder %v1232, 0.0
        %v1269 = vand.u32 %v1232, 2147483648
        %v1270 = vsel %vm1268, %v1269, %v1267
        %v1271 = vrsqrt.pop %v1233
        %v1272 = vmul.f32 %v1233, %v1271
        %vm1273 = vcmp.eq.f32.partialorder %v1233, inf
        %v1274 = vsel %vm1273, %v1233, %v1272
        %vm1275 = vcmp.eq.f32.partialorder %v1233, 0.0
        %v1276 = vand.u32 %v1233, 2147483648
        %v1277 = vsel %vm1275, %v1276, %v1274
        %v1278 = vrsqrt.pop %v1234
        %v1279 = vmul.f32 %v1234, %v1278
        %vm1280 = vcmp.eq.f32.partialorder %v1234, inf
        %v1281 = vsel %vm1280, %v1234, %v1279
        %vm1282 = vcmp.eq.f32.partialorder %v1234, 0.0
        %v1283 = vand.u32 %v1234, 2147483648
        %v1284 = vsel %vm1282, %v1283, %v1281
        %v1285 = vrsqrt.pop %v1235
        %v1286 = vmul.f32 %v1235, %v1285
        %vm1287 = vcmp.eq.f32.partialorder %v1235, inf
        %v1288 = vsel %vm1287, %v1235, %v1286
        %vm1289 = vcmp.eq.f32.partialorder %v1235, 0.0
        %v1290 = vand.u32 %v1235, 2147483648
        %v1291 = vsel %vm1289, %v1290, %v1288
        %v1292 = vrsqrt.pop %v1236
        %v1293 = vmul.f32 %v1236, %v1292
        %vm1294 = vcmp.eq.f32.partialorder %v1236, inf
        %v1295 = vsel %vm1294, %v1236, %v1293
        %vm1296 = vcmp.eq.f32.partialorder %v1236, 0.0
        %v1297 = vand.u32 %v1236, 2147483648
        %v1298 = vsel %vm1296, %v1297, %v1295
        %v1299 = vrsqrt.pop %v1237
        %v1300 = vmul.f32 %v1237, %v1299
        %vm1301 = vcmp.eq.f32.partialorder %v1237, inf
        %v1302 = vsel %vm1301, %v1237, %v1300
        %vm1303 = vcmp.eq.f32.partialorder %v1237, 0.0
        %v1304 = vand.u32 %v1237, 2147483648
        %v1305 = vsel %vm1303, %v1304, %v1302
        %v1306 = vrsqrt.pop %v1238
        %v1307 = vmul.f32 %v1238, %v1306
        %vm1308 = vcmp.eq.f32.partialorder %v1238, inf
        %v1309 = vsel %vm1308, %v1238, %v1307
        %vm1310 = vcmp.eq.f32.partialorder %v1238, 0.0
        %v1311 = vand.u32 %v1238, 2147483648
        %v1312 = vsel %vm1310, %v1311, %v1309
        %v1313 = vrsqrt.pop %v1239
        %v1314 = vmul.f32 %v1239, %v1313
        %vm1315 = vcmp.eq.f32.partialorder %v1239, inf
        %v1316 = vsel %vm1315, %v1239, %v1314
        %vm1317 = vcmp.eq.f32.partialorder %v1239, 0.0
        %v1318 = vand.u32 %v1239, 2147483648
        %v1319 = vsel %vm1317, %v1318, %v1316
        %v1320 = vrsqrt.pop %v1240
        %v1321 = vmul.f32 %v1240, %v1320
        %vm1322 = vcmp.eq.f32.partialorder %v1240, inf
        %v1323 = vsel %vm1322, %v1240, %v1321
        %vm1324 = vcmp.eq.f32.partialorder %v1240, 0.0
        %v1325 = vand.u32 %v1240, 2147483648
        %v1326 = vsel %vm1324, %v1325, %v1323
        %v1327 = vrsqrt.pop %v1241
        %v1328 = vmul.f32 %v1241, %v1327
        %vm1329 = vcmp.eq.f32.partialorder %v1241, inf
        %v1330 = vsel %vm1329, %v1241, %v1328
        %vm1331 = vcmp.eq.f32.partialorder %v1241, 0.0
        %v1332 = vand.u32 %v1241, 2147483648
        %v1333 = vsel %vm1331, %v1332, %v1330
        %v1334 = vrsqrt.pop %v1242
        %v1335 = vmul.f32 %v1242, %v1334
        %vm1336 = vcmp.eq.f32.partialorder %v1242, inf
        %v1337 = vsel %vm1336, %v1242, %v1335
        %vm1338 = vcmp.eq.f32.partialorder %v1242, 0.0
        %v1339 = vand.u32 %v1242, 2147483648
        %v1340 = vsel %vm1338, %v1339, %v1337
        %v1341 = vrsqrt.pop %v1243
        %v1342 = vmul.f32 %v1243, %v1341
        %vm1343 = vcmp.eq.f32.partialorder %v1243, inf
        %v1344 = vsel %vm1343, %v1243, %v1342
        %vm1345 = vcmp.eq.f32.partialorder %v1243, 0.0
        %v1346 = vand.u32 %v1243, 2147483648
        %v1347 = vsel %vm1345, %v1346, %v1344
        %v1348 = vrsqrt.pop %v1244
        %v1349 = vmul.f32 %v1244, %v1348
        %vm1350 = vcmp.eq.f32.partialorder %v1244, inf
        %v1351 = vsel %vm1350, %v1244, %v1349
        %vm1352 = vcmp.eq.f32.partialorder %v1244, 0.0
        %v1353 = vand.u32 %v1244, 2147483648
        %v1354 = vsel %vm1352, %v1353, %v1351
        %v1355 = vrsqrt.pop %v1245
        %v1356 = vmul.f32 %v1245, %v1355
        %vm1357 = vcmp.eq.f32.partialorder %v1245, inf
        %v1358 = vsel %vm1357, %v1245, %v1356
        %vm1359 = vcmp.eq.f32.partialorder %v1245, 0.0
        %v1360 = vand.u32 %v1245, 2147483648
        %v1361 = vsel %vm1359, %v1360, %v1358
        %v1362 = vrsqrt.pop %v1246
        %v1363 = vmul.f32 %v1246, %v1362
        %vm1364 = vcmp.eq.f32.partialorder %v1246, inf
        %v1365 = vsel %vm1364, %v1246, %v1363
        %vm1366 = vcmp.eq.f32.partialorder %v1246, 0.0
        %v1367 = vand.u32 %v1246, 2147483648
        %v1368 = vsel %vm1366, %v1367, %v1365
        %v1369 = vrsqrt.pop %v1247
        %v1370 = vmul.f32 %v1247, %v1369
        %vm1371 = vcmp.eq.f32.partialorder %v1247, inf
        %v1372 = vsel %vm1371, %v1247, %v1370
        %vm1373 = vcmp.eq.f32.partialorder %v1247, 0.0
        %v1374 = vand.u32 %v1247, 2147483648
        %v1375 = vsel %vm1373, %v1374, %v1372
        %v1376 = vrsqrt.pop %v1248
        %v1377 = vmul.f32 %v1248, %v1376
        %vm1378 = vcmp.eq.f32.partialorder %v1248, inf
        %v1379 = vsel %vm1378, %v1248, %v1377
        %vm1380 = vcmp.eq.f32.partialorder %v1248, 0.0
        %v1381 = vand.u32 %v1248, 2147483648
        %v1382 = vsel %vm1380, %v1381, %v1379
        %v1383 = vrsqrt.pop %v1249
        %v1384 = vmul.f32 %v1249, %v1383
        %vm1385 = vcmp.eq.f32.partialorder %v1249, inf
        %v1386 = vsel %vm1385, %v1249, %v1384
        %vm1387 = vcmp.eq.f32.partialorder %v1249, 0.0
        %v1388 = vand.u32 %v1249, 2147483648
        %v1389 = vsel %vm1387, %v1388, %v1386
        %v1390 = vrsqrt.pop %v1250
        %v1391 = vmul.f32 %v1250, %v1390
        %vm1392 = vcmp.eq.f32.partialorder %v1250, inf
        %v1393 = vsel %vm1392, %v1250, %v1391
        %vm1394 = vcmp.eq.f32.partialorder %v1250, 0.0
        %v1395 = vand.u32 %v1250, 2147483648
        %v1396 = vsel %vm1394, %v1395, %v1393
        %v1397 = vrsqrt.pop %v1251
        %v1398 = vmul.f32 %v1251, %v1397
        %vm1399 = vcmp.eq.f32.partialorder %v1251, inf
        %v1400 = vsel %vm1399, %v1251, %v1398
        %vm1401 = vcmp.eq.f32.partialorder %v1251, 0.0
        %v1402 = vand.u32 %v1251, 2147483648
        %v1403 = vsel %vm1401, %v1402, %v1400
        %v1404 = vrsqrt.pop %v1252
        %v1405 = vmul.f32 %v1252, %v1404
        %vm1406 = vcmp.eq.f32.partialorder %v1252, inf
        %v1407 = vsel %vm1406, %v1252, %v1405
        %vm1408 = vcmp.eq.f32.partialorder %v1252, 0.0
        %v1409 = vand.u32 %v1252, 2147483648
        %v1410 = vsel %vm1408, %v1409, %v1407
        %v1411 = vrsqrt.pop %v1253
        %v1412 = vmul.f32 %v1253, %v1411
        %vm1413 = vcmp.eq.f32.partialorder %v1253, inf
        %v1414 = vsel %vm1413, %v1253, %v1412
        %vm1415 = vcmp.eq.f32.partialorder %v1253, 0.0
        %v1416 = vand.u32 %v1253, 2147483648
        %v1417 = vsel %vm1415, %v1416, %v1414
        %v1418 = vrsqrt.pop %v1254
        %v1419 = vmul.f32 %v1254, %v1418
        %vm1420 = vcmp.eq.f32.partialorder %v1254, inf
        %v1421 = vsel %vm1420, %v1254, %v1419
        %vm1422 = vcmp.eq.f32.partialorder %v1254, 0.0
        %v1423 = vand.u32 %v1254, 2147483648
        %v1424 = vsel %vm1422, %v1423, %v1421
        %v1425 = vrsqrt.pop %v1255
        %v1426 = vmul.f32 %v1255, %v1425
        %vm1427 = vcmp.eq.f32.partialorder %v1255, inf
        %v1428 = vsel %vm1427, %v1255, %v1426
        %vm1429 = vcmp.eq.f32.partialorder %v1255, 0.0
        %v1430 = vand.u32 %v1255, 2147483648
        %v1431 = vsel %vm1429, %v1430, %v1428
        %v1432 = vrsqrt.pop %v1256
        %v1433 = vmul.f32 %v1256, %v1432
        %vm1434 = vcmp.eq.f32.partialorder %v1256, inf
        %v1435 = vsel %vm1434, %v1256, %v1433
        %vm1436 = vcmp.eq.f32.partialorder %v1256, 0.0
        %v1437 = vand.u32 %v1256, 2147483648
        %v1438 = vsel %vm1436, %v1437, %v1435
        %v1439 = vrsqrt.pop %v1257
        %v1440 = vmul.f32 %v1257, %v1439
        %vm1441 = vcmp.eq.f32.partialorder %v1257, inf
        %v1442 = vsel %vm1441, %v1257, %v1440
        %vm1443 = vcmp.eq.f32.partialorder %v1257, 0.0
        %v1444 = vand.u32 %v1257, 2147483648
        %v1445 = vsel %vm1443, %v1444, %v1442
        %v1446 = vrsqrt.pop %v1258
        %v1447 = vmul.f32 %v1258, %v1446
        %vm1448 = vcmp.eq.f32.partialorder %v1258, inf
        %v1449 = vsel %vm1448, %v1258, %v1447
        %vm1450 = vcmp.eq.f32.partialorder %v1258, 0.0
        %v1451 = vand.u32 %v1258, 2147483648
        %v1452 = vsel %vm1450, %v1451, %v1449
        %v1453 = vrsqrt.pop %v1259
        %v1454 = vmul.f32 %v1259, %v1453
        %vm1455 = vcmp.eq.f32.partialorder %v1259, inf
        %v1456 = vsel %vm1455, %v1259, %v1454
        %vm1457 = vcmp.eq.f32.partialorder %v1259, 0.0
        %v1458 = vand.u32 %v1259, 2147483648
        %v1459 = vsel %vm1457, %v1458, %v1456
        %v1460 = vrsqrt.pop %v1260
        %v1461 = vmul.f32 %v1260, %v1460
        %vm1462 = vcmp.eq.f32.partialorder %v1260, inf
        %v1463 = vsel %vm1462, %v1260, %v1461
        %vm1464 = vcmp.eq.f32.partialorder %v1260, 0.0
        %v1465 = vand.u32 %v1260, 2147483648
        %v1466 = vsel %vm1464, %v1465, %v1463
        %v1467 = vrsqrt.pop %v1261
        %v1468 = vmul.f32 %v1261, %v1467
        %vm1469 = vcmp.eq.f32.partialorder %v1261, inf
        %v1470 = vsel %vm1469, %v1261, %v1468
        %vm1471 = vcmp.eq.f32.partialorder %v1261, 0.0
        %v1472 = vand.u32 %v1261, 2147483648
        %v1473 = vsel %vm1471, %v1472, %v1470
        %v1474 = vrsqrt.pop %v1262
        %v1475 = vmul.f32 %v1262, %v1474
        %vm1476 = vcmp.eq.f32.partialorder %v1262, inf
        %v1477 = vsel %vm1476, %v1262, %v1475
        %vm1478 = vcmp.eq.f32.partialorder %v1262, 0.0
        %v1479 = vand.u32 %v1262, 2147483648
        %v1480 = vsel %vm1478, %v1479, %v1477
        %v1481 = vrsqrt.pop %v1263
        %v1482 = vmul.f32 %v1263, %v1481
        %vm1483 = vcmp.eq.f32.partialorder %v1263, inf
        %v1484 = vsel %vm1483, %v1263, %v1482
        %vm1485 = vcmp.eq.f32.partialorder %v1263, 0.0
        %v1486 = vand.u32 %v1263, 2147483648
        %v1487 = vsel %vm1485, %v1486, %v1484
        %v1488 = vand.u32 2147483647, %v817
        %v1489 = vand.u32 2147483647, %v821
        %v1490 = vand.u32 2147483647, %v827
        %v1491 = vand.u32 2147483647, %v831
        %v1492 = vand.u32 2147483647, %v837
        %v1493 = vand.u32 2147483647, %v841
        %v1494 = vand.u32 2147483647, %v847
        %v1495 = vand.u32 2147483647, %v851
        %v1496 = vand.u32 2147483647, %v857
        %v1497 = vand.u32 2147483647, %v861
        %v1498 = vand.u32 2147483647, %v867
        %v1499 = vand.u32 2147483647, %v871
        %v1500 = vand.u32 2147483647, %v877
        %v1501 = vand.u32 2147483647, %v881
        %v1502 = vand.u32 2147483647, %v887
        %v1503 = vand.u32 2147483647, %v891
        %v1504 = vand.u32 2147483647, %v897
        %v1505 = vand.u32 2147483647, %v901
        %v1506 = vand.u32 2147483647, %v907
        %v1507 = vand.u32 2147483647, %v911
        %v1508 = vand.u32 2147483647, %v917
        %v1509 = vand.u32 2147483647, %v921
        %v1510 = vand.u32 2147483647, %v927
        %v1511 = vand.u32 2147483647, %v931
        %v1512 = vand.u32 2147483647, %v937
        %v1513 = vand.u32 2147483647, %v941
        %v1514 = vand.u32 2147483647, %v947
        %v1515 = vand.u32 2147483647, %v951
        %v1516 = vand.u32 2147483647, %v957
        %v1517 = vand.u32 2147483647, %v961
        %v1518 = vand.u32 2147483647, %v967
        %v1519 = vand.u32 2147483647, %v971
        %v1520 = vand.u32 2147483647, %v1010
        %v1521 = vand.u32 2147483647, %v1014
        %v1522 = vand.u32 2147483647, %v1020
        %v1523 = vand.u32 2147483647, %v1024
        %v1524 = vand.u32 2147483647, %v1030
        %v1525 = vand.u32 2147483647, %v1034
        %v1526 = vand.u32 2147483647, %v1040
        %v1527 = vand.u32 2147483647, %v1044
        %v1528 = vand.u32 2147483647, %v1050
        %v1529 = vand.u32 2147483647, %v1054
        %v1530 = vand.u32 2147483647, %v1060
        %v1531 = vand.u32 2147483647, %v1064
        %v1532 = vand.u32 2147483647, %v1070
        %v1533 = vand.u32 2147483647, %v1074
        %v1534 = vand.u32 2147483647, %v1080
        %v1535 = vand.u32 2147483647, %v1084
        %v1536 = vand.u32 2147483647, %v1090
        %v1537 = vand.u32 2147483647, %v1094
        %v1538 = vand.u32 2147483647, %v1100
        %v1539 = vand.u32 2147483647, %v1104
        %v1540 = vand.u32 2147483647, %v1110
        %v1541 = vand.u32 2147483647, %v1114
        %v1542 = vand.u32 2147483647, %v1120
        %v1543 = vand.u32 2147483647, %v1124
        %v1544 = vand.u32 2147483647, %v1130
        %v1545 = vand.u32 2147483647, %v1134
        %v1546 = vand.u32 2147483647, %v1140
        %v1547 = vand.u32 2147483647, %v1144
        %v1548 = vand.u32 2147483647, %v1150
        %v1549 = vand.u32 2147483647, %v1154
        %v1550 = vand.u32 2147483647, %v1160
        %v1551 = vand.u32 2147483647, %v1164
        %v1552 = vmax.f32 %v1488, %v1520
        %v1553 = vmax.f32 %v1489, %v1521
        %v1554 = vmax.f32 %v1490, %v1522
        %v1555 = vmax.f32 %v1491, %v1523
        %v1556 = vmax.f32 %v1492, %v1524
        %v1557 = vmax.f32 %v1493, %v1525
        %v1558 = vmax.f32 %v1494, %v1526
        %v1559 = vmax.f32 %v1495, %v1527
        %v1560 = vmax.f32 %v1496, %v1528
        %v1561 = vmax.f32 %v1497, %v1529
        %v1562 = vmax.f32 %v1498, %v1530
        %v1563 = vmax.f32 %v1499, %v1531
        %v1564 = vmax.f32 %v1500, %v1532
        %v1565 = vmax.f32 %v1501, %v1533
        %v1566 = vmax.f32 %v1502, %v1534
        %v1567 = vmax.f32 %v1503, %v1535
        %v1568 = vmax.f32 %v1504, %v1536
        %v1569 = vmax.f32 %v1505, %v1537
        %v1570 = vmax.f32 %v1506, %v1538
        %v1571 = vmax.f32 %v1507, %v1539
        %v1572 = vmax.f32 %v1508, %v1540
        %v1573 = vmax.f32 %v1509, %v1541
        %v1574 = vmax.f32 %v1510, %v1542
        %v1575 = vmax.f32 %v1511, %v1543
        %v1576 = vmax.f32 %v1512, %v1544
        %v1577 = vmax.f32 %v1513, %v1545
        %v1578 = vmax.f32 %v1514, %v1546
        %v1579 = vmax.f32 %v1515, %v1547
        %v1580 = vmax.f32 %v1516, %v1548
        %v1581 = vmax.f32 %v1517, %v1549
        %v1582 = vmax.f32 %v1518, %v1550
        %v1583 = vmax.f32 %v1519, %v1551
        %v1584 = vmin.f32 %v1488, %v1520
        %v1585 = vmin.f32 %v1489, %v1521
        %v1586 = vmin.f32 %v1490, %v1522
        %v1587 = vmin.f32 %v1491, %v1523
        %v1588 = vmin.f32 %v1492, %v1524
        %v1589 = vmin.f32 %v1493, %v1525
        %v1590 = vmin.f32 %v1494, %v1526
        %v1591 = vmin.f32 %v1495, %v1527
        %v1592 = vmin.f32 %v1496, %v1528
        %v1593 = vmin.f32 %v1497, %v1529
        %v1594 = vmin.f32 %v1498, %v1530
        %v1595 = vmin.f32 %v1499, %v1531
        %v1596 = vmin.f32 %v1500, %v1532
        %v1597 = vmin.f32 %v1501, %v1533
        %v1598 = vmin.f32 %v1502, %v1534
        %v1599 = vmin.f32 %v1503, %v1535
        %v1600 = vmin.f32 %v1504, %v1536
        %v1601 = vmin.f32 %v1505, %v1537
        %v1602 = vmin.f32 %v1506, %v1538
        %v1603 = vmin.f32 %v1507, %v1539
        %v1604 = vmin.f32 %v1508, %v1540
        %v1605 = vmin.f32 %v1509, %v1541
        %v1606 = vmin.f32 %v1510, %v1542
        %v1607 = vmin.f32 %v1511, %v1543
        %v1608 = vmin.f32 %v1512, %v1544
        %v1609 = vmin.f32 %v1513, %v1545
        %v1610 = vmin.f32 %v1514, %v1546
        %v1611 = vmin.f32 %v1515, %v1547
        %v1612 = vmin.f32 %v1516, %v1548
        %v1613 = vmin.f32 %v1517, %v1549
        %v1614 = vmin.f32 %v1518, %v1550
        %v1615 = vmin.f32 %v1519, %v1551
        %vm1616 = vcmp.eq.f32.partialorder %v1552, 0.0
        %vm1617 = vcmp.eq.f32.partialorder %v1553, 0.0
        %vm1618 = vcmp.eq.f32.partialorder %v1554, 0.0
        %vm1619 = vcmp.eq.f32.partialorder %v1555, 0.0
        %vm1620 = vcmp.eq.f32.partialorder %v1556, 0.0
        %vm1621 = vcmp.eq.f32.partialorder %v1557, 0.0
        %vm1622 = vcmp.eq.f32.partialorder %v1558, 0.0
        %vm1623 = vcmp.eq.f32.partialorder %v1559, 0.0
        %vm1624 = vcmp.eq.f32.partialorder %v1560, 0.0
        %vm1625 = vcmp.eq.f32.partialorder %v1561, 0.0
        %vm1626 = vcmp.eq.f32.partialorder %v1562, 0.0
        %vm1627 = vcmp.eq.f32.partialorder %v1563, 0.0
        %vm1628 = vcmp.eq.f32.partialorder %v1564, 0.0
        %vm1629 = vcmp.eq.f32.partialorder %v1565, 0.0
        %vm1630 = vcmp.eq.f32.partialorder %v1566, 0.0
        %vm1631 = vcmp.eq.f32.partialorder %v1567, 0.0
        %vm1632 = vcmp.eq.f32.partialorder %v1568, 0.0
        %vm1633 = vcmp.eq.f32.partialorder %v1569, 0.0
        %vm1634 = vcmp.eq.f32.partialorder %v1570, 0.0
        %vm1635 = vcmp.eq.f32.partialorder %v1571, 0.0
        %vm1636 = vcmp.eq.f32.partialorder %v1572, 0.0
        %vm1637 = vcmp.eq.f32.partialorder %v1573, 0.0
        %vm1638 = vcmp.eq.f32.partialorder %v1574, 0.0
        %vm1639 = vcmp.eq.f32.partialorder %v1575, 0.0
        %vm1640 = vcmp.eq.f32.partialorder %v1576, 0.0
        %vm1641 = vcmp.eq.f32.partialorder %v1577, 0.0
        %vm1642 = vcmp.eq.f32.partialorder %v1578, 0.0
        %vm1643 = vcmp.eq.f32.partialorder %v1579, 0.0
        %vm1644 = vcmp.eq.f32.partialorder %v1580, 0.0
        %vm1645 = vcmp.eq.f32.partialorder %v1581, 0.0
        %vm1646 = vcmp.eq.f32.partialorder %v1582, 0.0
        %vm1647 = vcmp.eq.f32.partialorder %v1583, 0.0
        %v1648 = vsel %vm1616, 1.0, %v1552
        %v1649 = vsel %vm1617, 1.0, %v1553
        %v1650 = vsel %vm1618, 1.0, %v1554
        %v1651 = vsel %vm1619, 1.0, %v1555
        %v1652 = vsel %vm1620, 1.0, %v1556
        %v1653 = vsel %vm1621, 1.0, %v1557
        %v1654 = vsel %vm1622, 1.0, %v1558
        %v1655 = vsel %vm1623, 1.0, %v1559
        %v1656 = vsel %vm1624, 1.0, %v1560
        %v1657 = vsel %vm1625, 1.0, %v1561
        %v1658 = vsel %vm1626, 1.0, %v1562
        %v1659 = vsel %vm1627, 1.0, %v1563
        %v1660 = vsel %vm1628, 1.0, %v1564
        %v1661 = vsel %vm1629, 1.0, %v1565
        %v1662 = vsel %vm1630, 1.0, %v1566
        %v1663 = vsel %vm1631, 1.0, %v1567
        %v1664 = vsel %vm1632, 1.0, %v1568
        %v1665 = vsel %vm1633, 1.0, %v1569
        %v1666 = vsel %vm1634, 1.0, %v1570
        %v1667 = vsel %vm1635, 1.0, %v1571
        %v1668 = vsel %vm1636, 1.0, %v1572
        %v1669 = vsel %vm1637, 1.0, %v1573
        %v1670 = vsel %vm1638, 1.0, %v1574
        %v1671 = vsel %vm1639, 1.0, %v1575
        %v1672 = vsel %vm1640, 1.0, %v1576
        %v1673 = vsel %vm1641, 1.0, %v1577
        %v1674 = vsel %vm1642, 1.0, %v1578
        %v1675 = vsel %vm1643, 1.0, %v1579
        %v1676 = vsel %vm1644, 1.0, %v1580
        %v1677 = vsel %vm1645, 1.0, %v1581
        %v1678 = vsel %vm1646, 1.0, %v1582
        %v1679 = vsel %vm1647, 1.0, %v1583
        %v1680 = vrcp.pop %v1648
        %v1681 = vrcp.pop %v1649
        %v1682 = vrcp.pop %v1650
        %v1683 = vrcp.pop %v1651
        %v1684 = vrcp.pop %v1652
        %v1685 = vrcp.pop %v1653
        %v1686 = vrcp.pop %v1654
        %v1687 = vrcp.pop %v1655
        %v1688 = vrcp.pop %v1656
        %v1689 = vrcp.pop %v1657
        %v1690 = vrcp.pop %v1658
        %v1691 = vrcp.pop %v1659
        %v1692 = vrcp.pop %v1660
        %v1693 = vrcp.pop %v1661
        %v1694 = vrcp.pop %v1662
        %v1695 = vrcp.pop %v1663
        %v1696 = vrcp.pop %v1664
        %v1697 = vrcp.pop %v1665
        %v1698 = vrcp.pop %v1666
        %v1699 = vrcp.pop %v1667
        %v1700 = vrcp.pop %v1668
        %v1701 = vrcp.pop %v1669
        %v1702 = vrcp.pop %v1670
        %v1703 = vrcp.pop %v1671
        %v1704 = vrcp.pop %v1672
        %v1705 = vrcp.pop %v1673
        %v1706 = vrcp.pop %v1674
        %v1707 = vrcp.pop %v1675
        %v1708 = vrcp.pop %v1676
        %v1709 = vrcp.pop %v1677
        %v1710 = vrcp.pop %v1678
        %v1711 = vrcp.pop %v1679
        %v1712 = vmul.f32 %v1584, %v1680
        %v1713 = vmul.f32 %v1585, %v1681
        %v1714 = vmul.f32 %v1586, %v1682
        %v1715 = vmul.f32 %v1587, %v1683
        %v1716 = vmul.f32 %v1588, %v1684
        %v1717 = vmul.f32 %v1589, %v1685
        %v1718 = vmul.f32 %v1590, %v1686
        %v1719 = vmul.f32 %v1591, %v1687
        %v1720 = vmul.f32 %v1592, %v1688
        %v1721 = vmul.f32 %v1593, %v1689
        %v1722 = vmul.f32 %v1594, %v1690
        %v1723 = vmul.f32 %v1595, %v1691
        %v1724 = vmul.f32 %v1596, %v1692
        %v1725 = vmul.f32 %v1597, %v1693
        %v1726 = vmul.f32 %v1598, %v1694
        %v1727 = vmul.f32 %v1599, %v1695
        %v1728 = vmul.f32 %v1600, %v1696
        %v1729 = vmul.f32 %v1601, %v1697
        %v1730 = vmul.f32 %v1602, %v1698
        %v1731 = vmul.f32 %v1603, %v1699
        %v1732 = vmul.f32 %v1604, %v1700
        %v1733 = vmul.f32 %v1605, %v1701
        %v1734 = vmul.f32 %v1606, %v1702
        %v1735 = vmul.f32 %v1607, %v1703
        %v1736 = vmul.f32 %v1608, %v1704
        %v1737 = vmul.f32 %v1609, %v1705
        %v1738 = vmul.f32 %v1610, %v1706
        %v1739 = vmul.f32 %v1611, %v1707
        %v1740 = vmul.f32 %v1612, %v1708
        %v1741 = vmul.f32 %v1613, %v1709
        %v1742 = vmul.f32 %v1614, %v1710
        %v1743 = vmul.f32 %v1615, %v1711
        %v1744 = vmul.f32 %v1712, %v1712
        %v1745 = vmul.f32 %v1713, %v1713
        %v1746 = vmul.f32 %v1714, %v1714
        %v1747 = vmul.f32 %v1715, %v1715
        %v1748 = vmul.f32 %v1716, %v1716
        %v1749 = vmul.f32 %v1717, %v1717
        %v1750 = vmul.f32 %v1718, %v1718
        %v1751 = vmul.f32 %v1719, %v1719
        %v1752 = vmul.f32 %v1720, %v1720
        %v1753 = vmul.f32 %v1721, %v1721
        %v1754 = vmul.f32 %v1722, %v1722
        %v1755 = vmul.f32 %v1723, %v1723
        %v1756 = vmul.f32 %v1724, %v1724
        %v1757 = vmul.f32 %v1725, %v1725
        %v1758 = vmul.f32 %v1726, %v1726
        %v1759 = vmul.f32 %v1727, %v1727
        %v1760 = vmul.f32 %v1728, %v1728
        %v1761 = vmul.f32 %v1729, %v1729
        %v1762 = vmul.f32 %v1730, %v1730
        %v1763 = vmul.f32 %v1731, %v1731
        %v1764 = vmul.f32 %v1732, %v1732
        %v1765 = vmul.f32 %v1733, %v1733
        %v1766 = vmul.f32 %v1734, %v1734
        %v1767 = vmul.f32 %v1735, %v1735
        %v1768 = vmul.f32 %v1736, %v1736
        %v1769 = vmul.f32 %v1737, %v1737
        %v1770 = vmul.f32 %v1738, %v1738
        %v1771 = vmul.f32 %v1739, %v1739
        %v1772 = vmul.f32 %v1740, %v1740
        %v1773 = vmul.f32 %v1741, %v1741
        %v1774 = vmul.f32 %v1742, %v1742
        %v1775 = vmul.f32 %v1743, %v1743
        %v1776 = vmul.f32 %v1744, 0.0208351
        %v1777 = vmul.f32 %v1745, 0.0208351
        %v1778 = vmul.f32 %v1746, 0.0208351
        %v1779 = vmul.f32 %v1747, 0.0208351
        %v1780 = vmul.f32 %v1748, 0.0208351
        %v1781 = vmul.f32 %v1749, 0.0208351
        %v1782 = vmul.f32 %v1750, 0.0208351
        %v1783 = vmul.f32 %v1751, 0.0208351
        %v1784 = vmul.f32 %v1752, 0.0208351
        %v1785 = vmul.f32 %v1753, 0.0208351
        %v1786 = vmul.f32 %v1754, 0.0208351
        %v1787 = vmul.f32 %v1755, 0.0208351
        %v1788 = vmul.f32 %v1756, 0.0208351
        %v1789 = vmul.f32 %v1757, 0.0208351
        %v1790 = vmul.f32 %v1758, 0.0208351
        %v1791 = vmul.f32 %v1759, 0.0208351
        %v1792 = vmul.f32 %v1760, 0.0208351
        %v1793 = vmul.f32 %v1761, 0.0208351
        %v1794 = vmul.f32 %v1762, 0.0208351
        %v1795 = vmul.f32 %v1763, 0.0208351
        %v1796 = vmul.f32 %v1764, 0.0208351
        %v1797 = vmul.f32 %v1765, 0.0208351
        %v1798 = vmul.f32 %v1766, 0.0208351
        %v1799 = vmul.f32 %v1767, 0.0208351
        %v1800 = vmul.f32 %v1768, 0.0208351
        %v1801 = vmul.f32 %v1769, 0.0208351
        %v1802 = vmul.f32 %v1770, 0.0208351
        %v1803 = vmul.f32 %v1771, 0.0208351
        %v1804 = vmul.f32 %v1772, 0.0208351
        %v1805 = vmul.f32 %v1773, 0.0208351
        %v1806 = vmul.f32 %v1774, 0.0208351
        %v1807 = vmul.f32 %v1775, 0.0208351
        %v1808 = vsub.f32 %v1776, 0.085133
        %v1809 = vsub.f32 %v1777, 0.085133
        %v1810 = vsub.f32 %v1778, 0.085133
        %v1811 = vsub.f32 %v1779, 0.085133
        %v1812 = vsub.f32 %v1780, 0.085133
        %v1813 = vsub.f32 %v1781, 0.085133
        %v1814 = vsub.f32 %v1782, 0.085133
        %v1815 = vsub.f32 %v1783, 0.085133
        %v1816 = vsub.f32 %v1784, 0.085133
        %v1817 = vsub.f32 %v1785, 0.085133
        %v1818 = vsub.f32 %v1786, 0.085133
        %v1819 = vsub.f32 %v1787, 0.085133
        %v1820 = vsub.f32 %v1788, 0.085133
        %v1821 = vsub.f32 %v1789, 0.085133
        %v1822 = vsub.f32 %v1790, 0.085133
        %v1823 = vsub.f32 %v1791, 0.085133
        %v1824 = vsub.f32 %v1792, 0.085133
        %v1825 = vsub.f32 %v1793, 0.085133
        %v1826 = vsub.f32 %v1794, 0.085133
        %v1827 = vsub.f32 %v1795, 0.085133
        %v1828 = vsub.f32 %v1796, 0.085133
        %v1829 = vsub.f32 %v1797, 0.085133
        %v1830 = vsub.f32 %v1798, 0.085133
        %v1831 = vsub.f32 %v1799, 0.085133
        %v1832 = vsub.f32 %v1800, 0.085133
        %v1833 = vsub.f32 %v1801, 0.085133
        %v1834 = vsub.f32 %v1802, 0.085133
        %v1835 = vsub.f32 %v1803, 0.085133
        %v1836 = vsub.f32 %v1804, 0.085133
        %v1837 = vsub.f32 %v1805, 0.085133
        %v1838 = vsub.f32 %v1806, 0.085133
        %v1839 = vsub.f32 %v1807, 0.085133
        %v1840 = vmul.f32 %v1808, %v1744
        %v1841 = vmul.f32 %v1809, %v1745
        %v1842 = vmul.f32 %v1810, %v1746
        %v1843 = vmul.f32 %v1811, %v1747
        %v1844 = vmul.f32 %v1812, %v1748
        %v1845 = vmul.f32 %v1813, %v1749
        %v1846 = vmul.f32 %v1814, %v1750
        %v1847 = vmul.f32 %v1815, %v1751
        %v1848 = vmul.f32 %v1816, %v1752
        %v1849 = vmul.f32 %v1817, %v1753
        %v1850 = vmul.f32 %v1818, %v1754
        %v1851 = vmul.f32 %v1819, %v1755
        %v1852 = vmul.f32 %v1820, %v1756
        %v1853 = vmul.f32 %v1821, %v1757
        %v1854 = vmul.f32 %v1822, %v1758
        %v1855 = vmul.f32 %v1823, %v1759
        %v1856 = vmul.f32 %v1824, %v1760
        %v1857 = vmul.f32 %v1825, %v1761
        %v1858 = vmul.f32 %v1826, %v1762
        %v1859 = vmul.f32 %v1827, %v1763
        %v1860 = vmul.f32 %v1828, %v1764
        %v1861 = vmul.f32 %v1829, %v1765
        %v1862 = vmul.f32 %v1830, %v1766
        %v1863 = vmul.f32 %v1831, %v1767
        %v1864 = vmul.f32 %v1832, %v1768
        %v1865 = vmul.f32 %v1833, %v1769
        %v1866 = vmul.f32 %v1834, %v1770
        %v1867 = vmul.f32 %v1835, %v1771
        %v1868 = vmul.f32 %v1836, %v1772
        %v1869 = vmul.f32 %v1837, %v1773
        %v1870 = vmul.f32 %v1838, %v1774
        %v1871 = vmul.f32 %v1839, %v1775
        %v1872 = vadd.f32 %v1840, 0.180141
        %v1873 = vadd.f32 %v1841, 0.180141
        %v1874 = vadd.f32 %v1842, 0.180141
        %v1875 = vadd.f32 %v1843, 0.180141
        %v1876 = vadd.f32 %v1844, 0.180141
        %v1877 = vadd.f32 %v1845, 0.180141
        %v1878 = vadd.f32 %v1846, 0.180141
        %v1879 = vadd.f32 %v1847, 0.180141
        %v1880 = vadd.f32 %v1848, 0.180141
        %v1881 = vadd.f32 %v1849, 0.180141
        %v1882 = vadd.f32 %v1850, 0.180141
        %v1883 = vadd.f32 %v1851, 0.180141
        %v1884 = vadd.f32 %v1852, 0.180141
        %v1885 = vadd.f32 %v1853, 0.180141
        %v1886 = vadd.f32 %v1854, 0.180141
        %v1887 = vadd.f32 %v1855, 0.180141
        %v1888 = vadd.f32 %v1856, 0.180141
        %v1889 = vadd.f32 %v1857, 0.180141
        %v1890 = vadd.f32 %v1858, 0.180141
        %v1891 = vadd.f32 %v1859, 0.180141
        %v1892 = vadd.f32 %v1860, 0.180141
        %v1893 = vadd.f32 %v1861, 0.180141
        %v1894 = vadd.f32 %v1862, 0.180141
        %v1895 = vadd.f32 %v1863, 0.180141
        %v1896 = vadd.f32 %v1864, 0.180141
        %v1897 = vadd.f32 %v1865, 0.180141
        %v1898 = vadd.f32 %v1866, 0.180141
        %v1899 = vadd.f32 %v1867, 0.180141
        %v1900 = vadd.f32 %v1868, 0.180141
        %v1901 = vadd.f32 %v1869, 0.180141
        %v1902 = vadd.f32 %v1870, 0.180141
        %v1903 = vadd.f32 %v1871, 0.180141
        %v1904 = vmul.f32 %v1872, %v1744
        %v1905 = vmul.f32 %v1873, %v1745
        %v1906 = vmul.f32 %v1874, %v1746
        %v1907 = vmul.f32 %v1875, %v1747
        %v1908 = vmul.f32 %v1876, %v1748
        %v1909 = vmul.f32 %v1877, %v1749
        %v1910 = vmul.f32 %v1878, %v1750
        %v1911 = vmul.f32 %v1879, %v1751
        %v1912 = vmul.f32 %v1880, %v1752
        %v1913 = vmul.f32 %v1881, %v1753
        %v1914 = vmul.f32 %v1882, %v1754
        %v1915 = vmul.f32 %v1883, %v1755
        %v1916 = vmul.f32 %v1884, %v1756
        %v1917 = vmul.f32 %v1885, %v1757
        %v1918 = vmul.f32 %v1886, %v1758
        %v1919 = vmul.f32 %v1887, %v1759
        %v1920 = vmul.f32 %v1888, %v1760
        %v1921 = vmul.f32 %v1889, %v1761
        %v1922 = vmul.f32 %v1890, %v1762
        %v1923 = vmul.f32 %v1891, %v1763
        %v1924 = vmul.f32 %v1892, %v1764
        %v1925 = vmul.f32 %v1893, %v1765
        %v1926 = vmul.f32 %v1894, %v1766
        %v1927 = vmul.f32 %v1895, %v1767
        %v1928 = vmul.f32 %v1896, %v1768
        %v1929 = vmul.f32 %v1897, %v1769
        %v1930 = vmul.f32 %v1898, %v1770
        %v1931 = vmul.f32 %v1899, %v1771
        %v1932 = vmul.f32 %v1900, %v1772
        %v1933 = vmul.f32 %v1901, %v1773
        %v1934 = vmul.f32 %v1902, %v1774
        %v1935 = vmul.f32 %v1903, %v1775
        %v1936 = vsub.f32 %v1904, 0.3302995
        %v1937 = vsub.f32 %v1905, 0.3302995
        %v1938 = vsub.f32 %v1906, 0.3302995
        %v1939 = vsub.f32 %v1907, 0.3302995
        %v1940 = vsub.f32 %v1908, 0.3302995
        %v1941 = vsub.f32 %v1909, 0.3302995
        %v1942 = vsub.f32 %v1910, 0.3302995
        %v1943 = vsub.f32 %v1911, 0.3302995
        %v1944 = vsub.f32 %v1912, 0.3302995
        %v1945 = vsub.f32 %v1913, 0.3302995
        %v1946 = vsub.f32 %v1914, 0.3302995
        %v1947 = vsub.f32 %v1915, 0.3302995
        %v1948 = vsub.f32 %v1916, 0.3302995
        %v1949 = vsub.f32 %v1917, 0.3302995
        %v1950 = vsub.f32 %v1918, 0.3302995
        %v1951 = vsub.f32 %v1919, 0.3302995
        %v1952 = vsub.f32 %v1920, 0.3302995
        %v1953 = vsub.f32 %v1921, 0.3302995
        %v1954 = vsub.f32 %v1922, 0.3302995
        %v1955 = vsub.f32 %v1923, 0.3302995
        %v1956 = vsub.f32 %v1924, 0.3302995
        %v1957 = vsub.f32 %v1925, 0.3302995
        %v1958 = vsub.f32 %v1926, 0.3302995
        %v1959 = vsub.f32 %v1927, 0.3302995
        %v1960 = vsub.f32 %v1928, 0.3302995
        %v1961 = vsub.f32 %v1929, 0.3302995
        %v1962 = vsub.f32 %v1930, 0.3302995
        %v1963 = vsub.f32 %v1931, 0.3302995
        %v1964 = vsub.f32 %v1932, 0.3302995
        %v1965 = vsub.f32 %v1933, 0.3302995
        %v1966 = vsub.f32 %v1934, 0.3302995
        %v1967 = vsub.f32 %v1935, 0.3302995
        %v1968 = vmul.f32 %v1936, %v1744
        %v1969 = vmul.f32 %v1937, %v1745
        %v1970 = vmul.f32 %v1938, %v1746
        %v1971 = vmul.f32 %v1939, %v1747
        %v1972 = vmul.f32 %v1940, %v1748
        %v1973 = vmul.f32 %v1941, %v1749
        %v1974 = vmul.f32 %v1942, %v1750
        %v1975 = vmul.f32 %v1943, %v1751
        %v1976 = vmul.f32 %v1944, %v1752
        %v1977 = vmul.f32 %v1945, %v1753
        %v1978 = vmul.f32 %v1946, %v1754
        %v1979 = vmul.f32 %v1947, %v1755
        %v1980 = vmul.f32 %v1948, %v1756
        %v1981 = vmul.f32 %v1949, %v1757
        %v1982 = vmul.f32 %v1950, %v1758
        %v1983 = vmul.f32 %v1951, %v1759
        %v1984 = vmul.f32 %v1952, %v1760
        %v1985 = vmul.f32 %v1953, %v1761
        %v1986 = vmul.f32 %v1954, %v1762
        %v1987 = vmul.f32 %v1955, %v1763
        %v1988 = vmul.f32 %v1956, %v1764
        %v1989 = vmul.f32 %v1957, %v1765
        %v1990 = vmul.f32 %v1958, %v1766
        %v1991 = vmul.f32 %v1959, %v1767
        %v1992 = vmul.f32 %v1960, %v1768
        %v1993 = vmul.f32 %v1961, %v1769
        %v1994 = vmul.f32 %v1962, %v1770
        %v1995 = vmul.f32 %v1963, %v1771
        %v1996 = vmul.f32 %v1964, %v1772
        %v1997 = vmul.f32 %v1965, %v1773
        %v1998 = vmul.f32 %v1966, %v1774
        %v1999 = vmul.f32 %v1967, %v1775
        %v2000 = vadd.f32 %v1968, 0.999866
        %v2001 = vadd.f32 %v1969, 0.999866
        %v2002 = vadd.f32 %v1970, 0.999866
        %v2003 = vadd.f32 %v1971, 0.999866
        %v2004 = vadd.f32 %v1972, 0.999866
        %v2005 = vadd.f32 %v1973, 0.999866
        %v2006 = vadd.f32 %v1974, 0.999866
        %v2007 = vadd.f32 %v1975, 0.999866
        %v2008 = vadd.f32 %v1976, 0.999866
        %v2009 = vadd.f32 %v1977, 0.999866
        %v2010 = vadd.f32 %v1978, 0.999866
        %v2011 = vadd.f32 %v1979, 0.999866
        %v2012 = vadd.f32 %v1980, 0.999866
        %v2013 = vadd.f32 %v1981, 0.999866
        %v2014 = vadd.f32 %v1982, 0.999866
        %v2015 = vadd.f32 %v1983, 0.999866
        %v2016 = vadd.f32 %v1984, 0.999866
        %v2017 = vadd.f32 %v1985, 0.999866
        %v2018 = vadd.f32 %v1986, 0.999866
        %v2019 = vadd.f32 %v1987, 0.999866
        %v2020 = vadd.f32 %v1988, 0.999866
        %v2021 = vadd.f32 %v1989, 0.999866
        %v2022 = vadd.f32 %v1990, 0.999866
        %v2023 = vadd.f32 %v1991, 0.999866
        %v2024 = vadd.f32 %v1992, 0.999866
        %v2025 = vadd.f32 %v1993, 0.999866
        %v2026 = vadd.f32 %v1994, 0.999866
        %v2027 = vadd.f32 %v1995, 0.999866
        %v2028 = vadd.f32 %v1996, 0.999866
        %v2029 = vadd.f32 %v1997, 0.999866
        %v2030 = vadd.f32 %v1998, 0.999866
        %v2031 = vadd.f32 %v1999, 0.999866
        %v2032 = vmul.f32 %v2000, %v1712
        %v2033 = vmul.f32 %v2001, %v1713
        %v2034 = vmul.f32 %v2002, %v1714
        %v2035 = vmul.f32 %v2003, %v1715
        %v2036 = vmul.f32 %v2004, %v1716
        %v2037 = vmul.f32 %v2005, %v1717
        %v2038 = vmul.f32 %v2006, %v1718
        %v2039 = vmul.f32 %v2007, %v1719
        %v2040 = vmul.f32 %v2008, %v1720
        %v2041 = vmul.f32 %v2009, %v1721
        %v2042 = vmul.f32 %v2010, %v1722
        %v2043 = vmul.f32 %v2011, %v1723
        %v2044 = vmul.f32 %v2012, %v1724
        %v2045 = vmul.f32 %v2013, %v1725
        %v2046 = vmul.f32 %v2014, %v1726
        %v2047 = vmul.f32 %v2015, %v1727
        %v2048 = vmul.f32 %v2016, %v1728
        %v2049 = vmul.f32 %v2017, %v1729
        %v2050 = vmul.f32 %v2018, %v1730
        %v2051 = vmul.f32 %v2019, %v1731
        %v2052 = vmul.f32 %v2020, %v1732
        %v2053 = vmul.f32 %v2021, %v1733
        %v2054 = vmul.f32 %v2022, %v1734
        %v2055 = vmul.f32 %v2023, %v1735
        %v2056 = vmul.f32 %v2024, %v1736
        %v2057 = vmul.f32 %v2025, %v1737
        %v2058 = vmul.f32 %v2026, %v1738
        %v2059 = vmul.f32 %v2027, %v1739
        %v2060 = vmul.f32 %v2028, %v1740
        %v2061 = vmul.f32 %v2029, %v1741
        %v2062 = vmul.f32 %v2030, %v1742
        %v2063 = vmul.f32 %v2031, %v1743
        %vm2064 = vcmp.gt.f32.partialorder %v1520, %v1488
        %vm2065 = vcmp.gt.f32.partialorder %v1521, %v1489
        %vm2066 = vcmp.gt.f32.partialorder %v1522, %v1490
        %vm2067 = vcmp.gt.f32.partialorder %v1523, %v1491
        %vm2068 = vcmp.gt.f32.partialorder %v1524, %v1492
        %vm2069 = vcmp.gt.f32.partialorder %v1525, %v1493
        %vm2070 = vcmp.gt.f32.partialorder %v1526, %v1494
        %vm2071 = vcmp.gt.f32.partialorder %v1527, %v1495
        %vm2072 = vcmp.gt.f32.partialorder %v1528, %v1496
        %vm2073 = vcmp.gt.f32.partialorder %v1529, %v1497
        %vm2074 = vcmp.gt.f32.partialorder %v1530, %v1498
        %vm2075 = vcmp.gt.f32.partialorder %v1531, %v1499
        %vm2076 = vcmp.gt.f32.partialorder %v1532, %v1500
        %vm2077 = vcmp.gt.f32.partialorder %v1533, %v1501
        %vm2078 = vcmp.gt.f32.partialorder %v1534, %v1502
        %vm2079 = vcmp.gt.f32.partialorder %v1535, %v1503
        %vm2080 = vcmp.gt.f32.partialorder %v1536, %v1504
        %vm2081 = vcmp.gt.f32.partialorder %v1537, %v1505
        %vm2082 = vcmp.gt.f32.partialorder %v1538, %v1506
        %vm2083 = vcmp.gt.f32.partialorder %v1539, %v1507
        %vm2084 = vcmp.gt.f32.partialorder %v1540, %v1508
        %vm2085 = vcmp.gt.f32.partialorder %v1541, %v1509
        %vm2086 = vcmp.gt.f32.partialorder %v1542, %v1510
        %vm2087 = vcmp.gt.f32.partialorder %v1543, %v1511
        %vm2088 = vcmp.gt.f32.partialorder %v1544, %v1512
        %vm2089 = vcmp.gt.f32.partialorder %v1545, %v1513
        %vm2090 = vcmp.gt.f32.partialorder %v1546, %v1514
        %vm2091 = vcmp.gt.f32.partialorder %v1547, %v1515
        %vm2092 = vcmp.gt.f32.partialorder %v1548, %v1516
        %vm2093 = vcmp.gt.f32.partialorder %v1549, %v1517
        %vm2094 = vcmp.gt.f32.partialorder %v1550, %v1518
        %vm2095 = vcmp.gt.f32.partialorder %v1551, %v1519
        %v2096 = vsub.f32 1.5707964, %v2032
        %v2097 = vsub.f32 1.5707964, %v2033
        %v2098 = vsub.f32 1.5707964, %v2034
        %v2099 = vsub.f32 1.5707964, %v2035
        %v2100 = vsub.f32 1.5707964, %v2036
        %v2101 = vsub.f32 1.5707964, %v2037
        %v2102 = vsub.f32 1.5707964, %v2038
        %v2103 = vsub.f32 1.5707964, %v2039
        %v2104 = vsub.f32 1.5707964, %v2040
        %v2105 = vsub.f32 1.5707964, %v2041
        %v2106 = vsub.f32 1.5707964, %v2042
        %v2107 = vsub.f32 1.5707964, %v2043
        %v2108 = vsub.f32 1.5707964, %v2044
        %v2109 = vsub.f32 1.5707964, %v2045
        %v2110 = vsub.f32 1.5707964, %v2046
        %v2111 = vsub.f32 1.5707964, %v2047
        %v2112 = vsub.f32 1.5707964, %v2048
        %v2113 = vsub.f32 1.5707964, %v2049
        %v2114 = vsub.f32 1.5707964, %v2050
        %v2115 = vsub.f32 1.5707964, %v2051
        %v2116 = vsub.f32 1.5707964, %v2052
        %v2117 = vsub.f32 1.5707964, %v2053
        %v2118 = vsub.f32 1.5707964, %v2054
        %v2119 = vsub.f32 1.5707964, %v2055
        %v2120 = vsub.f32 1.5707964, %v2056
        %v2121 = vsub.f32 1.5707964, %v2057
        %v2122 = vsub.f32 1.5707964, %v2058
        %v2123 = vsub.f32 1.5707964, %v2059
        %v2124 = vsub.f32 1.5707964, %v2060
        %v2125 = vsub.f32 1.5707964, %v2061
        %v2126 = vsub.f32 1.5707964, %v2062
        %v2127 = vsub.f32 1.5707964, %v2063
        %v2128 = vsel %vm2064, %v2096, %v2032
        %v2129 = vsel %vm2065, %v2097, %v2033
        %v2130 = vsel %vm2066, %v2098, %v2034
        %v2131 = vsel %vm2067, %v2099, %v2035
        %v2132 = vsel %vm2068, %v2100, %v2036
        %v2133 = vsel %vm2069, %v2101, %v2037
        %v2134 = vsel %vm2070, %v2102, %v2038
        %v2135 = vsel %vm2071, %v2103, %v2039
        %v2136 = vsel %vm2072, %v2104, %v2040
        %v2137 = vsel %vm2073, %v2105, %v2041
        %v2138 = vsel %vm2074, %v2106, %v2042
        %v2139 = vsel %vm2075, %v2107, %v2043
        %v2140 = vsel %vm2076, %v2108, %v2044
        %v2141 = vsel %vm2077, %v2109, %v2045
        %v2142 = vsel %vm2078, %v2110, %v2046
        %v2143 = vsel %vm2079, %v2111, %v2047
        %v2144 = vsel %vm2080, %v2112, %v2048
        %v2145 = vsel %vm2081, %v2113, %v2049
        %v2146 = vsel %vm2082, %v2114, %v2050
        %v2147 = vsel %vm2083, %v2115, %v2051
        %v2148 = vsel %vm2084, %v2116, %v2052
        %v2149 = vsel %vm2085, %v2117, %v2053
        %v2150 = vsel %vm2086, %v2118, %v2054
        %v2151 = vsel %vm2087, %v2119, %v2055
        %v2152 = vsel %vm2088, %v2120, %v2056
        %v2153 = vsel %vm2089, %v2121, %v2057
        %v2154 = vsel %vm2090, %v2122, %v2058
        %v2155 = vsel %vm2091, %v2123, %v2059
        %v2156 = vsel %vm2092, %v2124, %v2060
        %v2157 = vsel %vm2093, %v2125, %v2061
        %v2158 = vsel %vm2094, %v2126, %v2062
        %v2159 = vsel %vm2095, %v2127, %v2063
        %vm2160 = vcmp.lt.f32.partialorder %v817, 0.0
        %vm2161 = vcmp.lt.f32.partialorder %v821, 0.0
        %vm2162 = vcmp.lt.f32.partialorder %v827, 0.0
        %vm2163 = vcmp.lt.f32.partialorder %v831, 0.0
        %vm2164 = vcmp.lt.f32.partialorder %v837, 0.0
        %vm2165 = vcmp.lt.f32.partialorder %v841, 0.0
        %vm2166 = vcmp.lt.f32.partialorder %v847, 0.0
        %vm2167 = vcmp.lt.f32.partialorder %v851, 0.0
        %vm2168 = vcmp.lt.f32.partialorder %v857, 0.0
        %vm2169 = vcmp.lt.f32.partialorder %v861, 0.0
        %vm2170 = vcmp.lt.f32.partialorder %v867, 0.0
        %vm2171 = vcmp.lt.f32.partialorder %v871, 0.0
        %vm2172 = vcmp.lt.f32.partialorder %v877, 0.0
        %vm2173 = vcmp.lt.f32.partialorder %v881, 0.0
        %vm2174 = vcmp.lt.f32.partialorder %v887, 0.0
        %vm2175 = vcmp.lt.f32.partialorder %v891, 0.0
        %vm2176 = vcmp.lt.f32.partialorder %v897, 0.0
        %vm2177 = vcmp.lt.f32.partialorder %v901, 0.0
        %vm2178 = vcmp.lt.f32.partialorder %v907, 0.0
        %vm2179 = vcmp.lt.f32.partialorder %v911, 0.0
        %vm2180 = vcmp.lt.f32.partialorder %v917, 0.0
        %vm2181 = vcmp.lt.f32.partialorder %v921, 0.0
        %vm2182 = vcmp.lt.f32.partialorder %v927, 0.0
        %vm2183 = vcmp.lt.f32.partialorder %v931, 0.0
        %vm2184 = vcmp.lt.f32.partialorder %v937, 0.0
        %vm2185 = vcmp.lt.f32.partialorder %v941, 0.0
        %vm2186 = vcmp.lt.f32.partialorder %v947, 0.0
        %vm2187 = vcmp.lt.f32.partialorder %v951, 0.0
        %vm2188 = vcmp.lt.f32.partialorder %v957, 0.0
        %vm2189 = vcmp.lt.f32.partialorder %v961, 0.0
        %vm2190 = vcmp.lt.f32.partialorder %v967, 0.0
        %vm2191 = vcmp.lt.f32.partialorder %v971, 0.0
        %v2192 = vsub.f32 3.1415927, %v2128
        %v2193 = vsub.f32 3.1415927, %v2129
        %v2194 = vsub.f32 3.1415927, %v2130
        %v2195 = vsub.f32 3.1415927, %v2131
        %v2196 = vsub.f32 3.1415927, %v2132
        %v2197 = vsub.f32 3.1415927, %v2133
        %v2198 = vsub.f32 3.1415927, %v2134
        %v2199 = vsub.f32 3.1415927, %v2135
        %v2200 = vsub.f32 3.1415927, %v2136
        %v2201 = vsub.f32 3.1415927, %v2137
        %v2202 = vsub.f32 3.1415927, %v2138
        %v2203 = vsub.f32 3.1415927, %v2139
        %v2204 = vsub.f32 3.1415927, %v2140
        %v2205 = vsub.f32 3.1415927, %v2141
        %v2206 = vsub.f32 3.1415927, %v2142
        %v2207 = vsub.f32 3.1415927, %v2143
        %v2208 = vsub.f32 3.1415927, %v2144
        %v2209 = vsub.f32 3.1415927, %v2145
        %v2210 = vsub.f32 3.1415927, %v2146
        %v2211 = vsub.f32 3.1415927, %v2147
        %v2212 = vsub.f32 3.1415927, %v2148
        %v2213 = vsub.f32 3.1415927, %v2149
        %v2214 = vsub.f32 3.1415927, %v2150
        %v2215 = vsub.f32 3.1415927, %v2151
        %v2216 = vsub.f32 3.1415927, %v2152
        %v2217 = vsub.f32 3.1415927, %v2153
        %v2218 = vsub.f32 3.1415927, %v2154
        %v2219 = vsub.f32 3.1415927, %v2155
        %v2220 = vsub.f32 3.1415927, %v2156
        %v2221 = vsub.f32 3.1415927, %v2157
        %v2222 = vsub.f32 3.1415927, %v2158
        %v2223 = vsub.f32 3.1415927, %v2159
        %v2224 = vsel %vm2160, %v2192, %v2128
        %v2225 = vsel %vm2161, %v2193, %v2129
        %v2226 = vsel %vm2162, %v2194, %v2130
        %v2227 = vsel %vm2163, %v2195, %v2131
        %v2228 = vsel %vm2164, %v2196, %v2132
        %v2229 = vsel %vm2165, %v2197, %v2133
        %v2230 = vsel %vm2166, %v2198, %v2134
        %v2231 = vsel %vm2167, %v2199, %v2135
        %v2232 = vsel %vm2168, %v2200, %v2136
        %v2233 = vsel %vm2169, %v2201, %v2137
        %v2234 = vsel %vm2170, %v2202, %v2138
        %v2235 = vsel %vm2171, %v2203, %v2139
        %v2236 = vsel %vm2172, %v2204, %v2140
        %v2237 = vsel %vm2173, %v2205, %v2141
        %v2238 = vsel %vm2174, %v2206, %v2142
        %v2239 = vsel %vm2175, %v2207, %v2143
        %v2240 = vsel %vm2176, %v2208, %v2144
        %v2241 = vsel %vm2177, %v2209, %v2145
        %v2242 = vsel %vm2178, %v2210, %v2146
        %v2243 = vsel %vm2179, %v2211, %v2147
        %v2244 = vsel %vm2180, %v2212, %v2148
        %v2245 = vsel %vm2181, %v2213, %v2149
        %v2246 = vsel %vm2182, %v2214, %v2150
        %v2247 = vsel %vm2183, %v2215, %v2151
        %v2248 = vsel %vm2184, %v2216, %v2152
        %v2249 = vsel %vm2185, %v2217, %v2153
        %v2250 = vsel %vm2186, %v2218, %v2154
        %v2251 = vsel %vm2187, %v2219, %v2155
        %v2252 = vsel %vm2188, %v2220, %v2156
        %v2253 = vsel %vm2189, %v2221, %v2157
        %v2254 = vsel %vm2190, %v2222, %v2158
        %v2255 = vsel %vm2191, %v2223, %v2159
        %v2288 = vand.u32 %v2224, 2147483647
        %v2289 = vand.u32 %v2225, 2147483647
        %v2290 = vand.u32 %v2226, 2147483647
        %v2291 = vand.u32 %v2227, 2147483647
        %v2292 = vand.u32 %v2228, 2147483647
        %v2293 = vand.u32 %v2229, 2147483647
        %v2294 = vand.u32 %v2230, 2147483647
        %v2295 = vand.u32 %v2231, 2147483647
        %v2296 = vand.u32 %v2232, 2147483647
        %v2297 = vand.u32 %v2233, 2147483647
        %v2298 = vand.u32 %v2234, 2147483647
        %v2299 = vand.u32 %v2235, 2147483647
        %v2300 = vand.u32 %v2236, 2147483647
        %v2301 = vand.u32 %v2237, 2147483647
        %v2302 = vand.u32 %v2238, 2147483647
        %v2303 = vand.u32 %v2239, 2147483647
        %v2304 = vand.u32 %v2240, 2147483647
        %v2305 = vand.u32 %v2241, 2147483647
        %v2306 = vand.u32 %v2242, 2147483647
        %v2307 = vand.u32 %v2243, 2147483647
        %v2308 = vand.u32 %v2244, 2147483647
        %v2309 = vand.u32 %v2245, 2147483647
        %v2310 = vand.u32 %v2246, 2147483647
        %v2311 = vand.u32 %v2247, 2147483647
        %v2312 = vand.u32 %v2248, 2147483647
        %v2313 = vand.u32 %v2249, 2147483647
        %v2314 = vand.u32 %v2250, 2147483647
        %v2315 = vand.u32 %v2251, 2147483647
        %v2316 = vand.u32 %v2252, 2147483647
        %v2317 = vand.u32 %v2253, 2147483647
        %v2318 = vand.u32 %v2254, 2147483647
        %v2319 = vand.u32 %v2255, 2147483647
        %v2352 = vand.u32 %v1010, 2147483648
        %v2353 = vand.u32 %v1014, 2147483648
        %v2354 = vand.u32 %v1020, 2147483648
        %v2355 = vand.u32 %v1024, 2147483648
        %v2356 = vand.u32 %v1030, 2147483648
        %v2357 = vand.u32 %v1034, 2147483648
        %v2358 = vand.u32 %v1040, 2147483648
        %v2359 = vand.u32 %v1044, 2147483648
        %v2360 = vand.u32 %v1050, 2147483648
        %v2361 = vand.u32 %v1054, 2147483648
        %v2362 = vand.u32 %v1060, 2147483648
        %v2363 = vand.u32 %v1064, 2147483648
        %v2364 = vand.u32 %v1070, 2147483648
        %v2365 = vand.u32 %v1074, 2147483648
        %v2366 = vand.u32 %v1080, 2147483648
        %v2367 = vand.u32 %v1084, 2147483648
        %v2368 = vand.u32 %v1090, 2147483648
        %v2369 = vand.u32 %v1094, 2147483648
        %v2370 = vand.u32 %v1100, 2147483648
        %v2371 = vand.u32 %v1104, 2147483648
        %v2372 = vand.u32 %v1110, 2147483648
        %v2373 = vand.u32 %v1114, 2147483648
        %v2374 = vand.u32 %v1120, 2147483648
        %v2375 = vand.u32 %v1124, 2147483648
        %v2376 = vand.u32 %v1130, 2147483648
        %v2377 = vand.u32 %v1134, 2147483648
        %v2378 = vand.u32 %v1140, 2147483648
        %v2379 = vand.u32 %v1144, 2147483648
        %v2380 = vand.u32 %v1150, 2147483648
        %v2381 = vand.u32 %v1154, 2147483648
        %v2382 = vand.u32 %v1160, 2147483648
        %v2383 = vand.u32 %v1164, 2147483648
        %v2384 = vor.u32 %v2288, %v2352
        %v2385 = vor.u32 %v2289, %v2353
        %v2386 = vor.u32 %v2290, %v2354
        %v2387 = vor.u32 %v2291, %v2355
        %v2388 = vor.u32 %v2292, %v2356
        %v2389 = vor.u32 %v2293, %v2357
        %v2390 = vor.u32 %v2294, %v2358
        %v2391 = vor.u32 %v2295, %v2359
        %v2392 = vor.u32 %v2296, %v2360
        %v2393 = vor.u32 %v2297, %v2361
        %v2394 = vor.u32 %v2298, %v2362
        %v2395 = vor.u32 %v2299, %v2363
        %v2396 = vor.u32 %v2300, %v2364
        %v2397 = vor.u32 %v2301, %v2365
        %v2398 = vor.u32 %v2302, %v2366
        %v2399 = vor.u32 %v2303, %v2367
        %v2400 = vor.u32 %v2304, %v2368
        %v2401 = vor.u32 %v2305, %v2369
        %v2402 = vor.u32 %v2306, %v2370
        %v2403 = vor.u32 %v2307, %v2371
        %v2404 = vor.u32 %v2308, %v2372
        %v2405 = vor.u32 %v2309, %v2373
        %v2406 = vor.u32 %v2310, %v2374
        %v2407 = vor.u32 %v2311, %v2375
        %v2408 = vor.u32 %v2312, %v2376
        %v2409 = vor.u32 %v2313, %v2377
        %v2410 = vor.u32 %v2314, %v2378
        %v2411 = vor.u32 %v2315, %v2379
        %v2412 = vor.u32 %v2316, %v2380
        %v2413 = vor.u32 %v2317, %v2381
        %v2414 = vor.u32 %v2318, %v2382
        %v2415 = vor.u32 %v2319, %v2383
        %v2448 = vsub.f32 %v1270, %v1382
        %v2449 = vsub.f32 %v1277, %v1389
        %v2450 = vsub.f32 %v1284, %v1396
        %v2451 = vsub.f32 %v1291, %v1403
        %v2452 = vsub.f32 %v1298, %v1410
        %v2453 = vsub.f32 %v1305, %v1417
        %v2454 = vsub.f32 %v1312, %v1424
        %v2455 = vsub.f32 %v1319, %v1431
        %v2456 = vsub.f32 %v1326, %v1438
        %v2457 = vsub.f32 %v1333, %v1445
        %v2458 = vsub.f32 %v1340, %v1452
        %v2459 = vsub.f32 %v1347, %v1459
        %v2460 = vsub.f32 %v1354, %v1466
        %v2461 = vsub.f32 %v1361, %v1473
        %v2462 = vsub.f32 %v1368, %v1480
        %v2463 = vsub.f32 %v1375, %v1487
        %v2464 = vand.u32 2147483647, %v2448
        %v2465 = vand.u32 2147483647, %v2449
        %v2466 = vand.u32 2147483647, %v2450
        %v2467 = vand.u32 2147483647, %v2451
        %v2468 = vand.u32 2147483647, %v2452
        %v2469 = vand.u32 2147483647, %v2453
        %v2470 = vand.u32 2147483647, %v2454
        %v2471 = vand.u32 2147483647, %v2455
        %v2472 = vand.u32 2147483647, %v2456
        %v2473 = vand.u32 2147483647, %v2457
        %v2474 = vand.u32 2147483647, %v2458
        %v2475 = vand.u32 2147483647, %v2459
        %v2476 = vand.u32 2147483647, %v2460
        %v2477 = vand.u32 2147483647, %v2461
        %v2478 = vand.u32 2147483647, %v2462
        %v2479 = vand.u32 2147483647, %v2463
        %v2480 = vsub.f32 %v2384, %v2400
        %v2481 = vsub.f32 %v2385, %v2401
        %v2482 = vsub.f32 %v2386, %v2402
        %v2483 = vsub.f32 %v2387, %v2403
        %v2484 = vsub.f32 %v2388, %v2404
        %v2485 = vsub.f32 %v2389, %v2405
        %v2486 = vsub.f32 %v2390, %v2406
        %v2487 = vsub.f32 %v2391, %v2407
        %v2488 = vsub.f32 %v2392, %v2408
        %v2489 = vsub.f32 %v2393, %v2409
        %v2490 = vsub.f32 %v2394, %v2410
        %v2491 = vsub.f32 %v2395, %v2411
        %v2492 = vsub.f32 %v2396, %v2412
        %v2493 = vsub.f32 %v2397, %v2413
        %v2494 = vsub.f32 %v2398, %v2414
        %v2495 = vsub.f32 %v2399, %v2415
        %v2496 = vand.u32 2147483647, %v2480
        %v2497 = vand.u32 2147483647, %v2481
        %v2498 = vand.u32 2147483647, %v2482
        %v2499 = vand.u32 2147483647, %v2483
        %v2500 = vand.u32 2147483647, %v2484
        %v2501 = vand.u32 2147483647, %v2485
        %v2502 = vand.u32 2147483647, %v2486
        %v2503 = vand.u32 2147483647, %v2487
        %v2504 = vand.u32 2147483647, %v2488
        %v2505 = vand.u32 2147483647, %v2489
        %v2506 = vand.u32 2147483647, %v2490
        %v2507 = vand.u32 2147483647, %v2491
        %v2508 = vand.u32 2147483647, %v2492
        %v2509 = vand.u32 2147483647, %v2493
        %v2510 = vand.u32 2147483647, %v2494
        %v2511 = vand.u32 2147483647, %v2495
        %v2512 = vadd.f32 %v2464, %v2496
        %v2513 = vadd.f32 %v2465, %v2497
        %v2514 = vadd.f32 %v2466, %v2498
        %v2515 = vadd.f32 %v2467, %v2499
        %v2516 = vadd.f32 %v2468, %v2500
        %v2517 = vadd.f32 %v2469, %v2501
        %v2518 = vadd.f32 %v2470, %v2502
        %v2519 = vadd.f32 %v2471, %v2503
        %v2520 = vadd.f32 %v2472, %v2504
        %v2521 = vadd.f32 %v2473, %v2505
        %v2522 = vadd.f32 %v2474, %v2506
        %v2523 = vadd.f32 %v2475, %v2507
        %v2524 = vadd.f32 %v2476, %v2508
        %v2525 = vadd.f32 %v2477, %v2509
        %v2526 = vadd.f32 %v2478, %v2510
        %v2527 = vadd.f32 %v2479, %v2511
        %v2528 = vld [vmem:[#allocation3] sm:$0xff]
        %v2529 = vadd.f32 %v2512, %v2513
        %v2530 = vadd.f32 %v2529, %v2514
        %v2531 = vadd.f32 %v2530, %v2515
        %v2532 = vadd.f32 %v2531, %v2516
        %v2533 = vadd.f32 %v2532, %v2517
        %v2534 = vadd.f32 %v2533, %v2518
        %v2535 = vadd.f32 %v2534, %v2519
        %v2536 = vadd.f32 %v2535, %v2520
        %v2537 = vadd.f32 %v2536, %v2521
        %v2538 = vadd.f32 %v2537, %v2522
        %v2539 = vadd.f32 %v2538, %v2523
        %v2540 = vadd.f32 %v2539, %v2524
        %v2541 = vadd.f32 %v2540, %v2525
        %v2542 = vadd.f32 %v2541, %v2526
        %v2543 = vadd.f32 %v2542, %v2527
        %v2544 = vadd.f32 %v2528, %v2543
        %2545 = vst [vmem:[#allocation3] sm:$0xff] %v2544
        %v2546 = vmul.f32 %v819, %v819
        %v2547 = vmul.f32 %v823, %v823
        %v2548 = vmul.f32 %v829, %v829
        %v2549 = vmul.f32 %v833, %v833
        %v2550 = vmul.f32 %v839, %v839
        %v2551 = vmul.f32 %v843, %v843
        %v2552 = vmul.f32 %v849, %v849
        %v2553 = vmul.f32 %v853, %v853
        %v2554 = vmul.f32 %v859, %v859
        %v2555 = vmul.f32 %v863, %v863
        %v2556 = vmul.f32 %v869, %v869
        %v2557 = vmul.f32 %v873, %v873
        %v2558 = vmul.f32 %v879, %v879
        %v2559 = vmul.f32 %v883, %v883
        %v2560 = vmul.f32 %v889, %v889
        %v2561 = vmul.f32 %v893, %v893
        %v2562 = vmul.f32 %v899, %v899
        %v2563 = vmul.f32 %v903, %v903
        %v2564 = vmul.f32 %v909, %v909
        %v2565 = vmul.f32 %v913, %v913
        %v2566 = vmul.f32 %v919, %v919
        %v2567 = vmul.f32 %v923, %v923
        %v2568 = vmul.f32 %v929, %v929
        %v2569 = vmul.f32 %v933, %v933
        %v2570 = vmul.f32 %v939, %v939
        %v2571 = vmul.f32 %v943, %v943
        %v2572 = vmul.f32 %v949, %v949
        %v2573 = vmul.f32 %v953, %v953
        %v2574 = vmul.f32 %v959, %v959
        %v2575 = vmul.f32 %v963, %v963
        %v2576 = vmul.f32 %v969, %v969
        %v2577 = vmul.f32 %v973, %v973
        %v2578 = vmul.f32 %v1012, %v1012
        %v2579 = vmul.f32 %v1016, %v1016
        %v2580 = vmul.f32 %v1022, %v1022
        %v2581 = vmul.f32 %v1026, %v1026
        %v2582 = vmul.f32 %v1032, %v1032
        %v2583 = vmul.f32 %v1036, %v1036
        %v2584 = vmul.f32 %v1042, %v1042
        %v2585 = vmul.f32 %v1046, %v1046
        %v2586 = vmul.f32 %v1052, %v1052
        %v2587 = vmul.f32 %v1056, %v1056
        %v2588 = vmul.f32 %v1062, %v1062
        %v2589 = vmul.f32 %v1066, %v1066
        %v2590 = vmul.f32 %v1072, %v1072
        %v2591 = vmul.f32 %v1076, %v1076
        %v2592 = vmul.f32 %v1082, %v1082
        %v2593 = vmul.f32 %v1086, %v1086
        %v2594 = vmul.f32 %v1092, %v1092
        %v2595 = vmul.f32 %v1096, %v1096
        %v2596 = vmul.f32 %v1102, %v1102
        %v2597 = vmul.f32 %v1106, %v1106
        %v2598 = vmul.f32 %v1112, %v1112
        %v2599 = vmul.f32 %v1116, %v1116
        %v2600 = vmul.f32 %v1122, %v1122
        %v2601 = vmul.f32 %v1126, %v1126
        %v2602 = vmul.f32 %v1132, %v1132
        %v2603 = vmul.f32 %v1136, %v1136
        %v2604 = vmul.f32 %v1142, %v1142
        %v2605 = vmul.f32 %v1146, %v1146
        %v2606 = vmul.f32 %v1152, %v1152
        %v2607 = vmul.f32 %v1156, %v1156
        %v2608 = vmul.f32 %v1162, %v1162
        %v2609 = vmul.f32 %v1166, %v1166
        %v2610 = vadd.f32 %v2546, %v2578
        %v2611 = vadd.f32 %v2547, %v2579
        %v2612 = vadd.f32 %v2548, %v2580
        %v2613 = vadd.f32 %v2549, %v2581
        %v2614 = vadd.f32 %v2550, %v2582
        %v2615 = vadd.f32 %v2551, %v2583
        %v2616 = vadd.f32 %v2552, %v2584
        %v2617 = vadd.f32 %v2553, %v2585
        %v2618 = vadd.f32 %v2554, %v2586
        %v2619 = vadd.f32 %v2555, %v2587
        %v2620 = vadd.f32 %v2556, %v2588
        %v2621 = vadd.f32 %v2557, %v2589
        %v2622 = vadd.f32 %v2558, %v2590
        %v2623 = vadd.f32 %v2559, %v2591
        %v2624 = vadd.f32 %v2560, %v2592
        %v2625 = vadd.f32 %v2561, %v2593
        %v2626 = vadd.f32 %v2562, %v2594
        %v2627 = vadd.f32 %v2563, %v2595
        %v2628 = vadd.f32 %v2564, %v2596
        %v2629 = vadd.f32 %v2565, %v2597
        %v2630 = vadd.f32 %v2566, %v2598
        %v2631 = vadd.f32 %v2567, %v2599
        %v2632 = vadd.f32 %v2568, %v2600
        %v2633 = vadd.f32 %v2569, %v2601
        %v2634 = vadd.f32 %v2570, %v2602
        %v2635 = vadd.f32 %v2571, %v2603
        %v2636 = vadd.f32 %v2572, %v2604
        %v2637 = vadd.f32 %v2573, %v2605
        %v2638 = vadd.f32 %v2574, %v2606
        %v2639 = vadd.f32 %v2575, %v2607
        %v2640 = vadd.f32 %v2576, %v2608
        %v2641 = vadd.f32 %v2577, %v2609
        %v2642 = vrsqrt.pop %v2610
        %v2643 = vmul.f32 %v2610, %v2642
        %vm2644 = vcmp.eq.f32.partialorder %v2610, inf
        %v2645 = vsel %vm2644, %v2610, %v2643
        %vm2646 = vcmp.eq.f32.partialorder %v2610, 0.0
        %v2647 = vand.u32 %v2610, 2147483648
        %v2648 = vsel %vm2646, %v2647, %v2645
        %v2649 = vrsqrt.pop %v2611
        %v2650 = vmul.f32 %v2611, %v2649
        %vm2651 = vcmp.eq.f32.partialorder %v2611, inf
        %v2652 = vsel %vm2651, %v2611, %v2650
        %vm2653 = vcmp.eq.f32.partialorder %v2611, 0.0
        %v2654 = vand.u32 %v2611, 2147483648
        %v2655 = vsel %vm2653, %v2654, %v2652
        %v2656 = vrsqrt.pop %v2612
        %v2657 = vmul.f32 %v2612, %v2656
        %vm2658 = vcmp.eq.f32.partialorder %v2612, inf
        %v2659 = vsel %vm2658, %v2612, %v2657
        %vm2660 = vcmp.eq.f32.partialorder %v2612, 0.0
        %v2661 = vand.u32 %v2612, 2147483648
        %v2662 = vsel %vm2660, %v2661, %v2659
        %v2663 = vrsqrt.pop %v2613
        %v2664 = vmul.f32 %v2613, %v2663
        %vm2665 = vcmp.eq.f32.partialorder %v2613, inf
        %v2666 = vsel %vm2665, %v2613, %v2664
        %vm2667 = vcmp.eq.f32.partialorder %v2613, 0.0
        %v2668 = vand.u32 %v2613, 2147483648
        %v2669 = vsel %vm2667, %v2668, %v2666
        %v2670 = vrsqrt.pop %v2614
        %v2671 = vmul.f32 %v2614, %v2670
        %vm2672 = vcmp.eq.f32.partialorder %v2614, inf
        %v2673 = vsel %vm2672, %v2614, %v2671
        %vm2674 = vcmp.eq.f32.partialorder %v2614, 0.0
        %v2675 = vand.u32 %v2614, 2147483648
        %v2676 = vsel %vm2674, %v2675, %v2673
        %v2677 = vrsqrt.pop %v2615
        %v2678 = vmul.f32 %v2615, %v2677
        %vm2679 = vcmp.eq.f32.partialorder %v2615, inf
        %v2680 = vsel %vm2679, %v2615, %v2678
        %vm2681 = vcmp.eq.f32.partialorder %v2615, 0.0
        %v2682 = vand.u32 %v2615, 2147483648
        %v2683 = vsel %vm2681, %v2682, %v2680
        %v2684 = vrsqrt.pop %v2616
        %v2685 = vmul.f32 %v2616, %v2684
        %vm2686 = vcmp.eq.f32.partialorder %v2616, inf
        %v2687 = vsel %vm2686, %v2616, %v2685
        %vm2688 = vcmp.eq.f32.partialorder %v2616, 0.0
        %v2689 = vand.u32 %v2616, 2147483648
        %v2690 = vsel %vm2688, %v2689, %v2687
        %v2691 = vrsqrt.pop %v2617
        %v2692 = vmul.f32 %v2617, %v2691
        %vm2693 = vcmp.eq.f32.partialorder %v2617, inf
        %v2694 = vsel %vm2693, %v2617, %v2692
        %vm2695 = vcmp.eq.f32.partialorder %v2617, 0.0
        %v2696 = vand.u32 %v2617, 2147483648
        %v2697 = vsel %vm2695, %v2696, %v2694
        %v2698 = vrsqrt.pop %v2618
        %v2699 = vmul.f32 %v2618, %v2698
        %vm2700 = vcmp.eq.f32.partialorder %v2618, inf
        %v2701 = vsel %vm2700, %v2618, %v2699
        %vm2702 = vcmp.eq.f32.partialorder %v2618, 0.0
        %v2703 = vand.u32 %v2618, 2147483648
        %v2704 = vsel %vm2702, %v2703, %v2701
        %v2705 = vrsqrt.pop %v2619
        %v2706 = vmul.f32 %v2619, %v2705
        %vm2707 = vcmp.eq.f32.partialorder %v2619, inf
        %v2708 = vsel %vm2707, %v2619, %v2706
        %vm2709 = vcmp.eq.f32.partialorder %v2619, 0.0
        %v2710 = vand.u32 %v2619, 2147483648
        %v2711 = vsel %vm2709, %v2710, %v2708
        %v2712 = vrsqrt.pop %v2620
        %v2713 = vmul.f32 %v2620, %v2712
        %vm2714 = vcmp.eq.f32.partialorder %v2620, inf
        %v2715 = vsel %vm2714, %v2620, %v2713
        %vm2716 = vcmp.eq.f32.partialorder %v2620, 0.0
        %v2717 = vand.u32 %v2620, 2147483648
        %v2718 = vsel %vm2716, %v2717, %v2715
        %v2719 = vrsqrt.pop %v2621
        %v2720 = vmul.f32 %v2621, %v2719
        %vm2721 = vcmp.eq.f32.partialorder %v2621, inf
        %v2722 = vsel %vm2721, %v2621, %v2720
        %vm2723 = vcmp.eq.f32.partialorder %v2621, 0.0
        %v2724 = vand.u32 %v2621, 2147483648
        %v2725 = vsel %vm2723, %v2724, %v2722
        %v2726 = vrsqrt.pop %v2622
        %v2727 = vmul.f32 %v2622, %v2726
        %vm2728 = vcmp.eq.f32.partialorder %v2622, inf
        %v2729 = vsel %vm2728, %v2622, %v2727
        %vm2730 = vcmp.eq.f32.partialorder %v2622, 0.0
        %v2731 = vand.u32 %v2622, 2147483648
        %v2732 = vsel %vm2730, %v2731, %v2729
        %v2733 = vrsqrt.pop %v2623
        %v2734 = vmul.f32 %v2623, %v2733
        %vm2735 = vcmp.eq.f32.partialorder %v2623, inf
        %v2736 = vsel %vm2735, %v2623, %v2734
        %vm2737 = vcmp.eq.f32.partialorder %v2623, 0.0
        %v2738 = vand.u32 %v2623, 2147483648
        %v2739 = vsel %vm2737, %v2738, %v2736
        %v2740 = vrsqrt.pop %v2624
        %v2741 = vmul.f32 %v2624, %v2740
        %vm2742 = vcmp.eq.f32.partialorder %v2624, inf
        %v2743 = vsel %vm2742, %v2624, %v2741
        %vm2744 = vcmp.eq.f32.partialorder %v2624, 0.0
        %v2745 = vand.u32 %v2624, 2147483648
        %v2746 = vsel %vm2744, %v2745, %v2743
        %v2747 = vrsqrt.pop %v2625
        %v2748 = vmul.f32 %v2625, %v2747
        %vm2749 = vcmp.eq.f32.partialorder %v2625, inf
        %v2750 = vsel %vm2749, %v2625, %v2748
        %vm2751 = vcmp.eq.f32.partialorder %v2625, 0.0
        %v2752 = vand.u32 %v2625, 2147483648
        %v2753 = vsel %vm2751, %v2752, %v2750
        %v2754 = vrsqrt.pop %v2626
        %v2755 = vmul.f32 %v2626, %v2754
        %vm2756 = vcmp.eq.f32.partialorder %v2626, inf
        %v2757 = vsel %vm2756, %v2626, %v2755
        %vm2758 = vcmp.eq.f32.partialorder %v2626, 0.0
        %v2759 = vand.u32 %v2626, 2147483648
        %v2760 = vsel %vm2758, %v2759, %v2757
        %v2761 = vrsqrt.pop %v2627
        %v2762 = vmul.f32 %v2627, %v2761
        %vm2763 = vcmp.eq.f32.partialorder %v2627, inf
        %v2764 = vsel %vm2763, %v2627, %v2762
        %vm2765 = vcmp.eq.f32.partialorder %v2627, 0.0
        %v2766 = vand.u32 %v2627, 2147483648
        %v2767 = vsel %vm2765, %v2766, %v2764
        %v2768 = vrsqrt.pop %v2628
        %v2769 = vmul.f32 %v2628, %v2768
        %vm2770 = vcmp.eq.f32.partialorder %v2628, inf
        %v2771 = vsel %vm2770, %v2628, %v2769
        %vm2772 = vcmp.eq.f32.partialorder %v2628, 0.0
        %v2773 = vand.u32 %v2628, 2147483648
        %v2774 = vsel %vm2772, %v2773, %v2771
        %v2775 = vrsqrt.pop %v2629
        %v2776 = vmul.f32 %v2629, %v2775
        %vm2777 = vcmp.eq.f32.partialorder %v2629, inf
        %v2778 = vsel %vm2777, %v2629, %v2776
        %vm2779 = vcmp.eq.f32.partialorder %v2629, 0.0
        %v2780 = vand.u32 %v2629, 2147483648
        %v2781 = vsel %vm2779, %v2780, %v2778
        %v2782 = vrsqrt.pop %v2630
        %v2783 = vmul.f32 %v2630, %v2782
        %vm2784 = vcmp.eq.f32.partialorder %v2630, inf
        %v2785 = vsel %vm2784, %v2630, %v2783
        %vm2786 = vcmp.eq.f32.partialorder %v2630, 0.0
        %v2787 = vand.u32 %v2630, 2147483648
        %v2788 = vsel %vm2786, %v2787, %v2785
        %v2789 = vrsqrt.pop %v2631
        %v2790 = vmul.f32 %v2631, %v2789
        %vm2791 = vcmp.eq.f32.partialorder %v2631, inf
        %v2792 = vsel %vm2791, %v2631, %v2790
        %vm2793 = vcmp.eq.f32.partialorder %v2631, 0.0
        %v2794 = vand.u32 %v2631, 2147483648
        %v2795 = vsel %vm2793, %v2794, %v2792
        %v2796 = vrsqrt.pop %v2632
        %v2797 = vmul.f32 %v2632, %v2796
        %vm2798 = vcmp.eq.f32.partialorder %v2632, inf
        %v2799 = vsel %vm2798, %v2632, %v2797
        %vm2800 = vcmp.eq.f32.partialorder %v2632, 0.0
        %v2801 = vand.u32 %v2632, 2147483648
        %v2802 = vsel %vm2800, %v2801, %v2799
        %v2803 = vrsqrt.pop %v2633
        %v2804 = vmul.f32 %v2633, %v2803
        %vm2805 = vcmp.eq.f32.partialorder %v2633, inf
        %v2806 = vsel %vm2805, %v2633, %v2804
        %vm2807 = vcmp.eq.f32.partialorder %v2633, 0.0
        %v2808 = vand.u32 %v2633, 2147483648
        %v2809 = vsel %vm2807, %v2808, %v2806
        %v2810 = vrsqrt.pop %v2634
        %v2811 = vmul.f32 %v2634, %v2810
        %vm2812 = vcmp.eq.f32.partialorder %v2634, inf
        %v2813 = vsel %vm2812, %v2634, %v2811
        %vm2814 = vcmp.eq.f32.partialorder %v2634, 0.0
        %v2815 = vand.u32 %v2634, 2147483648
        %v2816 = vsel %vm2814, %v2815, %v2813
        %v2817 = vrsqrt.pop %v2635
        %v2818 = vmul.f32 %v2635, %v2817
        %vm2819 = vcmp.eq.f32.partialorder %v2635, inf
        %v2820 = vsel %vm2819, %v2635, %v2818
        %vm2821 = vcmp.eq.f32.partialorder %v2635, 0.0
        %v2822 = vand.u32 %v2635, 2147483648
        %v2823 = vsel %vm2821, %v2822, %v2820
        %v2824 = vrsqrt.pop %v2636
        %v2825 = vmul.f32 %v2636, %v2824
        %vm2826 = vcmp.eq.f32.partialorder %v2636, inf
        %v2827 = vsel %vm2826, %v2636, %v2825
        %vm2828 = vcmp.eq.f32.partialorder %v2636, 0.0
        %v2829 = vand.u32 %v2636, 2147483648
        %v2830 = vsel %vm2828, %v2829, %v2827
        %v2831 = vrsqrt.pop %v2637
        %v2832 = vmul.f32 %v2637, %v2831
        %vm2833 = vcmp.eq.f32.partialorder %v2637, inf
        %v2834 = vsel %vm2833, %v2637, %v2832
        %vm2835 = vcmp.eq.f32.partialorder %v2637, 0.0
        %v2836 = vand.u32 %v2637, 2147483648
        %v2837 = vsel %vm2835, %v2836, %v2834
        %v2838 = vrsqrt.pop %v2638
        %v2839 = vmul.f32 %v2638, %v2838
        %vm2840 = vcmp.eq.f32.partialorder %v2638, inf
        %v2841 = vsel %vm2840, %v2638, %v2839
        %vm2842 = vcmp.eq.f32.partialorder %v2638, 0.0
        %v2843 = vand.u32 %v2638, 2147483648
        %v2844 = vsel %vm2842, %v2843, %v2841
        %v2845 = vrsqrt.pop %v2639
        %v2846 = vmul.f32 %v2639, %v2845
        %vm2847 = vcmp.eq.f32.partialorder %v2639, inf
        %v2848 = vsel %vm2847, %v2639, %v2846
        %vm2849 = vcmp.eq.f32.partialorder %v2639, 0.0
        %v2850 = vand.u32 %v2639, 2147483648
        %v2851 = vsel %vm2849, %v2850, %v2848
        %v2852 = vrsqrt.pop %v2640
        %v2853 = vmul.f32 %v2640, %v2852
        %vm2854 = vcmp.eq.f32.partialorder %v2640, inf
        %v2855 = vsel %vm2854, %v2640, %v2853
        %vm2856 = vcmp.eq.f32.partialorder %v2640, 0.0
        %v2857 = vand.u32 %v2640, 2147483648
        %v2858 = vsel %vm2856, %v2857, %v2855
        %v2859 = vrsqrt.pop %v2641
        %v2860 = vmul.f32 %v2641, %v2859
        %vm2861 = vcmp.eq.f32.partialorder %v2641, inf
        %v2862 = vsel %vm2861, %v2641, %v2860
        %vm2863 = vcmp.eq.f32.partialorder %v2641, 0.0
        %v2864 = vand.u32 %v2641, 2147483648
        %v2865 = vsel %vm2863, %v2864, %v2862
        %v2866 = vand.u32 2147483647, %v819
        %v2867 = vand.u32 2147483647, %v823
        %v2868 = vand.u32 2147483647, %v829
        %v2869 = vand.u32 2147483647, %v833
        %v2870 = vand.u32 2147483647, %v839
        %v2871 = vand.u32 2147483647, %v843
        %v2872 = vand.u32 2147483647, %v849
        %v2873 = vand.u32 2147483647, %v853
        %v2874 = vand.u32 2147483647, %v859
        %v2875 = vand.u32 2147483647, %v863
        %v2876 = vand.u32 2147483647, %v869
        %v2877 = vand.u32 2147483647, %v873
        %v2878 = vand.u32 2147483647, %v879
        %v2879 = vand.u32 2147483647, %v883
        %v2880 = vand.u32 2147483647, %v889
        %v2881 = vand.u32 2147483647, %v893
        %v2882 = vand.u32 2147483647, %v899
        %v2883 = vand.u32 2147483647, %v903
        %v2884 = vand.u32 2147483647, %v909
        %v2885 = vand.u32 2147483647, %v913
        %v2886 = vand.u32 2147483647, %v919
        %v2887 = vand.u32 2147483647, %v923
        %v2888 = vand.u32 2147483647, %v929
        %v2889 = vand.u32 2147483647, %v933
        %v2890 = vand.u32 2147483647, %v939
        %v2891 = vand.u32 2147483647, %v943
        %v2892 = vand.u32 2147483647, %v949
        %v2893 = vand.u32 2147483647, %v953
        %v2894 = vand.u32 2147483647, %v959
        %v2895 = vand.u32 2147483647, %v963
        %v2896 = vand.u32 2147483647, %v969
        %v2897 = vand.u32 2147483647, %v973
        %v2898 = vand.u32 2147483647, %v1012
        %v2899 = vand.u32 2147483647, %v1016
        %v2900 = vand.u32 2147483647, %v1022
        %v2901 = vand.u32 2147483647, %v1026
        %v2902 = vand.u32 2147483647, %v1032
        %v2903 = vand.u32 2147483647, %v1036
        %v2904 = vand.u32 2147483647, %v1042
        %v2905 = vand.u32 2147483647, %v1046
        %v2906 = vand.u32 2147483647, %v1052
        %v2907 = vand.u32 2147483647, %v1056
        %v2908 = vand.u32 2147483647, %v1062
        %v2909 = vand.u32 2147483647, %v1066
        %v2910 = vand.u32 2147483647, %v1072
        %v2911 = vand.u32 2147483647, %v1076
        %v2912 = vand.u32 2147483647, %v1082
        %v2913 = vand.u32 2147483647, %v1086
        %v2914 = vand.u32 2147483647, %v1092
        %v2915 = vand.u32 2147483647, %v1096
        %v2916 = vand.u32 2147483647, %v1102
        %v2917 = vand.u32 2147483647, %v1106
        %v2918 = vand.u32 2147483647, %v1112
        %v2919 = vand.u32 2147483647, %v1116
        %v2920 = vand.u32 2147483647, %v1122
        %v2921 = vand.u32 2147483647, %v1126
        %v2922 = vand.u32 2147483647, %v1132
        %v2923 = vand.u32 2147483647, %v1136
        %v2924 = vand.u32 2147483647, %v1142
        %v2925 = vand.u32 2147483647, %v1146
        %v2926 = vand.u32 2147483647, %v1152
        %v2927 = vand.u32 2147483647, %v1156
        %v2928 = vand.u32 2147483647, %v1162
        %v2929 = vand.u32 2147483647, %v1166
        %v2930 = vmax.f32 %v2866, %v2898
        %v2931 = vmax.f32 %v2867, %v2899
        %v2932 = vmax.f32 %v2868, %v2900
        %v2933 = vmax.f32 %v2869, %v2901
        %v2934 = vmax.f32 %v2870, %v2902
        %v2935 = vmax.f32 %v2871, %v2903
        %v2936 = vmax.f32 %v2872, %v2904
        %v2937 = vmax.f32 %v2873, %v2905
        %v2938 = vmax.f32 %v2874, %v2906
        %v2939 = vmax.f32 %v2875, %v2907
        %v2940 = vmax.f32 %v2876, %v2908
        %v2941 = vmax.f32 %v2877, %v2909
        %v2942 = vmax.f32 %v2878, %v2910
        %v2943 = vmax.f32 %v2879, %v2911
        %v2944 = vmax.f32 %v2880, %v2912
        %v2945 = vmax.f32 %v2881, %v2913
        %v2946 = vmax.f32 %v2882, %v2914
        %v2947 = vmax.f32 %v2883, %v2915
        %v2948 = vmax.f32 %v2884, %v2916
        %v2949 = vmax.f32 %v2885, %v2917
        %v2950 = vmax.f32 %v2886, %v2918
        %v2951 = vmax.f32 %v2887, %v2919
        %v2952 = vmax.f32 %v2888, %v2920
        %v2953 = vmax.f32 %v2889, %v2921
        %v2954 = vmax.f32 %v2890, %v2922
        %v2955 = vmax.f32 %v2891, %v2923
        %v2956 = vmax.f32 %v2892, %v2924
        %v2957 = vmax.f32 %v2893, %v2925
        %v2958 = vmax.f32 %v2894, %v2926
        %v2959 = vmax.f32 %v2895, %v2927
        %v2960 = vmax.f32 %v2896, %v2928
        %v2961 = vmax.f32 %v2897, %v2929
        %v2962 = vmin.f32 %v2866, %v2898
        %v2963 = vmin.f32 %v2867, %v2899
        %v2964 = vmin.f32 %v2868, %v2900
        %v2965 = vmin.f32 %v2869, %v2901
        %v2966 = vmin.f32 %v2870, %v2902
        %v2967 = vmin.f32 %v2871, %v2903
        %v2968 = vmin.f32 %v2872, %v2904
        %v2969 = vmin.f32 %v2873, %v2905
        %v2970 = vmin.f32 %v2874, %v2906
        %v2971 = vmin.f32 %v2875, %v2907
        %v2972 = vmin.f32 %v2876, %v2908
        %v2973 = vmin.f32 %v2877, %v2909
        %v2974 = vmin.f32 %v2878, %v2910
        %v2975 = vmin.f32 %v2879, %v2911
        %v2976 = vmin.f32 %v2880, %v2912
        %v2977 = vmin.f32 %v2881, %v2913
        %v2978 = vmin.f32 %v2882, %v2914
        %v2979 = vmin.f32 %v2883, %v2915
        %v2980 = vmin.f32 %v2884, %v2916
        %v2981 = vmin.f32 %v2885, %v2917
        %v2982 = vmin.f32 %v2886, %v2918
        %v2983 = vmin.f32 %v2887, %v2919
        %v2984 = vmin.f32 %v2888, %v2920
        %v2985 = vmin.f32 %v2889, %v2921
        %v2986 = vmin.f32 %v2890, %v2922
        %v2987 = vmin.f32 %v2891, %v2923
        %v2988 = vmin.f32 %v2892, %v2924
        %v2989 = vmin.f32 %v2893, %v2925
        %v2990 = vmin.f32 %v2894, %v2926
        %v2991 = vmin.f32 %v2895, %v2927
        %v2992 = vmin.f32 %v2896, %v2928
        %v2993 = vmin.f32 %v2897, %v2929
        %vm2994 = vcmp.eq.f32.partialorder %v2930, 0.0
        %vm2995 = vcmp.eq.f32.partialorder %v2931, 0.0
        %vm2996 = vcmp.eq.f32.partialorder %v2932, 0.0
        %vm2997 = vcmp.eq.f32.partialorder %v2933, 0.0
        %vm2998 = vcmp.eq.f32.partialorder %v2934, 0.0
        %vm2999 = vcmp.eq.f32.partialorder %v2935, 0.0
        %vm3000 = vcmp.eq.f32.partialorder %v2936, 0.0
        %vm3001 = vcmp.eq.f32.partialorder %v2937, 0.0
        %vm3002 = vcmp.eq.f32.partialorder %v2938, 0.0
        %vm3003 = vcmp.eq.f32.partialorder %v2939, 0.0
        %vm3004 = vcmp.eq.f32.partialorder %v2940, 0.0
        %vm3005 = vcmp.eq.f32.partialorder %v2941, 0.0
        %vm3006 = vcmp.eq.f32.partialorder %v2942, 0.0
        %vm3007 = vcmp.eq.f32.partialorder %v2943, 0.0
        %vm3008 = vcmp.eq.f32.partialorder %v2944, 0.0
        %vm3009 = vcmp.eq.f32.partialorder %v2945, 0.0
        %vm3010 = vcmp.eq.f32.partialorder %v2946, 0.0
        %vm3011 = vcmp.eq.f32.partialorder %v2947, 0.0
        %vm3012 = vcmp.eq.f32.partialorder %v2948, 0.0
        %vm3013 = vcmp.eq.f32.partialorder %v2949, 0.0
        %vm3014 = vcmp.eq.f32.partialorder %v2950, 0.0
        %vm3015 = vcmp.eq.f32.partialorder %v2951, 0.0
        %vm3016 = vcmp.eq.f32.partialorder %v2952, 0.0
        %vm3017 = vcmp.eq.f32.partialorder %v2953, 0.0
        %vm3018 = vcmp.eq.f32.partialorder %v2954, 0.0
        %vm3019 = vcmp.eq.f32.partialorder %v2955, 0.0
        %vm3020 = vcmp.eq.f32.partialorder %v2956, 0.0
        %vm3021 = vcmp.eq.f32.partialorder %v2957, 0.0
        %vm3022 = vcmp.eq.f32.partialorder %v2958, 0.0
        %vm3023 = vcmp.eq.f32.partialorder %v2959, 0.0
        %vm3024 = vcmp.eq.f32.partialorder %v2960, 0.0
        %vm3025 = vcmp.eq.f32.partialorder %v2961, 0.0
        %v3026 = vsel %vm2994, 1.0, %v2930
        %v3027 = vsel %vm2995, 1.0, %v2931
        %v3028 = vsel %vm2996, 1.0, %v2932
        %v3029 = vsel %vm2997, 1.0, %v2933
        %v3030 = vsel %vm2998, 1.0, %v2934
        %v3031 = vsel %vm2999, 1.0, %v2935
        %v3032 = vsel %vm3000, 1.0, %v2936
        %v3033 = vsel %vm3001, 1.0, %v2937
        %v3034 = vsel %vm3002, 1.0, %v2938
        %v3035 = vsel %vm3003, 1.0, %v2939
        %v3036 = vsel %vm3004, 1.0, %v2940
        %v3037 = vsel %vm3005, 1.0, %v2941
        %v3038 = vsel %vm3006, 1.0, %v2942
        %v3039 = vsel %vm3007, 1.0, %v2943
        %v3040 = vsel %vm3008, 1.0, %v2944
        %v3041 = vsel %vm3009, 1.0, %v2945
        %v3042 = vsel %vm3010, 1.0, %v2946
        %v3043 = vsel %vm3011, 1.0, %v2947
        %v3044 = vsel %vm3012, 1.0, %v2948
        %v3045 = vsel %vm3013, 1.0, %v2949
        %v3046 = vsel %vm3014, 1.0, %v2950
        %v3047 = vsel %vm3015, 1.0, %v2951
        %v3048 = vsel %vm3016, 1.0, %v2952
        %v3049 = vsel %vm3017, 1.0, %v2953
        %v3050 = vsel %vm3018, 1.0, %v2954
        %v3051 = vsel %vm3019, 1.0, %v2955
        %v3052 = vsel %vm3020, 1.0, %v2956
        %v3053 = vsel %vm3021, 1.0, %v2957
        %v3054 = vsel %vm3022, 1.0, %v2958
        %v3055 = vsel %vm3023, 1.0, %v2959
        %v3056 = vsel %vm3024, 1.0, %v2960
        %v3057 = vsel %vm3025, 1.0, %v2961
        %v3058 = vrcp.pop %v3026
        %v3059 = vrcp.pop %v3027
        %v3060 = vrcp.pop %v3028
        %v3061 = vrcp.pop %v3029
        %v3062 = vrcp.pop %v3030
        %v3063 = vrcp.pop %v3031
        %v3064 = vrcp.pop %v3032
        %v3065 = vrcp.pop %v3033
        %v3066 = vrcp.pop %v3034
        %v3067 = vrcp.pop %v3035
        %v3068 = vrcp.pop %v3036
        %v3069 = vrcp.pop %v3037
        %v3070 = vrcp.pop %v3038
        %v3071 = vrcp.pop %v3039
        %v3072 = vrcp.pop %v3040
        %v3073 = vrcp.pop %v3041
        %v3074 = vrcp.pop %v3042
        %v3075 = vrcp.pop %v3043
        %v3076 = vrcp.pop %v3044
        %v3077 = vrcp.pop %v3045
        %v3078 = vrcp.pop %v3046
        %v3079 = vrcp.pop %v3047
        %v3080 = vrcp.pop %v3048
        %v3081 = vrcp.pop %v3049
        %v3082 = vrcp.pop %v3050
        %v3083 = vrcp.pop %v3051
        %v3084 = vrcp.pop %v3052
        %v3085 = vrcp.pop %v3053
        %v3086 = vrcp.pop %v3054
        %v3087 = vrcp.pop %v3055
        %v3088 = vrcp.pop %v3056
        %v3089 = vrcp.pop %v3057
        %v3090 = vmul.f32 %v2962, %v3058
        %v3091 = vmul.f32 %v2963, %v3059
        %v3092 = vmul.f32 %v2964, %v3060
        %v3093 = vmul.f32 %v2965, %v3061
        %v3094 = vmul.f32 %v2966, %v3062
        %v3095 = vmul.f32 %v2967, %v3063
        %v3096 = vmul.f32 %v2968, %v3064
        %v3097 = vmul.f32 %v2969, %v3065
        %v3098 = vmul.f32 %v2970, %v3066
        %v3099 = vmul.f32 %v2971, %v3067
        %v3100 = vmul.f32 %v2972, %v3068
        %v3101 = vmul.f32 %v2973, %v3069
        %v3102 = vmul.f32 %v2974, %v3070
        %v3103 = vmul.f32 %v2975, %v3071
        %v3104 = vmul.f32 %v2976, %v3072
        %v3105 = vmul.f32 %v2977, %v3073
        %v3106 = vmul.f32 %v2978, %v3074
        %v3107 = vmul.f32 %v2979, %v3075
        %v3108 = vmul.f32 %v2980, %v3076
        %v3109 = vmul.f32 %v2981, %v3077
        %v3110 = vmul.f32 %v2982, %v3078
        %v3111 = vmul.f32 %v2983, %v3079
        %v3112 = vmul.f32 %v2984, %v3080
        %v3113 = vmul.f32 %v2985, %v3081
        %v3114 = vmul.f32 %v2986, %v3082
        %v3115 = vmul.f32 %v2987, %v3083
        %v3116 = vmul.f32 %v2988, %v3084
        %v3117 = vmul.f32 %v2989, %v3085
        %v3118 = vmul.f32 %v2990, %v3086
        %v3119 = vmul.f32 %v2991, %v3087
        %v3120 = vmul.f32 %v2992, %v3088
        %v3121 = vmul.f32 %v2993, %v3089
        %v3122 = vmul.f32 %v3090, %v3090
        %v3123 = vmul.f32 %v3091, %v3091
        %v3124 = vmul.f32 %v3092, %v3092
        %v3125 = vmul.f32 %v3093, %v3093
        %v3126 = vmul.f32 %v3094, %v3094
        %v3127 = vmul.f32 %v3095, %v3095
        %v3128 = vmul.f32 %v3096, %v3096
        %v3129 = vmul.f32 %v3097, %v3097
        %v3130 = vmul.f32 %v3098, %v3098
        %v3131 = vmul.f32 %v3099, %v3099
        %v3132 = vmul.f32 %v3100, %v3100
        %v3133 = vmul.f32 %v3101, %v3101
        %v3134 = vmul.f32 %v3102, %v3102
        %v3135 = vmul.f32 %v3103, %v3103
        %v3136 = vmul.f32 %v3104, %v3104
        %v3137 = vmul.f32 %v3105, %v3105
        %v3138 = vmul.f32 %v3106, %v3106
        %v3139 = vmul.f32 %v3107, %v3107
        %v3140 = vmul.f32 %v3108, %v3108
        %v3141 = vmul.f32 %v3109, %v3109
        %v3142 = vmul.f32 %v3110, %v3110
        %v3143 = vmul.f32 %v3111, %v3111
        %v3144 = vmul.f32 %v3112, %v3112
        %v3145 = vmul.f32 %v3113, %v3113
        %v3146 = vmul.f32 %v3114, %v3114
        %v3147 = vmul.f32 %v3115, %v3115
        %v3148 = vmul.f32 %v3116, %v3116
        %v3149 = vmul.f32 %v3117, %v3117
        %v3150 = vmul.f32 %v3118, %v3118
        %v3151 = vmul.f32 %v3119, %v3119
        %v3152 = vmul.f32 %v3120, %v3120
        %v3153 = vmul.f32 %v3121, %v3121
        %v3154 = vmul.f32 %v3122, 0.0208351
        %v3155 = vmul.f32 %v3123, 0.0208351
        %v3156 = vmul.f32 %v3124, 0.0208351
        %v3157 = vmul.f32 %v3125, 0.0208351
        %v3158 = vmul.f32 %v3126, 0.0208351
        %v3159 = vmul.f32 %v3127, 0.0208351
        %v3160 = vmul.f32 %v3128, 0.0208351
        %v3161 = vmul.f32 %v3129, 0.0208351
        %v3162 = vmul.f32 %v3130, 0.0208351
        %v3163 = vmul.f32 %v3131, 0.0208351
        %v3164 = vmul.f32 %v3132, 0.0208351
        %v3165 = vmul.f32 %v3133, 0.0208351
        %v3166 = vmul.f32 %v3134, 0.0208351
        %v3167 = vmul.f32 %v3135, 0.0208351
        %v3168 = vmul.f32 %v3136, 0.0208351
        %v3169 = vmul.f32 %v3137, 0.0208351
        %v3170 = vmul.f32 %v3138, 0.0208351
        %v3171 = vmul.f32 %v3139, 0.0208351
        %v3172 = vmul.f32 %v3140, 0.0208351
        %v3173 = vmul.f32 %v3141, 0.0208351
        %v3174 = vmul.f32 %v3142, 0.0208351
        %v3175 = vmul.f32 %v3143, 0.0208351
        %v3176 = vmul.f32 %v3144, 0.0208351
        %v3177 = vmul.f32 %v3145, 0.0208351
        %v3178 = vmul.f32 %v3146, 0.0208351
        %v3179 = vmul.f32 %v3147, 0.0208351
        %v3180 = vmul.f32 %v3148, 0.0208351
        %v3181 = vmul.f32 %v3149, 0.0208351
        %v3182 = vmul.f32 %v3150, 0.0208351
        %v3183 = vmul.f32 %v3151, 0.0208351
        %v3184 = vmul.f32 %v3152, 0.0208351
        %v3185 = vmul.f32 %v3153, 0.0208351
        %v3186 = vsub.f32 %v3154, 0.085133
        %v3187 = vsub.f32 %v3155, 0.085133
        %v3188 = vsub.f32 %v3156, 0.085133
        %v3189 = vsub.f32 %v3157, 0.085133
        %v3190 = vsub.f32 %v3158, 0.085133
        %v3191 = vsub.f32 %v3159, 0.085133
        %v3192 = vsub.f32 %v3160, 0.085133
        %v3193 = vsub.f32 %v3161, 0.085133
        %v3194 = vsub.f32 %v3162, 0.085133
        %v3195 = vsub.f32 %v3163, 0.085133
        %v3196 = vsub.f32 %v3164, 0.085133
        %v3197 = vsub.f32 %v3165, 0.085133
        %v3198 = vsub.f32 %v3166, 0.085133
        %v3199 = vsub.f32 %v3167, 0.085133
        %v3200 = vsub.f32 %v3168, 0.085133
        %v3201 = vsub.f32 %v3169, 0.085133
        %v3202 = vsub.f32 %v3170, 0.085133
        %v3203 = vsub.f32 %v3171, 0.085133
        %v3204 = vsub.f32 %v3172, 0.085133
        %v3205 = vsub.f32 %v3173, 0.085133
        %v3206 = vsub.f32 %v3174, 0.085133
        %v3207 = vsub.f32 %v3175, 0.085133
        %v3208 = vsub.f32 %v3176, 0.085133
        %v3209 = vsub.f32 %v3177, 0.085133
        %v3210 = vsub.f32 %v3178, 0.085133
        %v3211 = vsub.f32 %v3179, 0.085133
        %v3212 = vsub.f32 %v3180, 0.085133
        %v3213 = vsub.f32 %v3181, 0.085133
        %v3214 = vsub.f32 %v3182, 0.085133
        %v3215 = vsub.f32 %v3183, 0.085133
        %v3216 = vsub.f32 %v3184, 0.085133
        %v3217 = vsub.f32 %v3185, 0.085133
        %v3218 = vmul.f32 %v3186, %v3122
        %v3219 = vmul.f32 %v3187, %v3123
        %v3220 = vmul.f32 %v3188, %v3124
        %v3221 = vmul.f32 %v3189, %v3125
        %v3222 = vmul.f32 %v3190, %v3126
        %v3223 = vmul.f32 %v3191, %v3127
        %v3224 = vmul.f32 %v3192, %v3128
        %v3225 = vmul.f32 %v3193, %v3129
        %v3226 = vmul.f32 %v3194, %v3130
        %v3227 = vmul.f32 %v3195, %v3131
        %v3228 = vmul.f32 %v3196, %v3132
        %v3229 = vmul.f32 %v3197, %v3133
        %v3230 = vmul.f32 %v3198, %v3134
        %v3231 = vmul.f32 %v3199, %v3135
        %v3232 = vmul.f32 %v3200, %v3136
        %v3233 = vmul.f32 %v3201, %v3137
        %v3234 = vmul.f32 %v3202, %v3138
        %v3235 = vmul.f32 %v3203, %v3139
        %v3236 = vmul.f32 %v3204, %v3140
        %v3237 = vmul.f32 %v3205, %v3141
        %v3238 = vmul.f32 %v3206, %v3142
        %v3239 = vmul.f32 %v3207, %v3143
        %v3240 = vmul.f32 %v3208, %v3144
        %v3241 = vmul.f32 %v3209, %v3145
        %v3242 = vmul.f32 %v3210, %v3146
        %v3243 = vmul.f32 %v3211, %v3147
        %v3244 = vmul.f32 %v3212, %v3148
        %v3245 = vmul.f32 %v3213, %v3149
        %v3246 = vmul.f32 %v3214, %v3150
        %v3247 = vmul.f32 %v3215, %v3151
        %v3248 = vmul.f32 %v3216, %v3152
        %v3249 = vmul.f32 %v3217, %v3153
        %v3250 = vadd.f32 %v3218, 0.180141
        %v3251 = vadd.f32 %v3219, 0.180141
        %v3252 = vadd.f32 %v3220, 0.180141
        %v3253 = vadd.f32 %v3221, 0.180141
        %v3254 = vadd.f32 %v3222, 0.180141
        %v3255 = vadd.f32 %v3223, 0.180141
        %v3256 = vadd.f32 %v3224, 0.180141
        %v3257 = vadd.f32 %v3225, 0.180141
        %v3258 = vadd.f32 %v3226, 0.180141
        %v3259 = vadd.f32 %v3227, 0.180141
        %v3260 = vadd.f32 %v3228, 0.180141
        %v3261 = vadd.f32 %v3229, 0.180141
        %v3262 = vadd.f32 %v3230, 0.180141
        %v3263 = vadd.f32 %v3231, 0.180141
        %v3264 = vadd.f32 %v3232, 0.180141
        %v3265 = vadd.f32 %v3233, 0.180141
        %v3266 = vadd.f32 %v3234, 0.180141
        %v3267 = vadd.f32 %v3235, 0.180141
        %v3268 = vadd.f32 %v3236, 0.180141
        %v3269 = vadd.f32 %v3237, 0.180141
        %v3270 = vadd.f32 %v3238, 0.180141
        %v3271 = vadd.f32 %v3239, 0.180141
        %v3272 = vadd.f32 %v3240, 0.180141
        %v3273 = vadd.f32 %v3241, 0.180141
        %v3274 = vadd.f32 %v3242, 0.180141
        %v3275 = vadd.f32 %v3243, 0.180141
        %v3276 = vadd.f32 %v3244, 0.180141
        %v3277 = vadd.f32 %v3245, 0.180141
        %v3278 = vadd.f32 %v3246, 0.180141
        %v3279 = vadd.f32 %v3247, 0.180141
        %v3280 = vadd.f32 %v3248, 0.180141
        %v3281 = vadd.f32 %v3249, 0.180141
        %v3282 = vmul.f32 %v3250, %v3122
        %v3283 = vmul.f32 %v3251, %v3123
        %v3284 = vmul.f32 %v3252, %v3124
        %v3285 = vmul.f32 %v3253, %v3125
        %v3286 = vmul.f32 %v3254, %v3126
        %v3287 = vmul.f32 %v3255, %v3127
        %v3288 = vmul.f32 %v3256, %v3128
        %v3289 = vmul.f32 %v3257, %v3129
        %v3290 = vmul.f32 %v3258, %v3130
        %v3291 = vmul.f32 %v3259, %v3131
        %v3292 = vmul.f32 %v3260, %v3132
        %v3293 = vmul.f32 %v3261, %v3133
        %v3294 = vmul.f32 %v3262, %v3134
        %v3295 = vmul.f32 %v3263, %v3135
        %v3296 = vmul.f32 %v3264, %v3136
        %v3297 = vmul.f32 %v3265, %v3137
        %v3298 = vmul.f32 %v3266, %v3138
        %v3299 = vmul.f32 %v3267, %v3139
        %v3300 = vmul.f32 %v3268, %v3140
        %v3301 = vmul.f32 %v3269, %v3141
        %v3302 = vmul.f32 %v3270, %v3142
        %v3303 = vmul.f32 %v3271, %v3143
        %v3304 = vmul.f32 %v3272, %v3144
        %v3305 = vmul.f32 %v3273, %v3145
        %v3306 = vmul.f32 %v3274, %v3146
        %v3307 = vmul.f32 %v3275, %v3147
        %v3308 = vmul.f32 %v3276, %v3148
        %v3309 = vmul.f32 %v3277, %v3149
        %v3310 = vmul.f32 %v3278, %v3150
        %v3311 = vmul.f32 %v3279, %v3151
        %v3312 = vmul.f32 %v3280, %v3152
        %v3313 = vmul.f32 %v3281, %v3153
        %v3314 = vsub.f32 %v3282, 0.3302995
        %v3315 = vsub.f32 %v3283, 0.3302995
        %v3316 = vsub.f32 %v3284, 0.3302995
        %v3317 = vsub.f32 %v3285, 0.3302995
        %v3318 = vsub.f32 %v3286, 0.3302995
        %v3319 = vsub.f32 %v3287, 0.3302995
        %v3320 = vsub.f32 %v3288, 0.3302995
        %v3321 = vsub.f32 %v3289, 0.3302995
        %v3322 = vsub.f32 %v3290, 0.3302995
        %v3323 = vsub.f32 %v3291, 0.3302995
        %v3324 = vsub.f32 %v3292, 0.3302995
        %v3325 = vsub.f32 %v3293, 0.3302995
        %v3326 = vsub.f32 %v3294, 0.3302995
        %v3327 = vsub.f32 %v3295, 0.3302995
        %v3328 = vsub.f32 %v3296, 0.3302995
        %v3329 = vsub.f32 %v3297, 0.3302995
        %v3330 = vsub.f32 %v3298, 0.3302995
        %v3331 = vsub.f32 %v3299, 0.3302995
        %v3332 = vsub.f32 %v3300, 0.3302995
        %v3333 = vsub.f32 %v3301, 0.3302995
        %v3334 = vsub.f32 %v3302, 0.3302995
        %v3335 = vsub.f32 %v3303, 0.3302995
        %v3336 = vsub.f32 %v3304, 0.3302995
        %v3337 = vsub.f32 %v3305, 0.3302995
        %v3338 = vsub.f32 %v3306, 0.3302995
        %v3339 = vsub.f32 %v3307, 0.3302995
        %v3340 = vsub.f32 %v3308, 0.3302995
        %v3341 = vsub.f32 %v3309, 0.3302995
        %v3342 = vsub.f32 %v3310, 0.3302995
        %v3343 = vsub.f32 %v3311, 0.3302995
        %v3344 = vsub.f32 %v3312, 0.3302995
        %v3345 = vsub.f32 %v3313, 0.3302995
        %v3346 = vmul.f32 %v3314, %v3122
        %v3347 = vmul.f32 %v3315, %v3123
        %v3348 = vmul.f32 %v3316, %v3124
        %v3349 = vmul.f32 %v3317, %v3125
        %v3350 = vmul.f32 %v3318, %v3126
        %v3351 = vmul.f32 %v3319, %v3127
        %v3352 = vmul.f32 %v3320, %v3128
        %v3353 = vmul.f32 %v3321, %v3129
        %v3354 = vmul.f32 %v3322, %v3130
        %v3355 = vmul.f32 %v3323, %v3131
        %v3356 = vmul.f32 %v3324, %v3132
        %v3357 = vmul.f32 %v3325, %v3133
        %v3358 = vmul.f32 %v3326, %v3134
        %v3359 = vmul.f32 %v3327, %v3135
        %v3360 = vmul.f32 %v3328, %v3136
        %v3361 = vmul.f32 %v3329, %v3137
        %v3362 = vmul.f32 %v3330, %v3138
        %v3363 = vmul.f32 %v3331, %v3139
        %v3364 = vmul.f32 %v3332, %v3140
        %v3365 = vmul.f32 %v3333, %v3141
        %v3366 = vmul.f32 %v3334, %v3142
        %v3367 = vmul.f32 %v3335, %v3143
        %v3368 = vmul.f32 %v3336, %v3144
        %v3369 = vmul.f32 %v3337, %v3145
        %v3370 = vmul.f32 %v3338, %v3146
        %v3371 = vmul.f32 %v3339, %v3147
        %v3372 = vmul.f32 %v3340, %v3148
        %v3373 = vmul.f32 %v3341, %v3149
        %v3374 = vmul.f32 %v3342, %v3150
        %v3375 = vmul.f32 %v3343, %v3151
        %v3376 = vmul.f32 %v3344, %v3152
        %v3377 = vmul.f32 %v3345, %v3153
        %v3378 = vadd.f32 %v3346, 0.999866
        %v3379 = vadd.f32 %v3347, 0.999866
        %v3380 = vadd.f32 %v3348, 0.999866
        %v3381 = vadd.f32 %v3349, 0.999866
        %v3382 = vadd.f32 %v3350, 0.999866
        %v3383 = vadd.f32 %v3351, 0.999866
        %v3384 = vadd.f32 %v3352, 0.999866
        %v3385 = vadd.f32 %v3353, 0.999866
        %v3386 = vadd.f32 %v3354, 0.999866
        %v3387 = vadd.f32 %v3355, 0.999866
        %v3388 = vadd.f32 %v3356, 0.999866
        %v3389 = vadd.f32 %v3357, 0.999866
        %v3390 = vadd.f32 %v3358, 0.999866
        %v3391 = vadd.f32 %v3359, 0.999866
        %v3392 = vadd.f32 %v3360, 0.999866
        %v3393 = vadd.f32 %v3361, 0.999866
        %v3394 = vadd.f32 %v3362, 0.999866
        %v3395 = vadd.f32 %v3363, 0.999866
        %v3396 = vadd.f32 %v3364, 0.999866
        %v3397 = vadd.f32 %v3365, 0.999866
        %v3398 = vadd.f32 %v3366, 0.999866
        %v3399 = vadd.f32 %v3367, 0.999866
        %v3400 = vadd.f32 %v3368, 0.999866
        %v3401 = vadd.f32 %v3369, 0.999866
        %v3402 = vadd.f32 %v3370, 0.999866
        %v3403 = vadd.f32 %v3371, 0.999866
        %v3404 = vadd.f32 %v3372, 0.999866
        %v3405 = vadd.f32 %v3373, 0.999866
        %v3406 = vadd.f32 %v3374, 0.999866
        %v3407 = vadd.f32 %v3375, 0.999866
        %v3408 = vadd.f32 %v3376, 0.999866
        %v3409 = vadd.f32 %v3377, 0.999866
        %v3410 = vmul.f32 %v3378, %v3090
        %v3411 = vmul.f32 %v3379, %v3091
        %v3412 = vmul.f32 %v3380, %v3092
        %v3413 = vmul.f32 %v3381, %v3093
        %v3414 = vmul.f32 %v3382, %v3094
        %v3415 = vmul.f32 %v3383, %v3095
        %v3416 = vmul.f32 %v3384, %v3096
        %v3417 = vmul.f32 %v3385, %v3097
        %v3418 = vmul.f32 %v3386, %v3098
        %v3419 = vmul.f32 %v3387, %v3099
        %v3420 = vmul.f32 %v3388, %v3100
        %v3421 = vmul.f32 %v3389, %v3101
        %v3422 = vmul.f32 %v3390, %v3102
        %v3423 = vmul.f32 %v3391, %v3103
        %v3424 = vmul.f32 %v3392, %v3104
        %v3425 = vmul.f32 %v3393, %v3105
        %v3426 = vmul.f32 %v3394, %v3106
        %v3427 = vmul.f32 %v3395, %v3107
        %v3428 = vmul.f32 %v3396, %v3108
        %v3429 = vmul.f32 %v3397, %v3109
        %v3430 = vmul.f32 %v3398, %v3110
        %v3431 = vmul.f32 %v3399, %v3111
        %v3432 = vmul.f32 %v3400, %v3112
        %v3433 = vmul.f32 %v3401, %v3113
        %v3434 = vmul.f32 %v3402, %v3114
        %v3435 = vmul.f32 %v3403, %v3115
        %v3436 = vmul.f32 %v3404, %v3116
        %v3437 = vmul.f32 %v3405, %v3117
        %v3438 = vmul.f32 %v3406, %v3118
        %v3439 = vmul.f32 %v3407, %v3119
        %v3440 = vmul.f32 %v3408, %v3120
        %v3441 = vmul.f32 %v3409, %v3121
        %vm3442 = vcmp.gt.f32.partialorder %v2898, %v2866
        %vm3443 = vcmp.gt.f32.partialorder %v2899, %v2867
        %vm3444 = vcmp.gt.f32.partialorder %v2900, %v2868
        %vm3445 = vcmp.gt.f32.partialorder %v2901, %v2869
        %vm3446 = vcmp.gt.f32.partialorder %v2902, %v2870
        %vm3447 = vcmp.gt.f32.partialorder %v2903, %v2871
        %vm3448 = vcmp.gt.f32.partialorder %v2904, %v2872
        %vm3449 = vcmp.gt.f32.partialorder %v2905, %v2873
        %vm3450 = vcmp.gt.f32.partialorder %v2906, %v2874
        %vm3451 = vcmp.gt.f32.partialorder %v2907, %v2875
        %vm3452 = vcmp.gt.f32.partialorder %v2908, %v2876
        %vm3453 = vcmp.gt.f32.partialorder %v2909, %v2877
        %vm3454 = vcmp.gt.f32.partialorder %v2910, %v2878
        %vm3455 = vcmp.gt.f32.partialorder %v2911, %v2879
        %vm3456 = vcmp.gt.f32.partialorder %v2912, %v2880
        %vm3457 = vcmp.gt.f32.partialorder %v2913, %v2881
        %vm3458 = vcmp.gt.f32.partialorder %v2914, %v2882
        %vm3459 = vcmp.gt.f32.partialorder %v2915, %v2883
        %vm3460 = vcmp.gt.f32.partialorder %v2916, %v2884
        %vm3461 = vcmp.gt.f32.partialorder %v2917, %v2885
        %vm3462 = vcmp.gt.f32.partialorder %v2918, %v2886
        %vm3463 = vcmp.gt.f32.partialorder %v2919, %v2887
        %vm3464 = vcmp.gt.f32.partialorder %v2920, %v2888
        %vm3465 = vcmp.gt.f32.partialorder %v2921, %v2889
        %vm3466 = vcmp.gt.f32.partialorder %v2922, %v2890
        %vm3467 = vcmp.gt.f32.partialorder %v2923, %v2891
        %vm3468 = vcmp.gt.f32.partialorder %v2924, %v2892
        %vm3469 = vcmp.gt.f32.partialorder %v2925, %v2893
        %vm3470 = vcmp.gt.f32.partialorder %v2926, %v2894
        %vm3471 = vcmp.gt.f32.partialorder %v2927, %v2895
        %vm3472 = vcmp.gt.f32.partialorder %v2928, %v2896
        %vm3473 = vcmp.gt.f32.partialorder %v2929, %v2897
        %v3474 = vsub.f32 1.5707964, %v3410
        %v3475 = vsub.f32 1.5707964, %v3411
        %v3476 = vsub.f32 1.5707964, %v3412
        %v3477 = vsub.f32 1.5707964, %v3413
        %v3478 = vsub.f32 1.5707964, %v3414
        %v3479 = vsub.f32 1.5707964, %v3415
        %v3480 = vsub.f32 1.5707964, %v3416
        %v3481 = vsub.f32 1.5707964, %v3417
        %v3482 = vsub.f32 1.5707964, %v3418
        %v3483 = vsub.f32 1.5707964, %v3419
        %v3484 = vsub.f32 1.5707964, %v3420
        %v3485 = vsub.f32 1.5707964, %v3421
        %v3486 = vsub.f32 1.5707964, %v3422
        %v3487 = vsub.f32 1.5707964, %v3423
        %v3488 = vsub.f32 1.5707964, %v3424
        %v3489 = vsub.f32 1.5707964, %v3425
        %v3490 = vsub.f32 1.5707964, %v3426
        %v3491 = vsub.f32 1.5707964, %v3427
        %v3492 = vsub.f32 1.5707964, %v3428
        %v3493 = vsub.f32 1.5707964, %v3429
        %v3494 = vsub.f32 1.5707964, %v3430
        %v3495 = vsub.f32 1.5707964, %v3431
        %v3496 = vsub.f32 1.5707964, %v3432
        %v3497 = vsub.f32 1.5707964, %v3433
        %v3498 = vsub.f32 1.5707964, %v3434
        %v3499 = vsub.f32 1.5707964, %v3435
        %v3500 = vsub.f32 1.5707964, %v3436
        %v3501 = vsub.f32 1.5707964, %v3437
        %v3502 = vsub.f32 1.5707964, %v3438
        %v3503 = vsub.f32 1.5707964, %v3439
        %v3504 = vsub.f32 1.5707964, %v3440
        %v3505 = vsub.f32 1.5707964, %v3441
        %v3506 = vsel %vm3442, %v3474, %v3410
        %v3507 = vsel %vm3443, %v3475, %v3411
        %v3508 = vsel %vm3444, %v3476, %v3412
        %v3509 = vsel %vm3445, %v3477, %v3413
        %v3510 = vsel %vm3446, %v3478, %v3414
        %v3511 = vsel %vm3447, %v3479, %v3415
        %v3512 = vsel %vm3448, %v3480, %v3416
        %v3513 = vsel %vm3449, %v3481, %v3417
        %v3514 = vsel %vm3450, %v3482, %v3418
        %v3515 = vsel %vm3451, %v3483, %v3419
        %v3516 = vsel %vm3452, %v3484, %v3420
        %v3517 = vsel %vm3453, %v3485, %v3421
        %v3518 = vsel %vm3454, %v3486, %v3422
        %v3519 = vsel %vm3455, %v3487, %v3423
        %v3520 = vsel %vm3456, %v3488, %v3424
        %v3521 = vsel %vm3457, %v3489, %v3425
        %v3522 = vsel %vm3458, %v3490, %v3426
        %v3523 = vsel %vm3459, %v3491, %v3427
        %v3524 = vsel %vm3460, %v3492, %v3428
        %v3525 = vsel %vm3461, %v3493, %v3429
        %v3526 = vsel %vm3462, %v3494, %v3430
        %v3527 = vsel %vm3463, %v3495, %v3431
        %v3528 = vsel %vm3464, %v3496, %v3432
        %v3529 = vsel %vm3465, %v3497, %v3433
        %v3530 = vsel %vm3466, %v3498, %v3434
        %v3531 = vsel %vm3467, %v3499, %v3435
        %v3532 = vsel %vm3468, %v3500, %v3436
        %v3533 = vsel %vm3469, %v3501, %v3437
        %v3534 = vsel %vm3470, %v3502, %v3438
        %v3535 = vsel %vm3471, %v3503, %v3439
        %v3536 = vsel %vm3472, %v3504, %v3440
        %v3537 = vsel %vm3473, %v3505, %v3441
        %vm3538 = vcmp.lt.f32.partialorder %v819, 0.0
        %vm3539 = vcmp.lt.f32.partialorder %v823, 0.0
        %vm3540 = vcmp.lt.f32.partialorder %v829, 0.0
        %vm3541 = vcmp.lt.f32.partialorder %v833, 0.0
        %vm3542 = vcmp.lt.f32.partialorder %v839, 0.0
        %vm3543 = vcmp.lt.f32.partialorder %v843, 0.0
        %vm3544 = vcmp.lt.f32.partialorder %v849, 0.0
        %vm3545 = vcmp.lt.f32.partialorder %v853, 0.0
        %vm3546 = vcmp.lt.f32.partialorder %v859, 0.0
        %vm3547 = vcmp.lt.f32.partialorder %v863, 0.0
        %vm3548 = vcmp.lt.f32.partialorder %v869, 0.0
        %vm3549 = vcmp.lt.f32.partialorder %v873, 0.0
        %vm3550 = vcmp.lt.f32.partialorder %v879, 0.0
        %vm3551 = vcmp.lt.f32.partialorder %v883, 0.0
        %vm3552 = vcmp.lt.f32.partialorder %v889, 0.0
        %vm3553 = vcmp.lt.f32.partialorder %v893, 0.0
        %vm3554 = vcmp.lt.f32.partialorder %v899, 0.0
        %vm3555 = vcmp.lt.f32.partialorder %v903, 0.0
        %vm3556 = vcmp.lt.f32.partialorder %v909, 0.0
        %vm3557 = vcmp.lt.f32.partialorder %v913, 0.0
        %vm3558 = vcmp.lt.f32.partialorder %v919, 0.0
        %vm3559 = vcmp.lt.f32.partialorder %v923, 0.0
        %vm3560 = vcmp.lt.f32.partialorder %v929, 0.0
        %vm3561 = vcmp.lt.f32.partialorder %v933, 0.0
        %vm3562 = vcmp.lt.f32.partialorder %v939, 0.0
        %vm3563 = vcmp.lt.f32.partialorder %v943, 0.0
        %vm3564 = vcmp.lt.f32.partialorder %v949, 0.0
        %vm3565 = vcmp.lt.f32.partialorder %v953, 0.0
        %vm3566 = vcmp.lt.f32.partialorder %v959, 0.0
        %vm3567 = vcmp.lt.f32.partialorder %v963, 0.0
        %vm3568 = vcmp.lt.f32.partialorder %v969, 0.0
        %vm3569 = vcmp.lt.f32.partialorder %v973, 0.0
        %v3570 = vsub.f32 3.1415927, %v3506
        %v3571 = vsub.f32 3.1415927, %v3507
        %v3572 = vsub.f32 3.1415927, %v3508
        %v3573 = vsub.f32 3.1415927, %v3509
        %v3574 = vsub.f32 3.1415927, %v3510
        %v3575 = vsub.f32 3.1415927, %v3511
        %v3576 = vsub.f32 3.1415927, %v3512
        %v3577 = vsub.f32 3.1415927, %v3513
        %v3578 = vsub.f32 3.1415927, %v3514
        %v3579 = vsub.f32 3.1415927, %v3515
        %v3580 = vsub.f32 3.1415927, %v3516
        %v3581 = vsub.f32 3.1415927, %v3517
        %v3582 = vsub.f32 3.1415927, %v3518
        %v3583 = vsub.f32 3.1415927, %v3519
        %v3584 = vsub.f32 3.1415927, %v3520
        %v3585 = vsub.f32 3.1415927, %v3521
        %v3586 = vsub.f32 3.1415927, %v3522
        %v3587 = vsub.f32 3.1415927, %v3523
        %v3588 = vsub.f32 3.1415927, %v3524
        %v3589 = vsub.f32 3.1415927, %v3525
        %v3590 = vsub.f32 3.1415927, %v3526
        %v3591 = vsub.f32 3.1415927, %v3527
        %v3592 = vsub.f32 3.1415927, %v3528
        %v3593 = vsub.f32 3.1415927, %v3529
        %v3594 = vsub.f32 3.1415927, %v3530
        %v3595 = vsub.f32 3.1415927, %v3531
        %v3596 = vsub.f32 3.1415927, %v3532
        %v3597 = vsub.f32 3.1415927, %v3533
        %v3598 = vsub.f32 3.1415927, %v3534
        %v3599 = vsub.f32 3.1415927, %v3535
        %v3600 = vsub.f32 3.1415927, %v3536
        %v3601 = vsub.f32 3.1415927, %v3537
        %v3602 = vsel %vm3538, %v3570, %v3506
        %v3603 = vsel %vm3539, %v3571, %v3507
        %v3604 = vsel %vm3540, %v3572, %v3508
        %v3605 = vsel %vm3541, %v3573, %v3509
        %v3606 = vsel %vm3542, %v3574, %v3510
        %v3607 = vsel %vm3543, %v3575, %v3511
        %v3608 = vsel %vm3544, %v3576, %v3512
        %v3609 = vsel %vm3545, %v3577, %v3513
        %v3610 = vsel %vm3546, %v3578, %v3514
        %v3611 = vsel %vm3547, %v3579, %v3515
        %v3612 = vsel %vm3548, %v3580, %v3516
        %v3613 = vsel %vm3549, %v3581, %v3517
        %v3614 = vsel %vm3550, %v3582, %v3518
        %v3615 = vsel %vm3551, %v3583, %v3519
        %v3616 = vsel %vm3552, %v3584, %v3520
        %v3617 = vsel %vm3553, %v3585, %v3521
        %v3618 = vsel %vm3554, %v3586, %v3522
        %v3619 = vsel %vm3555, %v3587, %v3523
        %v3620 = vsel %vm3556, %v3588, %v3524
        %v3621 = vsel %vm3557, %v3589, %v3525
        %v3622 = vsel %vm3558, %v3590, %v3526
        %v3623 = vsel %vm3559, %v3591, %v3527
        %v3624 = vsel %vm3560, %v3592, %v3528
        %v3625 = vsel %vm3561, %v3593, %v3529
        %v3626 = vsel %vm3562, %v3594, %v3530
        %v3627 = vsel %vm3563, %v3595, %v3531
        %v3628 = vsel %vm3564, %v3596, %v3532
        %v3629 = vsel %vm3565, %v3597, %v3533
        %v3630 = vsel %vm3566, %v3598, %v3534
        %v3631 = vsel %vm3567, %v3599, %v3535
        %v3632 = vsel %vm3568, %v3600, %v3536
        %v3633 = vsel %vm3569, %v3601, %v3537
        %v3666 = vand.u32 %v3602, 2147483647
        %v3667 = vand.u32 %v3603, 2147483647
        %v3668 = vand.u32 %v3604, 2147483647
        %v3669 = vand.u32 %v3605, 2147483647
        %v3670 = vand.u32 %v3606, 2147483647
        %v3671 = vand.u32 %v3607, 2147483647
        %v3672 = vand.u32 %v3608, 2147483647
        %v3673 = vand.u32 %v3609, 2147483647
        %v3674 = vand.u32 %v3610, 2147483647
        %v3675 = vand.u32 %v3611, 2147483647
        %v3676 = vand.u32 %v3612, 2147483647
        %v3677 = vand.u32 %v3613, 2147483647
        %v3678 = vand.u32 %v3614, 2147483647
        %v3679 = vand.u32 %v3615, 2147483647
        %v3680 = vand.u32 %v3616, 2147483647
        %v3681 = vand.u32 %v3617, 2147483647
        %v3682 = vand.u32 %v3618, 2147483647
        %v3683 = vand.u32 %v3619, 2147483647
        %v3684 = vand.u32 %v3620, 2147483647
        %v3685 = vand.u32 %v3621, 2147483647
        %v3686 = vand.u32 %v3622, 2147483647
        %v3687 = vand.u32 %v3623, 2147483647
        %v3688 = vand.u32 %v3624, 2147483647
        %v3689 = vand.u32 %v3625, 2147483647
        %v3690 = vand.u32 %v3626, 2147483647
        %v3691 = vand.u32 %v3627, 2147483647
        %v3692 = vand.u32 %v3628, 2147483647
        %v3693 = vand.u32 %v3629, 2147483647
        %v3694 = vand.u32 %v3630, 2147483647
        %v3695 = vand.u32 %v3631, 2147483647
        %v3696 = vand.u32 %v3632, 2147483647
        %v3697 = vand.u32 %v3633, 2147483647
        %v3730 = vand.u32 %v1012, 2147483648
        %v3731 = vand.u32 %v1016, 2147483648
        %v3732 = vand.u32 %v1022, 2147483648
        %v3733 = vand.u32 %v1026, 2147483648
        %v3734 = vand.u32 %v1032, 2147483648
        %v3735 = vand.u32 %v1036, 2147483648
        %v3736 = vand.u32 %v1042, 2147483648
        %v3737 = vand.u32 %v1046, 2147483648
        %v3738 = vand.u32 %v1052, 2147483648
        %v3739 = vand.u32 %v1056, 2147483648
        %v3740 = vand.u32 %v1062, 2147483648
        %v3741 = vand.u32 %v1066, 2147483648
        %v3742 = vand.u32 %v1072, 2147483648
        %v3743 = vand.u32 %v1076, 2147483648
        %v3744 = vand.u32 %v1082, 2147483648
        %v3745 = vand.u32 %v1086, 2147483648
        %v3746 = vand.u32 %v1092, 2147483648
        %v3747 = vand.u32 %v1096, 2147483648
        %v3748 = vand.u32 %v1102, 2147483648
        %v3749 = vand.u32 %v1106, 2147483648
        %v3750 = vand.u32 %v1112, 2147483648
        %v3751 = vand.u32 %v1116, 2147483648
        %v3752 = vand.u32 %v1122, 2147483648
        %v3753 = vand.u32 %v1126, 2147483648
        %v3754 = vand.u32 %v1132, 2147483648
        %v3755 = vand.u32 %v1136, 2147483648
        %v3756 = vand.u32 %v1142, 2147483648
        %v3757 = vand.u32 %v1146, 2147483648
        %v3758 = vand.u32 %v1152, 2147483648
        %v3759 = vand.u32 %v1156, 2147483648
        %v3760 = vand.u32 %v1162, 2147483648
        %v3761 = vand.u32 %v1166, 2147483648
        %v3762 = vor.u32 %v3666, %v3730
        %v3763 = vor.u32 %v3667, %v3731
        %v3764 = vor.u32 %v3668, %v3732
        %v3765 = vor.u32 %v3669, %v3733
        %v3766 = vor.u32 %v3670, %v3734
        %v3767 = vor.u32 %v3671, %v3735
        %v3768 = vor.u32 %v3672, %v3736
        %v3769 = vor.u32 %v3673, %v3737
        %v3770 = vor.u32 %v3674, %v3738
        %v3771 = vor.u32 %v3675, %v3739
        %v3772 = vor.u32 %v3676, %v3740
        %v3773 = vor.u32 %v3677, %v3741
        %v3774 = vor.u32 %v3678, %v3742
        %v3775 = vor.u32 %v3679, %v3743
        %v3776 = vor.u32 %v3680, %v3744
        %v3777 = vor.u32 %v3681, %v3745
        %v3778 = vor.u32 %v3682, %v3746
        %v3779 = vor.u32 %v3683, %v3747
        %v3780 = vor.u32 %v3684, %v3748
        %v3781 = vor.u32 %v3685, %v3749
        %v3782 = vor.u32 %v3686, %v3750
        %v3783 = vor.u32 %v3687, %v3751
        %v3784 = vor.u32 %v3688, %v3752
        %v3785 = vor.u32 %v3689, %v3753
        %v3786 = vor.u32 %v3690, %v3754
        %v3787 = vor.u32 %v3691, %v3755
        %v3788 = vor.u32 %v3692, %v3756
        %v3789 = vor.u32 %v3693, %v3757
        %v3790 = vor.u32 %v3694, %v3758
        %v3791 = vor.u32 %v3695, %v3759
        %v3792 = vor.u32 %v3696, %v3760
        %v3793 = vor.u32 %v3697, %v3761
        %v3826 = vsub.f32 %v2648, %v2760
        %v3827 = vsub.f32 %v2655, %v2767
        %v3828 = vsub.f32 %v2662, %v2774
        %v3829 = vsub.f32 %v2669, %v2781
        %v3830 = vsub.f32 %v2676, %v2788
        %v3831 = vsub.f32 %v2683, %v2795
        %v3832 = vsub.f32 %v2690, %v2802
        %v3833 = vsub.f32 %v2697, %v2809
        %v3834 = vsub.f32 %v2704, %v2816
        %v3835 = vsub.f32 %v2711, %v2823
        %v3836 = vsub.f32 %v2718, %v2830
        %v3837 = vsub.f32 %v2725, %v2837
        %v3838 = vsub.f32 %v2732, %v2844
        %v3839 = vsub.f32 %v2739, %v2851
        %v3840 = vsub.f32 %v2746, %v2858
        %v3841 = vsub.f32 %v2753, %v2865
        %v3842 = vand.u32 2147483647, %v3826
        %v3843 = vand.u32 2147483647, %v3827
        %v3844 = vand.u32 2147483647, %v3828
        %v3845 = vand.u32 2147483647, %v3829
        %v3846 = vand.u32 2147483647, %v3830
        %v3847 = vand.u32 2147483647, %v3831
        %v3848 = vand.u32 2147483647, %v3832
        %v3849 = vand.u32 2147483647, %v3833
        %v3850 = vand.u32 2147483647, %v3834
        %v3851 = vand.u32 2147483647, %v3835
        %v3852 = vand.u32 2147483647, %v3836
        %v3853 = vand.u32 2147483647, %v3837
        %v3854 = vand.u32 2147483647, %v3838
        %v3855 = vand.u32 2147483647, %v3839
        %v3856 = vand.u32 2147483647, %v3840
        %v3857 = vand.u32 2147483647, %v3841
        %v3858 = vsub.f32 %v3762, %v3778
        %v3859 = vsub.f32 %v3763, %v3779
        %v3860 = vsub.f32 %v3764, %v3780
        %v3861 = vsub.f32 %v3765, %v3781
        %v3862 = vsub.f32 %v3766, %v3782
        %v3863 = vsub.f32 %v3767, %v3783
        %v3864 = vsub.f32 %v3768, %v3784
        %v3865 = vsub.f32 %v3769, %v3785
        %v3866 = vsub.f32 %v3770, %v3786
        %v3867 = vsub.f32 %v3771, %v3787
        %v3868 = vsub.f32 %v3772, %v3788
        %v3869 = vsub.f32 %v3773, %v3789
        %v3870 = vsub.f32 %v3774, %v3790
        %v3871 = vsub.f32 %v3775, %v3791
        %v3872 = vsub.f32 %v3776, %v3792
        %v3873 = vsub.f32 %v3777, %v3793
        %v3874 = vand.u32 2147483647, %v3858
        %v3875 = vand.u32 2147483647, %v3859
        %v3876 = vand.u32 2147483647, %v3860
        %v3877 = vand.u32 2147483647, %v3861
        %v3878 = vand.u32 2147483647, %v3862
        %v3879 = vand.u32 2147483647, %v3863
        %v3880 = vand.u32 2147483647, %v3864
        %v3881 = vand.u32 2147483647, %v3865
        %v3882 = vand.u32 2147483647, %v3866
        %v3883 = vand.u32 2147483647, %v3867
        %v3884 = vand.u32 2147483647, %v3868
        %v3885 = vand.u32 2147483647, %v3869
        %v3886 = vand.u32 2147483647, %v3870
        %v3887 = vand.u32 2147483647, %v3871
        %v3888 = vand.u32 2147483647, %v3872
        %v3889 = vand.u32 2147483647, %v3873
        %v3890 = vadd.f32 %v3842, %v3874
        %v3891 = vadd.f32 %v3843, %v3875
        %v3892 = vadd.f32 %v3844, %v3876
        %v3893 = vadd.f32 %v3845, %v3877
        %v3894 = vadd.f32 %v3846, %v3878
        %v3895 = vadd.f32 %v3847, %v3879
        %v3896 = vadd.f32 %v3848, %v3880
        %v3897 = vadd.f32 %v3849, %v3881
        %v3898 = vadd.f32 %v3850, %v3882
        %v3899 = vadd.f32 %v3851, %v3883
        %v3900 = vadd.f32 %v3852, %v3884
        %v3901 = vadd.f32 %v3853, %v3885
        %v3902 = vadd.f32 %v3854, %v3886
        %v3903 = vadd.f32 %v3855, %v3887
        %v3904 = vadd.f32 %v3856, %v3888
        %v3905 = vadd.f32 %v3857, %v3889
        %v3906 = vld [vmem:[#allocation3] sm:$0xff]
        %v3907 = vadd.f32 %v3890, %v3891
        %v3908 = vadd.f32 %v3907, %v3892
        %v3909 = vadd.f32 %v3908, %v3893
        %v3910 = vadd.f32 %v3909, %v3894
        %v3911 = vadd.f32 %v3910, %v3895
        %v3912 = vadd.f32 %v3911, %v3896
        %v3913 = vadd.f32 %v3912, %v3897
        %v3914 = vadd.f32 %v3913, %v3898
        %v3915 = vadd.f32 %v3914, %v3899
        %v3916 = vadd.f32 %v3915, %v3900
        %v3917 = vadd.f32 %v3916, %v3901
        %v3918 = vadd.f32 %v3917, %v3902
        %v3919 = vadd.f32 %v3918, %v3903
        %v3920 = vadd.f32 %v3919, %v3904
        %v3921 = vadd.f32 %v3920, %v3905
        %v3922 = vadd.f32 %v3906, %v3921
        %3923 = vst [vmem:[#allocation3] sm:$0xff] %v3922
        // Predicated region
        $region41: #{tpu_custom_call.1} parent=27 // pred_check
          %p3924 = pneg %p195
        $region42: #{tpu_custom_call.1} parent=27 // pred_check_branch
          %3926 = sbr.rel (%p3924) target = $region44
        $region43: #{tpu_custom_call.1} parent=27 // pred_region
          %v3927 = vld [vmem:[#allocation2] sm:$0xff]
          %v3928 = vld [vmem:[#allocation2 + $0x8] sm:$0xff]
          %v3929 = vadd.f32 %v3927, %v3928
          %3930 = vadd.xlane.f32.xlu0 %v3929
          %v3931 = vpop.xlane.xlu0 %3930
          %v3932 = vrot.slane %v3931, 4
          %v3933 = vadd.f32 %v3931, %v3932
          %v3934 = vrot.slane %v3933, 2
          %v3935 = vadd.f32 %v3933, %v3934
          %v3936 = vrot.slane %v3935, 1
          %v3937 = vadd.f32 %v3935, %v3936
          %s3938 = vtos %v3937
          %v3939 = vld [vmem:[#allocation3] sm:$0xff]
          %3940 = vadd.xlane.f32.xlu0 %v3939
          %v3941 = vpop.xlane.xlu0 %3940
          %v3942 = vrot.slane %v3941, 4
          %v3943 = vadd.f32 %v3941, %v3942
          %v3944 = vrot.slane %v3943, 2
          %v3945 = vadd.f32 %v3943, %v3944
          %v3946 = vrot.slane %v3945, 1
          %v3947 = vadd.f32 %v3945, %v3946
          %s3948 = vtos %v3947
          %v3949 = vstv %s3938
          %v3950 = vstv %s3948
          %vm3951 = vcmask 1040384
          %v3952 = vsel %vm3951, %v3949, %v3950
          %vm3953 = vcmask 1041408
          %v3954 = vsel %vm3953, %v3952, 0.0
          %3955 = vst [vmem:[%s192] sm:$0xff] %v3954
        $region44: #{tpu_custom_call.1} parent=27 // pred_fallthru
          _
        %s3956 = sand.u32 %s89, 1
        %s3957 = scalar_lea.sflag [#allocation6], %s3956
        %s3958 = sand.u32 %s89, 1
        %s3959 = smul.addr %s3958, 8
        %s3960 = scalar_lea.vmem [#allocation9], %s3959
        // Predicated region
        $region45: #{tpu_custom_call.1} parent=27 // pred_check
          %p3961 = pneg %p99
        $region46: #{tpu_custom_call.1} parent=27 // pred_check_branch
          %3963 = sbr.rel (%p3961) target = $region48
        $region47: #{tpu_custom_call.1} parent=27 // pred_region
          %s3965 = ssub.s32 128, 128
          %3966 = vsyncadd %s3957, %s3965
          %s3967 = smul.addr %s24, 128
          %s3968 = scalar_lea.hbm %s2, %s3967
          %s3970 = sshll.u32 %s3960, 4
          %s3971 = int_to_ptr.vmem [resolvable:$true] %s3970
          %3973 = dma.vmem_to_hbm [thread:$0]  %s3971, 128, %s3968, %s3957
        $region48: #{tpu_custom_call.1} parent=27 // pred_fallthru
          _
      $region28: #{tpu_custom_call.1} parent=5 // pred_fallthru
        _
      %p3974 = scmp.le.s32.totalorder 2, %s15
      // Predicated region
      $region49: #{tpu_custom_call.1} parent=5 // pred_check
        %p3975 = pneg %p3974
      $region50: #{tpu_custom_call.1} parent=5 // pred_check_branch
        %3977 = sbr.rel (%p3975) target = $region52
      $region51: #{tpu_custom_call.1} parent=5 // pred_region
        %s3978 = ssub.s32 %s15, 2
        // Predicated region
        $region53: #{tpu_custom_call.1} parent=51 // pred_check
          %p3979 = pneg %p105
        $region54: #{tpu_custom_call.1} parent=51 // pred_check_branch
          %3981 = sbr.rel (%p3979) target = $region56
        $region55: #{tpu_custom_call.1} parent=51 // pred_region
          %s3982 = sand.u32 %s90, 1
          %s3983 = scalar_lea.sflag [#allocation6], %s3982
          %s3984 = sand.u32 %s90, 1
          %s3985 = smul.addr %s3984, 8
          %s3986 = scalar_lea.vmem [#allocation9], %s3985
          %3987 = dma.done %s3983, 128
        $region56: #{tpu_custom_call.1} parent=51 // pred_fallthru
          _
      $region52: #{tpu_custom_call.1} parent=5 // pred_fallthru
        _
    $region6: #{tpu_custom_call.1} parent=1 // loop_footer
      %s19 = sadd.s32 1, %s15
    $region7: #{tpu_custom_call.1} parent=1 // loop_footer_branch
      %14 = sbr.rel target = $region3
    $region8: #{tpu_custom_call.1} parent=1 // loop_exit
      _
    %3988 = vsyncpa [#allocation5], 1
    %s3989 = scalar_lea.sflag [#allocation5], 1
    %3990 = vsyncpa %s3989, 1
    %3991 = vsyncpa [#allocation8], 1
    %3992 = vsyncpa [#allocation6], 1
    %s3993 = scalar_lea.sflag [#allocation6], 1
    %3994 = vsyncpa %s3993, 1

</llo_original>
